<compile_context>
chip_gen: v7x
topology: tpu7x:2x2x1
jax: 0.10.0
libtpu: 0.0.40
codegen_flags: <defaults>
</compile_context>

<pallas_src>
import jax
import jax.numpy as jnp
import numpy as np
from jax import lax
from jax.experimental import pallas as pl
from jax.experimental.pallas import tpu as pltpu

EPS = 1e-5  # nn.BatchNorm2d default


# --------------------------------------------------------------------------- #
# kernels
# --------------------------------------------------------------------------- #
def _conv3x3_body(x, w_ref, b_ref, t_ref, stats_ref, pad_ref):
    """3x3 / stride-1 / pad-1 conv of a (bt, H, W, Cin) tile as ONE im2col matmul.

    x        : (bt, H, W, Cin) f32 value (already BN+ReLU'd for the second conv)
    w_ref    : (9*Cin, Cout) im2col-layout weights
    b_ref    : (1, Cout) bias
    t_ref    : (bt, H, W, Cout) output tile (pre-BN conv output)
    stats_ref: (1, 2, Cout) per-tile [sum, sum-of-squares] BN partials
    pad_ref  : (bt, H+2, W+2, Cin) VMEM scratch for the zero-padded tile
    """
    bt, H, W, Cin = x.shape
    Cout = w_ref.shape[1]

    # Stage the tile into the padded scratch. Only the 1-pixel halo is zeroed
    # (O(border)); the interior is written once with the live values.
    zrow = jnp.zeros((bt, 1, W + 2, Cin), jnp.float32)
    zcol = jnp.zeros((bt, H, 1, Cin), jnp.float32)
    pad_ref[:, 0:1, :, :] = zrow
    pad_ref[:, H + 1:H + 2, :, :] = zrow
    pad_ref[:, 1:H + 1, 0:1, :] = zcol
    pad_ref[:, 1:H + 1, W + 1:W + 2, :] = zcol
    pad_ref[:, 1:H + 1, 1:W + 1, :] = x
    padded = pad_ref[...]                                  # (bt, H+2, W+2, Cin)

    # im2col: concatenate the 9 shifted taps along channels -> (bt*H*W, 9*Cin),
    # then a single MXU matmul with K = 9*Cin instead of 9 tiny K=Cin dots.
    taps = [padded[:, dy:dy + H, dx:dx + W, :]
            for dy in range(3) for dx in range(3)]
    patch = jnp.concatenate(taps, axis=3).reshape(bt * H * W, 9 * Cin)

    acc = jnp.dot(patch, w_ref[...], preferred_element_type=jnp.float32)
    acc = acc + b_ref[...]

    # Contiguous (view-like) reshape back to the tile layout -> no relayout.
    t_ref[...] = acc.reshape(bt, H, W, Cout).astype(t_ref.dtype)

    # Per-tile partial BN statistics; the global mean/var is finalized outside
    # the grid so the batch statistics stay correct under tiling.
    stats_ref[:, 0:1, :] = jnp.sum(acc, axis=0).reshape(1, 1, Cout)
    stats_ref[:, 1:2, :] = jnp.sum(acc * acc, axis=0).reshape(1, 1, Cout)


def _conv1_kernel(x_ref, w_ref, b_ref, t_ref, stats_ref, pad_ref):
    _conv3x3_body(x_ref[...], w_ref, b_ref, t_ref, stats_ref, pad_ref)


def _conv2_kernel(t1_ref, scale_ref, shift_ref, w_ref, b_ref,
                  t_ref, stats_ref, pad_ref):
    # bn1 folded into a per-channel affine + ReLU, applied on the resident
    # tile (no extra HBM round trip for the normalized activation).
    y = jnp.maximum(t1_ref[...] * scale_ref[...] + shift_ref[...], 0.0)
    _conv3x3_body(y, w_ref, b_ref, t_ref, stats_ref, pad_ref)


def _bn_residual_kernel(t_ref, x_ref, scale_ref, shift_ref, out_ref):
    # Lane-dense elementwise epilogue: blocks are (bt, H, W*C).
    out_ref[...] = (t_ref[...] * scale_ref[...] + shift_ref[...]
                    + x_ref[...]).astype(out_ref.dtype)


# --------------------------------------------------------------------------- #
# tiling heuristic
# --------------------------------------------------------------------------- #
def _pick_batch_tile(N, H, W, C, Cout, budget_bytes=6 * 1024 * 1024):
    """Largest divisor of N whose per-step VMEM footprint fits the budget.

    When N >= 2 we also keep at least two grid steps so megacore sharding and
    BlockSpec double-buffering still have something to overlap.
    """
    def lanes(c):  # narrow channel dims pad to a full 128-lane vreg
        return ((c + 127) // 128) * 128

    cmax = max(C, Cout)
    per_img = 4 * (
        2 * H * W * lanes(C)                       # input tile, double-buffered
        + 2 * H * W * lanes(Cout)                  # output tile, double-buffered
        + (H + 2) * (W + 2) * lanes(cmax)          # padded scratch
        + H * W * (lanes(9 * cmax) + lanes(Cout))  # im2col patch + f32 acc temps
    )

    bt = 1
    for cand in range(1, N + 1):
        if N % cand != 0:
            continue
        if cand * per_img > budget_bytes:
            continue
        if N >= 2 and N // cand < 2:
            continue
        bt = cand
    return bt


# --------------------------------------------------------------------------- #
# wrapper
# --------------------------------------------------------------------------- #
@jax.jit
def no_relu_basic_resnet_unit(x_nchw, params):
    """x_nchw: (N, C, H, W) float32. Returns (N, C, H, W)."""
    N, C, H, W = x_nchw.shape
    # TODO(synk): NCHW<->NHWC transposes stay as XLA ops (layout plumbing).
    x = jnp.transpose(x_nchw, (0, 2, 3, 1))                    # NHWC

    # PyTorch conv weight (Cout, Cin, kh, kw) -> im2col layout (9*Cin, Cout)
    w1 = jnp.transpose(params["w1"], (2, 3, 1, 0)).reshape(9 * C, -1)
    Cout = w1.shape[-1]
    assert Cout == C, "identity residual requires in_channels == out_channels"
    w2 = jnp.transpose(params["w2"], (2, 3, 1, 0)).reshape(9 * Cout, Cout)

    b1 = params["b1"].reshape(1, Cout)
    b2 = params["b2"].reshape(1, Cout)
    count = float(N * H * W)

    bt = _pick_batch_tile(N, H, W, C, Cout)
    nt = N // bt

    par = pltpu.CompilerParams(dimension_semantics=("parallel",))
    conv_out_shape = (
        jax.ShapeDtypeStruct((N, H, W, Cout), jnp.float32),
        jax.ShapeDtypeStruct((nt, 2, Cout), jnp.float32),
    )
    conv_out_specs = (
        pl.BlockSpec((bt, H, W, Cout), lambda n: (n, 0, 0, 0)),
        pl.BlockSpec((1, 2, Cout), lambda n: (n, 0, 0)),
    )

    # ---- pass 1: conv1 + per-tile BN1 partial stats ------------------------
    t1, stats1 = pl.pallas_call(
        _conv1_kernel,
        grid=(nt,),
        in_specs=[
            pl.BlockSpec((bt, H, W, C), lambda n: (n, 0, 0, 0)),
            pl.BlockSpec((9 * C, Cout), lambda n: (0, 0)),
            pl.BlockSpec((1, Cout), lambda n: (0, 0)),
        ],
        out_specs=conv_out_specs,
        out_shape=conv_out_shape,
        scratch_shapes=[pltpu.VMEM((bt, H + 2, W + 2, C), jnp.float32)],
        compiler_params=par,
    )(x, w1, b1)

    s1 = jnp.sum(stats1, axis=0)                               # (2, Cout)
    mean1 = s1[0] / count
    var1 = s1[1] / count - mean1 * mean1
    scale1 = params["g1"] / jnp.sqrt(var1 + EPS)
    shift1 = params["be1"] - mean1 * scale1

    # ---- pass 2: bn1+relu (folded) + conv2 + per-tile BN2 partial stats ----
    t2, stats2 = pl.pallas_call(
        _conv2_kernel,
        grid=(nt,),
        in_specs=[
            pl.BlockSpec((bt, H, W, Cout), lambda n: (n, 0, 0, 0)),
            pl.BlockSpec((1, Cout), lambda n: (0, 0)),
            pl.BlockSpec((1, Cout), lambda n: (0, 0)),
            pl.BlockSpec((9 * Cout, Cout), lambda n: (0, 0)),
            pl.BlockSpec((1, Cout), lambda n: (0, 0)),
        ],
        out_specs=conv_out_specs,
        out_shape=conv_out_shape,
        scratch_shapes=[pltpu.VMEM((bt, H + 2, W + 2, Cout), jnp.float32)],
        compiler_params=par,
    )(t1, scale1.reshape(1, Cout), shift1.reshape(1, Cout), w2, b2)

    s2 = jnp.sum(stats2, axis=0)
    mean2 = s2[0] / count
    var2 = s2[1] / count - mean2 * mean2
    scale2 = params["g2"] / jnp.sqrt(var2 + EPS)
    shift2 = params["be2"] - mean2 * scale2

    # ---- pass 3: bn2 (folded) + residual add, lane-dense (W*C lanes) -------
    t2r = t2.reshape(N, H, W * Cout)          # contiguous reshape (metadata)
    xr = x.reshape(N, H, W * C)
    scale2_t = jnp.tile(scale2.reshape(1, Cout), (1, W))       # (1, W*Cout)
    shift2_t = jnp.tile(shift2.reshape(1, Cout), (1, W))

    out_r = pl.pallas_call(
        _bn_residual_kernel,
        grid=(nt,),
        in_specs=[
            pl.BlockSpec((bt, H, W * Cout), lambda n: (n, 0, 0)),
            pl.BlockSpec((bt, H, W * C), lambda n: (n, 0, 0)),
            pl.BlockSpec((1, W * Cout), lambda n: (0, 0)),
            pl.BlockSpec((1, W * Cout), lambda n: (0, 0)),
        ],
        out_specs=pl.BlockSpec((bt, H, W * Cout), lambda n: (n, 0, 0)),
        out_shape=jax.ShapeDtypeStruct((N, H, W * Cout), x.dtype),
        compiler_params=par,
    )(t2r, xr, scale2_t, shift2_t)

    out = out_r.reshape(N, H, W, Cout)
    return jnp.transpose(out, (0, 3, 1, 2))                    # back to NCHW


# --------------------------------------------------------------------------- #
# pure-JAX reference (mirrors the PyTorch training-mode forward)
# --------------------------------------------------------------------------- #
def _reference(x_nchw, params):
    x = jnp.transpose(x_nchw, (0, 2, 3, 1))
    w1 = jnp.transpose(params["w1"], (2, 3, 1, 0))
    w2 = jnp.transpose(params["w2"], (2, 3, 1, 0))
    dn = ("NHWC", "HWIO", "NHWC")

    out = lax.conv_general_dilated(x, w1, (1, 1), "SAME",
                                   dimension_numbers=dn) + params["b1"]
    m = out.mean(axis=(0, 1, 2))
    v = out.var(axis=(0, 1, 2))
    out = params["g1"] * (out - m) / jnp.sqrt(v + EPS) + params["be1"]
    out = jnp.maximum(out, 0.0)

    out = lax.conv_general_dilated(out, w2, (1, 1), "SAME",
                                   dimension_numbers=dn) + params["b2"]
    m = out.mean(axis=(0, 1, 2))
    v = out.var(axis=(0, 1, 2))
    out = params["g2"] * (out - m) / jnp.sqrt(v + EPS) + params["be2"]

    out = out + x
    return jnp.transpose(out, (0, 3, 1, 2))


if __name__ == "__main__":
    N, C, H, W = 2, 8, 16, 16   # in_channels == out_channels, stride=1

    key = jax.random.PRNGKey(0)
    keys = jax.random.split(key, 9)
    params = {
        "w1": 0.1 * jax.random.normal(keys[0], (C, C, 3, 3), jnp.float32),
        "b1": 0.1 * jax.random.normal(keys[1], (C,), jnp.float32),
        "g1": 1.0 + 0.1 * jax.random.normal(keys[2], (C,), jnp.float32),
        "be1": 0.1 * jax.random.normal(keys[3], (C,), jnp.float32),
        "w2": 0.1 * jax.random.normal(keys[4], (C, C, 3, 3), jnp.float32),
        "b2": 0.1 * jax.random.normal(keys[5], (C,), jnp.float32),
        "g2": 1.0 + 0.1 * jax.random.normal(keys[6], (C,), jnp.float32),
        "be2": 0.1 * jax.random.normal(keys[7], (C,), jnp.float32),
    }
    x = jax.random.normal(keys[8], (N, C, H, W), jnp.float32)

    out = jax.block_until_ready(no_relu_basic_resnet_unit(x, params))
    ref = jax.block_until_ready(_reference(x, params))

    np.testing.assert_allclose(np.asarray(out), np.asarray(ref),
                               rtol=5e-2, atol=5e-2)
    print("KERNEL_OK")
</pallas_src>

<mosaic_0001>
module attributes {stable_mosaic.version = 11 : i64} {
  func.func @_conv1_kernel(%arg0: i32, %arg1: memref<1x16x16x8xf32, #tpu.memory_space<vmem>>, %arg2: memref<72x8xf32, #tpu.memory_space<vmem>>, %arg3: memref<1x8xf32, #tpu.memory_space<vmem>>, %arg4: memref<1x16x16x8xf32, #tpu.memory_space<vmem>>, %arg5: memref<1x2x8xf32, #tpu.memory_space<vmem>>, %arg6: memref<1x18x18x8xf32, #tpu.memory_space<vmem>>) attributes {dimension_semantics = [#tpu.dimension_semantics<parallel>], iteration_bounds = array<i64: 2>, scalar_prefetch = 0 : i64, scratch_operands = 1 : i64, tpu.core_type = #tpu.core_type<tc>, window_params = [{transform_indices = @transform_0, window_bounds = array<i64: 1, 16, 16, 8>}, {pipeline_mode = #tpu.pipeline_mode<synchronous>, transform_indices = @transform_1, window_bounds = array<i64: 72, 8>}, {pipeline_mode = #tpu.pipeline_mode<synchronous>, transform_indices = @transform_2, window_bounds = array<i64: 1, 8>}, {transform_indices = @transform_3, window_bounds = array<i64: 1, 16, 16, 8>}, {transform_indices = @transform_4, window_bounds = array<i64: 1, 2, 8>}]} {
    %c0 = arith.constant 0 : index
    %c0_0 = arith.constant 0 : index
    %c0_1 = arith.constant 0 : index
    %c0_2 = arith.constant 0 : index
    %0 = vector.load %arg1[%c0, %c0_0, %c0_1, %c0_2] : memref<1x16x16x8xf32, #tpu.memory_space<vmem>>, vector<1x16x16x8xf32>
    %cst = arith.constant 0.000000e+00 : f32
    %1 = vector.broadcast %cst : f32 to vector<1x1x18x8xf32>
    %cst_3 = arith.constant 0.000000e+00 : f32
    %2 = vector.broadcast %cst_3 : f32 to vector<1x16x1x8xf32>
    %c0_4 = arith.constant 0 : index
    %c0_5 = arith.constant 0 : index
    %c0_6 = arith.constant 0 : index
    %c0_7 = arith.constant 0 : index
    %3 = vector.load %arg6[%c0_4, %c0_5, %c0_6, %c0_7] : memref<1x18x18x8xf32, #tpu.memory_space<vmem>>, vector<1x1x18x8xf32>
    tpu.vector_store %arg6[%c0_4, %c0_5, %c0_6, %c0_7], %1 {strides = array<i32>} : memref<1x18x18x8xf32, #tpu.memory_space<vmem>>, vector<1x1x18x8xf32>,
    %c0_8 = arith.constant 0 : index
    %c17 = arith.constant 17 : index
    %c0_9 = arith.constant 0 : index
    %c0_10 = arith.constant 0 : index
    %4 = vector.load %arg6[%c0_8, %c17, %c0_9, %c0_10] : memref<1x18x18x8xf32, #tpu.memory_space<vmem>>, vector<1x1x18x8xf32>
    tpu.vector_store %arg6[%c0_8, %c17, %c0_9, %c0_10], %1 {strides = array<i32>} : memref<1x18x18x8xf32, #tpu.memory_space<vmem>>, vector<1x1x18x8xf32>,
    %c0_11 = arith.constant 0 : index
    %c1 = arith.constant 1 : index
    %c0_12 = arith.constant 0 : index
    %c0_13 = arith.constant 0 : index
    %5 = vector.load %arg6[%c0_11, %c1, %c0_12, %c0_13] : memref<1x18x18x8xf32, #tpu.memory_space<vmem>>, vector<1x16x1x8xf32>
    tpu.vector_store %arg6[%c0_11, %c1, %c0_12, %c0_13], %2 {strides = array<i32>} : memref<1x18x18x8xf32, #tpu.memory_space<vmem>>, vector<1x16x1x8xf32>,
    %c0_14 = arith.constant 0 : index
    %c1_15 = arith.constant 1 : index
    %c17_16 = arith.constant 17 : index
    %c0_17 = arith.constant 0 : index
    %6 = vector.load %arg6[%c0_14, %c1_15, %c17_16, %c0_17] : memref<1x18x18x8xf32, #tpu.memory_space<vmem>>, vector<1x16x1x8xf32>
    tpu.vector_store %arg6[%c0_14, %c1_15, %c17_16, %c0_17], %2 {strides = array<i32>} : memref<1x18x18x8xf32, #tpu.memory_space<vmem>>, vector<1x16x1x8xf32>,
    %c0_18 = arith.constant 0 : index
    %c1_19 = arith.constant 1 : index
    %c1_20 = arith.constant 1 : index
    %c0_21 = arith.constant 0 : index
    %7 = vector.load %arg6[%c0_18, %c1_19, %c1_20, %c0_21] : memref<1x18x18x8xf32, #tpu.memory_space<vmem>>, vector<1x16x16x8xf32>
    tpu.vector_store %arg6[%c0_18, %c1_19, %c1_20, %c0_21], %0 {strides = array<i32>} : memref<1x18x18x8xf32, #tpu.memory_space<vmem>>, vector<1x16x16x8xf32>,
    %c0_22 = arith.constant 0 : index
    %c0_23 = arith.constant 0 : index
    %c0_24 = arith.constant 0 : index
    %c0_25 = arith.constant 0 : index
    %8 = vector.load %arg6[%c0_22, %c0_23, %c0_24, %c0_25] : memref<1x18x18x8xf32, #tpu.memory_space<vmem>>, vector<1x18x18x8xf32>
    %9 = vector.extract_strided_slice %8 {offsets = [0, 0, 0, 0], sizes = [1, 16, 16, 8], strides = [1, 1, 1, 1]} : vector<1x18x18x8xf32> to vector<1x16x16x8xf32>
    %10 = vector.extract_strided_slice %8 {offsets = [0, 0, 1, 0], sizes = [1, 16, 16, 8], strides = [1, 1, 1, 1]} : vector<1x18x18x8xf32> to vector<1x16x16x8xf32>
    %11 = vector.extract_strided_slice %8 {offsets = [0, 0, 2, 0], sizes = [1, 16, 16, 8], strides = [1, 1, 1, 1]} : vector<1x18x18x8xf32> to vector<1x16x16x8xf32>
    %12 = vector.extract_strided_slice %8 {offsets = [0, 1, 0, 0], sizes = [1, 16, 16, 8], strides = [1, 1, 1, 1]} : vector<1x18x18x8xf32> to vector<1x16x16x8xf32>
    %13 = vector.extract_strided_slice %8 {offsets = [0, 1, 1, 0], sizes = [1, 16, 16, 8], strides = [1, 1, 1, 1]} : vector<1x18x18x8xf32> to vector<1x16x16x8xf32>
    %14 = vector.extract_strided_slice %8 {offsets = [0, 1, 2, 0], sizes = [1, 16, 16, 8], strides = [1, 1, 1, 1]} : vector<1x18x18x8xf32> to vector<1x16x16x8xf32>
    %15 = vector.extract_strided_slice %8 {offsets = [0, 2, 0, 0], sizes = [1, 16, 16, 8], strides = [1, 1, 1, 1]} : vector<1x18x18x8xf32> to vector<1x16x16x8xf32>
    %16 = vector.extract_strided_slice %8 {offsets = [0, 2, 1, 0], sizes = [1, 16, 16, 8], strides = [1, 1, 1, 1]} : vector<1x18x18x8xf32> to vector<1x16x16x8xf32>
    %17 = vector.extract_strided_slice %8 {offsets = [0, 2, 2, 0], sizes = [1, 16, 16, 8], strides = [1, 1, 1, 1]} : vector<1x18x18x8xf32> to vector<1x16x16x8xf32>
    %18 = tpu.concatenate %9, %10, %11, %12, %13, %14, %15, %16, %17 in 3 : vector<1x16x16x8xf32>, vector<1x16x16x8xf32>, vector<1x16x16x8xf32>, vector<1x16x16x8xf32>, vector<1x16x16x8xf32>, vector<1x16x16x8xf32>, vector<1x16x16x8xf32>, vector<1x16x16x8xf32>, vector<1x16x16x8xf32> -> vector<1x16x16x72xf32>
    %19 = vector.shape_cast %18 : vector<1x16x16x72xf32> to vector<256x72xf32>
    %c0_26 = arith.constant 0 : index
    %c0_27 = arith.constant 0 : index
    %20 = vector.load %arg2[%c0_26, %c0_27] : memref<72x8xf32, #tpu.memory_space<vmem>>, vector<72x8xf32>
    %cst_28 = arith.constant dense<0.000000e+00> : vector<256x8xf32>
    %21 = tpu.matmul %19, %20, %cst_28 {dimension_numbers = #tpu.dot_dimension_numbers<[1], [0], [0], [1], [0, 0, 1, 1], [], []>} : vector<256x72xf32>, vector<72x8xf32>, vector<256x8xf32> -> vector<256x8xf32>
    %c0_29 = arith.constant 0 : index
    %c0_30 = arith.constant 0 : index
    %22 = vector.load %arg3[%c0_29, %c0_30] : memref<1x8xf32, #tpu.memory_space<vmem>>, vector<1x8xf32>
    %23 = vector.broadcast %22 : vector<1x8xf32> to vector<256x8xf32>
    %24 = arith.addf %21, %23 : vector<256x8xf32>
    %25 = vector.shape_cast %24 : vector<256x8xf32> to vector<1x16x16x8xf32>
    %c0_31 = arith.constant 0 : index
    %c0_32 = arith.constant 0 : index
    %c0_33 = arith.constant 0 : index
    %c0_34 = arith.constant 0 : index
    %26 = vector.load %arg4[%c0_31, %c0_32, %c0_33, %c0_34] : memref<1x16x16x8xf32, #tpu.memory_space<vmem>>, vector<1x16x16x8xf32>
    tpu.vector_store %arg4[%c0_31, %c0_32, %c0_33, %c0_34], %25 {strides = array<i32>} : memref<1x16x16x8xf32, #tpu.memory_space<vmem>>, vector<1x16x16x8xf32>,
    %cst_35 = arith.constant dense<0.000000e+00> : vector<8xf32>
    %27 = vector.multi_reduction <add>, %24, %cst_35 [0] : vector<256x8xf32> to vector<8xf32>
    %28 = vector.shape_cast %27 : vector<8xf32> to vector<1x1x8xf32>
    %c0_36 = arith.constant 0 : index
    %c0_37 = arith.constant 0 : index
    %c0_38 = arith.constant 0 : index
    %29 = vector.load %arg5[%c0_36, %c0_37, %c0_38] : memref<1x2x8xf32, #tpu.memory_space<vmem>>, vector<1x1x8xf32>
    tpu.vector_store %arg5[%c0_36, %c0_37, %c0_38], %28 {strides = array<i32>} : memref<1x2x8xf32, #tpu.memory_space<vmem>>, vector<1x1x8xf32>,
    %30 = arith.mulf %24, %24 : vector<256x8xf32>
    %cst_39 = arith.constant dense<0.000000e+00> : vector<8xf32>
    %31 = vector.multi_reduction <add>, %30, %cst_39 [0] : vector<256x8xf32> to vector<8xf32>
    %32 = vector.shape_cast %31 : vector<8xf32> to vector<1x1x8xf32>
    %c0_40 = arith.constant 0 : index
    %c1_41 = arith.constant 1 : index
    %c0_42 = arith.constant 0 : index
    %33 = vector.load %arg5[%c0_40, %c1_41, %c0_42] : memref<1x2x8xf32, #tpu.memory_space<vmem>>, vector<1x1x8xf32>
    tpu.vector_store %arg5[%c0_40, %c1_41, %c0_42], %32 {strides = array<i32>} : memref<1x2x8xf32, #tpu.memory_space<vmem>>, vector<1x1x8xf32>,
    return
  }
  func.func @transform_0(%arg0: i32) -> (i32, i32, i32, i32) {
    %c0_i32 = arith.constant 0 : i32
    %c0_i32_0 = arith.constant 0 : i32
    %c0_i32_1 = arith.constant 0 : i32
    %c0_i32_2 = arith.constant 0 : i32
    return %arg0, %c0_i32, %c0_i32_0, %c0_i32_1 : i32, i32, i32, i32
  }
  func.func @transform_1(%arg0: i32) -> (i32, i32) {
    %c0_i32 = arith.constant 0 : i32
    %c0_i32_0 = arith.constant 0 : i32
    %c0_i32_1 = arith.constant 0 : i32
    return %c0_i32, %c0_i32_0 : i32, i32
  }
  func.func @transform_2(%arg0: i32) -> (i32, i32) {
    %c0_i32 = arith.constant 0 : i32
    %c0_i32_0 = arith.constant 0 : i32
    %c0_i32_1 = arith.constant 0 : i32
    return %c0_i32, %c0_i32_0 : i32, i32
  }
  func.func @transform_3(%arg0: i32) -> (i32, i32, i32, i32) {
    %c0_i32 = arith.constant 0 : i32
    %c0_i32_0 = arith.constant 0 : i32
    %c0_i32_1 = arith.constant 0 : i32
    %c0_i32_2 = arith.constant 0 : i32
    return %arg0, %c0_i32, %c0_i32_0, %c0_i32_1 : i32, i32, i32, i32
  }
  func.func @transform_4(%arg0: i32) -> (i32, i32, i32) {
    %c0_i32 = arith.constant 0 : i32
    %c0_i32_0 = arith.constant 0 : i32
    %c0_i32_1 = arith.constant 0 : i32
    return %arg0, %c0_i32, %c0_i32_0 : i32, i32, i32
  }
}

module attributes {stable_mosaic.version = 11 : i64} {
  func.func @_conv2_kernel(%arg0: i32, %arg1: memref<1x16x16x8xf32, #tpu.memory_space<vmem>>, %arg2: memref<1x8xf32, #tpu.memory_space<vmem>>, %arg3: memref<1x8xf32, #tpu.memory_space<vmem>>, %arg4: memref<72x8xf32, #tpu.memory_space<vmem>>, %arg5: memref<1x8xf32, #tpu.memory_space<vmem>>, %arg6: memref<1x16x16x8xf32, #tpu.memory_space<vmem>>, %arg7: memref<1x2x8xf32, #tpu.memory_space<vmem>>, %arg8: memref<1x18x18x8xf32, #tpu.memory_space<vmem>>) attributes {dimension_semantics = [#tpu.dimension_semantics<parallel>], iteration_bounds = array<i64: 2>, scalar_prefetch = 0 : i64, scratch_operands = 1 : i64, tpu.core_type = #tpu.core_type<tc>, window_params = [{transform_indices = @transform_0, window_bounds = array<i64: 1, 16, 16, 8>}, {pipeline_mode = #tpu.pipeline_mode<synchronous>, transform_indices = @transform_1, window_bounds = array<i64: 1, 8>}, {pipeline_mode = #tpu.pipeline_mode<synchronous>, transform_indices = @transform_2, window_bounds = array<i64: 1, 8>}, {pipeline_mode = #tpu.pipeline_mode<synchronous>, transform_indices = @transform_3, window_bounds = array<i64: 72, 8>}, {pipeline_mode = #tpu.pipeline_mode<synchronous>, transform_indices = @transform_4, window_bounds = array<i64: 1, 8>}, {transform_indices = @transform_5, window_bounds = array<i64: 1, 16, 16, 8>}, {transform_indices = @transform_6, window_bounds = array<i64: 1, 2, 8>}]} {
    %c0 = arith.constant 0 : index
    %c0_0 = arith.constant 0 : index
    %c0_1 = arith.constant 0 : index
    %c0_2 = arith.constant 0 : index
    %0 = vector.load %arg1[%c0, %c0_0, %c0_1, %c0_2] : memref<1x16x16x8xf32, #tpu.memory_space<vmem>>, vector<1x16x16x8xf32>
    %c0_3 = arith.constant 0 : index
    %c0_4 = arith.constant 0 : index
    %1 = vector.load %arg2[%c0_3, %c0_4] : memref<1x8xf32, #tpu.memory_space<vmem>>, vector<1x8xf32>
    %2 = vector.shape_cast %1 : vector<1x8xf32> to vector<1x1x1x8xf32>
    %3 = vector.broadcast %2 : vector<1x1x1x8xf32> to vector<1x16x16x8xf32>
    %4 = arith.mulf %0, %3 : vector<1x16x16x8xf32>
    %c0_5 = arith.constant 0 : index
    %c0_6 = arith.constant 0 : index
    %5 = vector.load %arg3[%c0_5, %c0_6] : memref<1x8xf32, #tpu.memory_space<vmem>>, vector<1x8xf32>
    %6 = vector.shape_cast %5 : vector<1x8xf32> to vector<1x1x1x8xf32>
    %7 = vector.broadcast %6 : vector<1x1x1x8xf32> to vector<1x16x16x8xf32>
    %8 = arith.addf %4, %7 : vector<1x16x16x8xf32>
    %cst = arith.constant 0.000000e+00 : f32
    %9 = vector.broadcast %cst : f32 to vector<1x16x16x8xf32>
    %10 = arith.maximumf %8, %9 : vector<1x16x16x8xf32>
    %cst_7 = arith.constant 0.000000e+00 : f32
    %11 = vector.broadcast %cst_7 : f32 to vector<1x1x18x8xf32>
    %cst_8 = arith.constant 0.000000e+00 : f32
    %12 = vector.broadcast %cst_8 : f32 to vector<1x16x1x8xf32>
    %c0_9 = arith.constant 0 : index
    %c0_10 = arith.constant 0 : index
    %c0_11 = arith.constant 0 : index
    %c0_12 = arith.constant 0 : index
    %13 = vector.load %arg8[%c0_9, %c0_10, %c0_11, %c0_12] : memref<1x18x18x8xf32, #tpu.memory_space<vmem>>, vector<1x1x18x8xf32>
    tpu.vector_store %arg8[%c0_9, %c0_10, %c0_11, %c0_12], %11 {strides = array<i32>} : memref<1x18x18x8xf32, #tpu.memory_space<vmem>>, vector<1x1x18x8xf32>,
    %c0_13 = arith.constant 0 : index
    %c17 = arith.constant 17 : index
    %c0_14 = arith.constant 0 : index
    %c0_15 = arith.constant 0 : index
    %14 = vector.load %arg8[%c0_13, %c17, %c0_14, %c0_15] : memref<1x18x18x8xf32, #tpu.memory_space<vmem>>, vector<1x1x18x8xf32>
    tpu.vector_store %arg8[%c0_13, %c17, %c0_14, %c0_15], %11 {strides = array<i32>} : memref<1x18x18x8xf32, #tpu.memory_space<vmem>>, vector<1x1x18x8xf32>,
    %c0_16 = arith.constant 0 : index
    %c1 = arith.constant 1 : index
    %c0_17 = arith.constant 0 : index
    %c0_18 = arith.constant 0 : index
    %15 = vector.load %arg8[%c0_16, %c1, %c0_17, %c0_18] : memref<1x18x18x8xf32, #tpu.memory_space<vmem>>, vector<1x16x1x8xf32>
    tpu.vector_store %arg8[%c0_16, %c1, %c0_17, %c0_18], %12 {strides = array<i32>} : memref<1x18x18x8xf32, #tpu.memory_space<vmem>>, vector<1x16x1x8xf32>,
    %c0_19 = arith.constant 0 : index
    %c1_20 = arith.constant 1 : index
    %c17_21 = arith.constant 17 : index
    %c0_22 = arith.constant 0 : index
    %16 = vector.load %arg8[%c0_19, %c1_20, %c17_21, %c0_22] : memref<1x18x18x8xf32, #tpu.memory_space<vmem>>, vector<1x16x1x8xf32>
    tpu.vector_store %arg8[%c0_19, %c1_20, %c17_21, %c0_22], %12 {strides = array<i32>} : memref<1x18x18x8xf32, #tpu.memory_space<vmem>>, vector<1x16x1x8xf32>,
    %c0_23 = arith.constant 0 : index
    %c1_24 = arith.constant 1 : index
    %c1_25 = arith.constant 1 : index
    %c0_26 = arith.constant 0 : index
    %17 = vector.load %arg8[%c0_23, %c1_24, %c1_25, %c0_26] : memref<1x18x18x8xf32, #tpu.memory_space<vmem>>, vector<1x16x16x8xf32>
    tpu.vector_store %arg8[%c0_23, %c1_24, %c1_25, %c0_26], %10 {strides = array<i32>} : memref<1x18x18x8xf32, #tpu.memory_space<vmem>>, vector<1x16x16x8xf32>,
    %c0_27 = arith.constant 0 : index
    %c0_28 = arith.constant 0 : index
    %c0_29 = arith.constant 0 : index
    %c0_30 = arith.constant 0 : index
    %18 = vector.load %arg8[%c0_27, %c0_28, %c0_29, %c0_30] : memref<1x18x18x8xf32, #tpu.memory_space<vmem>>, vector<1x18x18x8xf32>
    %19 = vector.extract_strided_slice %18 {offsets = [0, 0, 0, 0], sizes = [1, 16, 16, 8], strides = [1, 1, 1, 1]} : vector<1x18x18x8xf32> to vector<1x16x16x8xf32>
    %20 = vector.extract_strided_slice %18 {offsets = [0, 0, 1, 0], sizes = [1, 16, 16, 8], strides = [1, 1, 1, 1]} : vector<1x18x18x8xf32> to vector<1x16x16x8xf32>
    %21 = vector.extract_strided_slice %18 {offsets = [0, 0, 2, 0], sizes = [1, 16, 16, 8], strides = [1, 1, 1, 1]} : vector<1x18x18x8xf32> to vector<1x16x16x8xf32>
    %22 = vector.extract_strided_slice %18 {offsets = [0, 1, 0, 0], sizes = [1, 16, 16, 8], strides = [1, 1, 1, 1]} : vector<1x18x18x8xf32> to vector<1x16x16x8xf32>
    %23 = vector.extract_strided_slice %18 {offsets = [0, 1, 1, 0], sizes = [1, 16, 16, 8], strides = [1, 1, 1, 1]} : vector<1x18x18x8xf32> to vector<1x16x16x8xf32>
    %24 = vector.extract_strided_slice %18 {offsets = [0, 1, 2, 0], sizes = [1, 16, 16, 8], strides = [1, 1, 1, 1]} : vector<1x18x18x8xf32> to vector<1x16x16x8xf32>
    %25 = vector.extract_strided_slice %18 {offsets = [0, 2, 0, 0], sizes = [1, 16, 16, 8], strides = [1, 1, 1, 1]} : vector<1x18x18x8xf32> to vector<1x16x16x8xf32>
    %26 = vector.extract_strided_slice %18 {offsets = [0, 2, 1, 0], sizes = [1, 16, 16, 8], strides = [1, 1, 1, 1]} : vector<1x18x18x8xf32> to vector<1x16x16x8xf32>
    %27 = vector.extract_strided_slice %18 {offsets = [0, 2, 2, 0], sizes = [1, 16, 16, 8], strides = [1, 1, 1, 1]} : vector<1x18x18x8xf32> to vector<1x16x16x8xf32>
    %28 = tpu.concatenate %19, %20, %21, %22, %23, %24, %25, %26, %27 in 3 : vector<1x16x16x8xf32>, vector<1x16x16x8xf32>, vector<1x16x16x8xf32>, vector<1x16x16x8xf32>, vector<1x16x16x8xf32>, vector<1x16x16x8xf32>, vector<1x16x16x8xf32>, vector<1x16x16x8xf32>, vector<1x16x16x8xf32> -> vector<1x16x16x72xf32>
    %29 = vector.shape_cast %28 : vector<1x16x16x72xf32> to vector<256x72xf32>
    %c0_31 = arith.constant 0 : index
    %c0_32 = arith.constant 0 : index
    %30 = vector.load %arg4[%c0_31, %c0_32] : memref<72x8xf32, #tpu.memory_space<vmem>>, vector<72x8xf32>
    %cst_33 = arith.constant dense<0.000000e+00> : vector<256x8xf32>
    %31 = tpu.matmul %29, %30, %cst_33 {dimension_numbers = #tpu.dot_dimension_numbers<[1], [0], [0], [1], [0, 0, 1, 1], [], []>} : vector<256x72xf32>, vector<72x8xf32>, vector<256x8xf32> -> vector<256x8xf32>
    %c0_34 = arith.constant 0 : index
    %c0_35 = arith.constant 0 : index
    %32 = vector.load %arg5[%c0_34, %c0_35] : memref<1x8xf32, #tpu.memory_space<vmem>>, vector<1x8xf32>
    %33 = vector.broadcast %32 : vector<1x8xf32> to vector<256x8xf32>
    %34 = arith.addf %31, %33 : vector<256x8xf32>
    %35 = vector.shape_cast %34 : vector<256x8xf32> to vector<1x16x16x8xf32>
    %c0_36 = arith.constant 0 : index
    %c0_37 = arith.constant 0 : index
    %c0_38 = arith.constant 0 : index
    %c0_39 = arith.constant 0 : index
    %36 = vector.load %arg6[%c0_36, %c0_37, %c0_38, %c0_39] : memref<1x16x16x8xf32, #tpu.memory_space<vmem>>, vector<1x16x16x8xf32>
    tpu.vector_store %arg6[%c0_36, %c0_37, %c0_38, %c0_39], %35 {strides = array<i32>} : memref<1x16x16x8xf32, #tpu.memory_space<vmem>>, vector<1x16x16x8xf32>,
    %cst_40 = arith.constant dense<0.000000e+00> : vector<8xf32>
    %37 = vector.multi_reduction <add>, %34, %cst_40 [0] : vector<256x8xf32> to vector<8xf32>
    %38 = vector.shape_cast %37 : vector<8xf32> to vector<1x1x8xf32>
    %c0_41 = arith.constant 0 : index
    %c0_42 = arith.constant 0 : index
    %c0_43 = arith.constant 0 : index
    %39 = vector.load %arg7[%c0_41, %c0_42, %c0_43] : memref<1x2x8xf32, #tpu.memory_space<vmem>>, vector<1x1x8xf32>
    tpu.vector_store %arg7[%c0_41, %c0_42, %c0_43], %38 {strides = array<i32>} : memref<1x2x8xf32, #tpu.memory_space<vmem>>, vector<1x1x8xf32>,
    %40 = arith.mulf %34, %34 : vector<256x8xf32>
    %cst_44 = arith.constant dense<0.000000e+00> : vector<8xf32>
    %41 = vector.multi_reduction <add>, %40, %cst_44 [0] : vector<256x8xf32> to vector<8xf32>
    %42 = vector.shape_cast %41 : vector<8xf32> to vector<1x1x8xf32>
    %c0_45 = arith.constant 0 : index
    %c1_46 = arith.constant 1 : index
    %c0_47 = arith.constant 0 : index
    %43 = vector.load %arg7[%c0_45, %c1_46, %c0_47] : memref<1x2x8xf32, #tpu.memory_space<vmem>>, vector<1x1x8xf32>
    tpu.vector_store %arg7[%c0_45, %c1_46, %c0_47], %42 {strides = array<i32>} : memref<1x2x8xf32, #tpu.memory_space<vmem>>, vector<1x1x8xf32>,
    return
  }
  func.func @transform_0(%arg0: i32) -> (i32, i32, i32, i32) {
    %c0_i32 = arith.constant 0 : i32
    %c0_i32_0 = arith.constant 0 : i32
    %c0_i32_1 = arith.constant 0 : i32
    %c0_i32_2 = arith.constant 0 : i32
    return %arg0, %c0_i32, %c0_i32_0, %c0_i32_1 : i32, i32, i32, i32
  }
  func.func @transform_1(%arg0: i32) -> (i32, i32) {
    %c0_i32 = arith.constant 0 : i32
    %c0_i32_0 = arith.constant 0 : i32
    %c0_i32_1 = arith.constant 0 : i32
    return %c0_i32, %c0_i32_0 : i32, i32
  }
  func.func @transform_2(%arg0: i32) -> (i32, i32) {
    %c0_i32 = arith.constant 0 : i32
    %c0_i32_0 = arith.constant 0 : i32
    %c0_i32_1 = arith.constant 0 : i32
    return %c0_i32, %c0_i32_0 : i32, i32
  }
  func.func @transform_3(%arg0: i32) -> (i32, i32) {
    %c0_i32 = arith.constant 0 : i32
    %c0_i32_0 = arith.constant 0 : i32
    %c0_i32_1 = arith.constant 0 : i32
    return %c0_i32, %c0_i32_0 : i32, i32
  }
  func.func @transform_4(%arg0: i32) -> (i32, i32) {
    %c0_i32 = arith.constant 0 : i32
    %c0_i32_0 = arith.constant 0 : i32
    %c0_i32_1 = arith.constant 0 : i32
    return %c0_i32, %c0_i32_0 : i32, i32
  }
  func.func @transform_5(%arg0: i32) -> (i32, i32, i32, i32) {
    %c0_i32 = arith.constant 0 : i32
    %c0_i32_0 = arith.constant 0 : i32
    %c0_i32_1 = arith.constant 0 : i32
    %c0_i32_2 = arith.constant 0 : i32
    return %arg0, %c0_i32, %c0_i32_0, %c0_i32_1 : i32, i32, i32, i32
  }
  func.func @transform_6(%arg0: i32) -> (i32, i32, i32) {
    %c0_i32 = arith.constant 0 : i32
    %c0_i32_0 = arith.constant 0 : i32
    %c0_i32_1 = arith.constant 0 : i32
    return %arg0, %c0_i32, %c0_i32_0 : i32, i32, i32
  }
}

module attributes {stable_mosaic.version = 11 : i64} {
  func.func @_bn_residual_kernel(%arg0: i32, %arg1: memref<1x16x128xf32, #tpu.memory_space<vmem>>, %arg2: memref<1x16x128xf32, #tpu.memory_space<vmem>>, %arg3: memref<1x128xf32, #tpu.memory_space<vmem>>, %arg4: memref<1x128xf32, #tpu.memory_space<vmem>>, %arg5: memref<1x16x128xf32, #tpu.memory_space<vmem>>) attributes {dimension_semantics = [#tpu.dimension_semantics<parallel>], iteration_bounds = array<i64: 2>, scalar_prefetch = 0 : i64, scratch_operands = 0 : i64, tpu.core_type = #tpu.core_type<tc>, window_params = [{transform_indices = @transform_0, window_bounds = array<i64: 1, 16, 128>}, {transform_indices = @transform_1, window_bounds = array<i64: 1, 16, 128>}, {pipeline_mode = #tpu.pipeline_mode<synchronous>, transform_indices = @transform_2, window_bounds = array<i64: 1, 128>}, {pipeline_mode = #tpu.pipeline_mode<synchronous>, transform_indices = @transform_3, window_bounds = array<i64: 1, 128>}, {transform_indices = @transform_4, window_bounds = array<i64: 1, 16, 128>}]} {
    %c0 = arith.constant 0 : index
    %c0_0 = arith.constant 0 : index
    %c0_1 = arith.constant 0 : index
    %0 = vector.load %arg1[%c0, %c0_0, %c0_1] : memref<1x16x128xf32, #tpu.memory_space<vmem>>, vector<1x16x128xf32>
    %c0_2 = arith.constant 0 : index
    %c0_3 = arith.constant 0 : index
    %1 = vector.load %arg3[%c0_2, %c0_3] : memref<1x128xf32, #tpu.memory_space<vmem>>, vector<1x128xf32>
    %2 = vector.shape_cast %1 : vector<1x128xf32> to vector<1x1x128xf32>
    %3 = vector.broadcast %2 : vector<1x1x128xf32> to vector<1x16x128xf32>
    %4 = arith.mulf %0, %3 : vector<1x16x128xf32>
    %c0_4 = arith.constant 0 : index
    %c0_5 = arith.constant 0 : index
    %5 = vector.load %arg4[%c0_4, %c0_5] : memref<1x128xf32, #tpu.memory_space<vmem>>, vector<1x128xf32>
    %6 = vector.shape_cast %5 : vector<1x128xf32> to vector<1x1x128xf32>
    %7 = vector.broadcast %6 : vector<1x1x128xf32> to vector<1x16x128xf32>
    %8 = arith.addf %4, %7 : vector<1x16x128xf32>
    %c0_6 = arith.constant 0 : index
    %c0_7 = arith.constant 0 : index
    %c0_8 = arith.constant 0 : index
    %9 = vector.load %arg2[%c0_6, %c0_7, %c0_8] : memref<1x16x128xf32, #tpu.memory_space<vmem>>, vector<1x16x128xf32>
    %10 = arith.addf %8, %9 : vector<1x16x128xf32>
    %c0_9 = arith.constant 0 : index
    %c0_10 = arith.constant 0 : index
    %c0_11 = arith.constant 0 : index
    %11 = vector.load %arg5[%c0_9, %c0_10, %c0_11] : memref<1x16x128xf32, #tpu.memory_space<vmem>>, vector<1x16x128xf32>
    tpu.vector_store %arg5[%c0_9, %c0_10, %c0_11], %10 {strides = array<i32>} : memref<1x16x128xf32, #tpu.memory_space<vmem>>, vector<1x16x128xf32>,
    return
  }
  func.func @transform_0(%arg0: i32) -> (i32, i32, i32) {
    %c0_i32 = arith.constant 0 : i32
    %c0_i32_0 = arith.constant 0 : i32
    %c0_i32_1 = arith.constant 0 : i32
    return %arg0, %c0_i32, %c0_i32_0 : i32, i32, i32
  }
  func.func @transform_1(%arg0: i32) -> (i32, i32, i32) {
    %c0_i32 = arith.constant 0 : i32
    %c0_i32_0 = arith.constant 0 : i32
    %c0_i32_1 = arith.constant 0 : i32
    return %arg0, %c0_i32, %c0_i32_0 : i32, i32, i32
  }
  func.func @transform_2(%arg0: i32) -> (i32, i32) {
    %c0_i32 = arith.constant 0 : i32
    %c0_i32_0 = arith.constant 0 : i32
    %c0_i32_1 = arith.constant 0 : i32
    return %c0_i32, %c0_i32_0 : i32, i32
  }
  func.func @transform_3(%arg0: i32) -> (i32, i32) {
    %c0_i32 = arith.constant 0 : i32
    %c0_i32_0 = arith.constant 0 : i32
    %c0_i32_1 = arith.constant 0 : i32
    return %c0_i32, %c0_i32_0 : i32, i32
  }
  func.func @transform_4(%arg0: i32) -> (i32, i32, i32) {
    %c0_i32 = arith.constant 0 : i32
    %c0_i32_0 = arith.constant 0 : i32
    %c0_i32_1 = arith.constant 0 : i32
    return %arg0, %c0_i32, %c0_i32_0 : i32, i32, i32
  }
}

</mosaic_0001>

<llo_original>
// kernel: no_relu_basic_resnet_unit.5
$region0: #{no_relu_basic_resnet_unit.5}
  #allocation0 [shape = 'u32[]', space=smem, size = 0x4, offset = 0x4, fixed_abs, tag = 'smem constant byte address 0x4 - core index']
  #allocation1 [shape = 'u32[144,128]{1,0:T(1,128)}', space=vmem, size = 0x12000, scoped, tag = 'internal scratch']
  %s0 = inlined_call_operand.vmem [shape: f32[2,16,128], index: 0, kind: input, shape index: {}]
  %s1 = inlined_call_operand.vmem [shape: f32[2,16,128], index: 1, kind: input, shape index: {}]
  %s2 = inlined_call_operand.vmem [shape: f32[1,128], index: 2, kind: input, shape index: {}]
  %s3 = inlined_call_operand.vmem [shape: f32[1,128], index: 3, kind: input, shape index: {}]
  %s4 = inlined_call_operand.vmem [shape: f32[2,16,128], index: 4, kind: output, shape index: {}]
  %s5 = sld [smem:[#allocation0]]
  $region49: #{no_relu_basic_resnet_unit.5} parent=0
    _
  %s7 = ssub.s32 1, %s5
  %s8 = scalar_select 0, %s7, %s5
  loop: start=0, step=1, limit=4
  $region2: #{no_relu_basic_resnet_unit.5} parent=0 // loop_pre_header
    _
  $region3: #{no_relu_basic_resnet_unit.5} parent=0 // loop_header
    %s10 = sphi 0, %s14
    %p11 = scmp.ge.s32.totalorder %s10, 4
    %s20 = sphi 0, %s22
    %s23 = sphi 0, %s20
    %s24 = sphi 0, %s23
    %s40 = sphi 0, %s24
    %s46 = sphi 0, %s48
    %s49 = sphi 0, %s46
    %s50 = sphi 0, %s49
    %s66 = sphi 0, %s50
    %s70 = sphi 0, %s70
    %s72 = sphi 0, %s70
    %s73 = sphi 0, %s72
    %s87 = sphi 0, %s73
    %s91 = sphi 0, %s91
    %s93 = sphi 0, %s91
    %s94 = sphi 0, %s93
    %s108 = sphi 0, %s94
    %s114 = sphi 0, %s116
    %s117 = sphi 0, %s114
    %s118 = sphi 0, %s117
    %s134 = sphi 0, %s118
  $region4: #{no_relu_basic_resnet_unit.5} parent=0 // loop_header_branch
    %13 = sbr.rel (%p11) target = $region8
  $region5: #{no_relu_basic_resnet_unit.5} parent=0 // loop_body
    %s15 = ssub.s32 %s10, 1
    %s16 = ssub.s32 %s10, 2
    %s17 = sadd.s32 %s10, 1
    %s18 = ssub.s32 %s10, %s17
    %p19 = scmp.eq.s32.totalorder %s18, 0
    %s21 = sadd.s32 %s20, 1
    %s22 = scalar_select %p19, %s20, %s21
    %p25 = pneg %p19
    %p26 = scmp.eq.s32.totalorder %s10, 1
    %p27 = por %p25, %p26
    %p28 = scmp.ne.s32.totalorder %s20, %s23
    %p29 = scmp.eq.s32.totalorder %s10, 0
    %p30 = por %p28, %p29
    %p31 = scmp.ne.s32.totalorder %s20, %s23
    %p32 = scmp.eq.s32.totalorder %s15, 1
    %p33 = por %p31, %p32
    %p34 = scmp.ne.s32.totalorder %s23, %s24
    %p35 = scmp.eq.s32.totalorder %s15, 0
    %p36 = por %p34, %p35
    %p37 = scmp.ne.s32.totalorder %s23, %s24
    %p38 = scmp.eq.s32.totalorder %s16, 1
    %p39 = por %p37, %p38
    %p41 = scmp.ne.s32.totalorder %s24, %s40
    %p42 = scmp.eq.s32.totalorder %s16, 0
    %p43 = por %p41, %p42
    %s44 = ssub.s32 %s10, %s17
    %p45 = scmp.eq.s32.totalorder %s44, 0
    %s47 = sadd.s32 %s46, 1
    %s48 = scalar_select %p45, %s46, %s47
    %p51 = pneg %p45
    %p52 = scmp.eq.s32.totalorder %s10, 1
    %p53 = por %p51, %p52
    %p54 = scmp.ne.s32.totalorder %s46, %s49
    %p55 = scmp.eq.s32.totalorder %s10, 0
    %p56 = por %p54, %p55
    %p57 = scmp.ne.s32.totalorder %s46, %s49
    %p58 = scmp.eq.s32.totalorder %s15, 1
    %p59 = por %p57, %p58
    %p60 = scmp.ne.s32.totalorder %s49, %s50
    %p61 = scmp.eq.s32.totalorder %s15, 0
    %p62 = por %p60, %p61
    %p63 = scmp.ne.s32.totalorder %s49, %s50
    %p64 = scmp.eq.s32.totalorder %s16, 1
    %p65 = por %p63, %p64
    %p67 = scmp.ne.s32.totalorder %s50, %s66
    %p68 = scmp.eq.s32.totalorder %s16, 0
    %p69 = por %p67, %p68
    %s71 = sadd.s32 %s70, 1
    %p74 = scmp.eq.s32.totalorder %s10, 1
    %p75 = scmp.ne.s32.totalorder %s70, %s72
    %p76 = scmp.eq.s32.totalorder %s10, 0
    %p77 = por %p75, %p76
    %p78 = scmp.ne.s32.totalorder %s70, %s72
    %p79 = scmp.eq.s32.totalorder %s15, 1
    %p80 = por %p78, %p79
    %p81 = scmp.ne.s32.totalorder %s72, %s73
    %p82 = scmp.eq.s32.totalorder %s15, 0
    %p83 = por %p81, %p82
    %p84 = scmp.ne.s32.totalorder %s72, %s73
    %p85 = scmp.eq.s32.totalorder %s16, 1
    %p86 = por %p84, %p85
    %p88 = scmp.ne.s32.totalorder %s73, %s87
    %p89 = scmp.eq.s32.totalorder %s16, 0
    %p90 = por %p88, %p89
    %s92 = sadd.s32 %s91, 1
    %p95 = scmp.eq.s32.totalorder %s10, 1
    %p96 = scmp.ne.s32.totalorder %s91, %s93
    %p97 = scmp.eq.s32.totalorder %s10, 0
    %p98 = por %p96, %p97
    %p99 = scmp.ne.s32.totalorder %s91, %s93
    %p100 = scmp.eq.s32.totalorder %s15, 1
    %p101 = por %p99, %p100
    %p102 = scmp.ne.s32.totalorder %s93, %s94
    %p103 = scmp.eq.s32.totalorder %s15, 0
    %p104 = por %p102, %p103
    %p105 = scmp.ne.s32.totalorder %s93, %s94
    %p106 = scmp.eq.s32.totalorder %s16, 1
    %p107 = por %p105, %p106
    %p109 = scmp.ne.s32.totalorder %s94, %s108
    %p110 = scmp.eq.s32.totalorder %s16, 0
    %p111 = por %p109, %p110
    %s112 = ssub.s32 %s10, %s17
    %p113 = scmp.eq.s32.totalorder %s112, 0
    %s115 = sadd.s32 %s114, 1
    %s116 = scalar_select %p113, %s114, %s115
    %p119 = pneg %p113
    %p120 = scmp.eq.s32.totalorder %s10, 1
    %p121 = por %p119, %p120
    %p122 = scmp.ne.s32.totalorder %s114, %s117
    %p123 = scmp.eq.s32.totalorder %s10, 0
    %p124 = por %p122, %p123
    %p125 = scmp.ne.s32.totalorder %s114, %s117
    %p126 = scmp.eq.s32.totalorder %s15, 1
    %p127 = por %p125, %p126
    %p128 = scmp.ne.s32.totalorder %s117, %s118
    %p129 = scmp.eq.s32.totalorder %s15, 0
    %p130 = por %p128, %p129
    %p131 = scmp.ne.s32.totalorder %s117, %s118
    %p132 = scmp.eq.s32.totalorder %s16, 1
    %p133 = por %p131, %p132
    %p135 = scmp.ne.s32.totalorder %s118, %s134
    %p136 = scmp.eq.s32.totalorder %s16, 0
    %p137 = por %p135, %p136
    %p138 = scmp.le.s32.totalorder 1, %s10
    %p139 = scmp.lt.s32.totalorder %s10, 3
    %p140 = pnand %p138, %p139
    %p141 = pneg %p140
    // Predicated region
    $region9: #{no_relu_basic_resnet_unit.5} parent=5 // pred_check
      _
    $region10: #{no_relu_basic_resnet_unit.5} parent=5 // pred_check_branch
      %143 = sbr.rel (%p140) target = $region12
    $region11: #{no_relu_basic_resnet_unit.5} parent=5 // pred_region
      %s144 = ssub.s32 %s10, 1
      // Predicated region
      $region13: #{no_relu_basic_resnet_unit.5} parent=11 // pred_check
        %p145 = pneg %p83
      $region14: #{no_relu_basic_resnet_unit.5} parent=11 // pred_check_branch
        %147 = sbr.rel (%p145) target = $region16
      $region15: #{no_relu_basic_resnet_unit.5} parent=11 // pred_region
        _
      $region16: #{no_relu_basic_resnet_unit.5} parent=11 // pred_fallthru
        _
      // Predicated region
      $region17: #{no_relu_basic_resnet_unit.5} parent=11 // pred_check
        %p148 = pneg %p104
      $region18: #{no_relu_basic_resnet_unit.5} parent=11 // pred_check_branch
        %150 = sbr.rel (%p148) target = $region20
      $region19: #{no_relu_basic_resnet_unit.5} parent=11 // pred_region
        _
      $region20: #{no_relu_basic_resnet_unit.5} parent=11 // pred_fallthru
        _
    $region12: #{no_relu_basic_resnet_unit.5} parent=5 // pred_fallthru
      _
    %p151 = scmp.lt.s32.totalorder %s10, 2
    // Predicated region
    $region21: #{no_relu_basic_resnet_unit.5} parent=5 // pred_check
      %p152 = pneg %p151
    $region22: #{no_relu_basic_resnet_unit.5} parent=5 // pred_check_branch
      %154 = sbr.rel (%p152) target = $region24
    $region23: #{no_relu_basic_resnet_unit.5} parent=5 // pred_region
      // Predicated region
      $region25: #{no_relu_basic_resnet_unit.5} parent=23 // pred_check
        %p155 = pneg %p30
      $region26: #{no_relu_basic_resnet_unit.5} parent=23 // pred_check_branch
        %157 = sbr.rel (%p155) target = $region28
      $region27: #{no_relu_basic_resnet_unit.5} parent=23 // pred_region
        %p158 = scmp.lt.s32.totalorder %s10, 1
        %s159 = scalar_select %p158, %s10, 1
        %s160 = smul.addr %s159, 2
        %s161 = smul.addr %s160, 8
        %s162 = scalar_lea.vmem %s0, %s161
      $region28: #{no_relu_basic_resnet_unit.5} parent=23 // pred_fallthru
        _
      // Predicated region
      $region29: #{no_relu_basic_resnet_unit.5} parent=23 // pred_check
        %p163 = pneg %p56
      $region30: #{no_relu_basic_resnet_unit.5} parent=23 // pred_check_branch
        %165 = sbr.rel (%p163) target = $region32
      $region31: #{no_relu_basic_resnet_unit.5} parent=23 // pred_region
        %p166 = scmp.lt.s32.totalorder %s10, 1
        %s167 = scalar_select %p166, %s10, 1
        %s168 = smul.addr %s167, 2
        %s169 = smul.addr %s168, 8
        %s170 = scalar_lea.vmem %s1, %s169
      $region32: #{no_relu_basic_resnet_unit.5} parent=23 // pred_fallthru
        _
    $region24: #{no_relu_basic_resnet_unit.5} parent=5 // pred_fallthru
      _
    %p171 = scmp.le.s32.totalorder 1, %s10
    %p172 = scmp.lt.s32.totalorder %s10, 3
    %p173 = pnand %p171, %p172
    %p174 = pneg %p173
    // Predicated region
    $region33: #{no_relu_basic_resnet_unit.5} parent=5 // pred_check
      _
    $region34: #{no_relu_basic_resnet_unit.5} parent=5 // pred_check_branch
      %176 = sbr.rel (%p173) target = $region36
    $region35: #{no_relu_basic_resnet_unit.5} parent=5 // pred_region
      %s177 = ssub.s32 %s10, 1
      %p178 = scmp.lt.s32.totalorder %s15, 1
      %s179 = scalar_select %p178, %s15, 1
      %s180 = smul.addr %s179, 2
      %s181 = smul.addr %s180, 8
      %s182 = scalar_lea.vmem %s0, %s181
      %p183 = pneg %p36
      %p184 = pneg %p33
      %p185 = scmp.lt.s32.totalorder %s15, 1
      %s186 = scalar_select %p185, %s15, 1
      %s187 = smul.addr %s186, 2
      %s188 = smul.addr %s187, 8
      %s189 = scalar_lea.vmem %s1, %s188
      %p190 = pneg %p62
      %p191 = pneg %p59
      %p192 = pneg %p83
      %p193 = pneg %p80
      %p194 = pneg %p104
      %p195 = pneg %p101
      %p196 = pneg %p130
      %p197 = pneg %p127
      %p198 = scmp.lt.s32.totalorder %s15, 1
      %s199 = scalar_select %p198, %s15, 1
      %s200 = smul.addr %s199, 2
      %s201 = smul.addr %s200, 8
      %s202 = scalar_lea.vmem %s4, %s201
      %p203 = scmp.lt.s32.totalorder %s15, 1
      %s204 = scalar_select %p203, %s15, 1
      %s205 = smul.addr %s204, 2
      %s206 = smul.addr %s205, 8
      %s207 = scalar_lea.vmem %s0, %s206
      %p208 = scmp.lt.s32.totalorder %s15, 1
      %s209 = scalar_select %p208, %s15, 1
      %s210 = smul.addr %s209, 2
      %s211 = smul.addr %s210, 8
      %s212 = scalar_lea.vmem %s1, %s211
      %p213 = scmp.lt.s32.totalorder %s15, 1
      %s214 = scalar_select %p213, %s15, 1
      %s215 = smul.addr %s214, 2
      %s216 = smul.addr %s215, 8
      %s217 = scalar_lea.vmem %s4, %s216
      %v218 = vld [vmem:[%s207] sm:$0xff]
      %v219 = vld [vmem:[%s207 + $0x8] sm:$0xff]
      %v220 = vld [vmem:[%s2] sm:$0x1]
      %v222 = vlaneseq
      %v223 = vshrl.u32 %v222, 7
      %v224 = vsub.s32 0, %v223
      %v225 = vrot.slane %v220, %v224
      %v227 = vmul.f32 %v218, %v225
      %v228 = vmul.f32 %v219, %v225
      %v229 = vld [vmem:[%s3] sm:$0x1]
      %v231 = vlaneseq
      %v232 = vshrl.u32 %v231, 7
      %v233 = vsub.s32 0, %v232
      %v234 = vrot.slane %v229, %v233
      %v236 = vadd.f32 %v227, %v234
      %v237 = vadd.f32 %v228, %v234
      %v238 = vld [vmem:[%s212] sm:$0xff]
      %v239 = vld [vmem:[%s212 + $0x8] sm:$0xff]
      %v240 = vadd.f32 %v236, %v238
      %v241 = vadd.f32 %v237, %v239
      %242 = vst [vmem:[%s217] sm:$0xff] %v240
      %243 = vst [vmem:[%s217 + $0x8] sm:$0xff] %v241
      %p244 = scmp.lt.s32.totalorder %s15, 1
      %s245 = scalar_select %p244, %s15, 1
      %s246 = smul.addr %s245, 2
      %s247 = smul.addr %s246, 8
      %s248 = scalar_lea.vmem %s4, %s247
      // Predicated region
      $region37: #{no_relu_basic_resnet_unit.5} parent=35 // pred_check
        %p249 = pneg %p127
      $region38: #{no_relu_basic_resnet_unit.5} parent=35 // pred_check_branch
        %251 = sbr.rel (%p249) target = $region40
      $region39: #{no_relu_basic_resnet_unit.5} parent=35 // pred_region
        _
      $region40: #{no_relu_basic_resnet_unit.5} parent=35 // pred_fallthru
        _
    $region36: #{no_relu_basic_resnet_unit.5} parent=5 // pred_fallthru
      _
    %p252 = scmp.le.s32.totalorder 2, %s10
    // Predicated region
    $region41: #{no_relu_basic_resnet_unit.5} parent=5 // pred_check
      %p253 = pneg %p252
    $region42: #{no_relu_basic_resnet_unit.5} parent=5 // pred_check_branch
      %255 = sbr.rel (%p253) target = $region44
    $region43: #{no_relu_basic_resnet_unit.5} parent=5 // pred_region
      %s256 = ssub.s32 %s10, 2
      // Predicated region
      $region45: #{no_relu_basic_resnet_unit.5} parent=43 // pred_check
        %p257 = pneg %p133
      $region46: #{no_relu_basic_resnet_unit.5} parent=43 // pred_check_branch
        %259 = sbr.rel (%p257) target = $region48
      $region47: #{no_relu_basic_resnet_unit.5} parent=43 // pred_region
        %p260 = scmp.lt.s32.totalorder %s16, 1
        %s261 = scalar_select %p260, %s16, 1
        %s262 = smul.addr %s261, 2
        %s263 = smul.addr %s262, 8
        %s264 = scalar_lea.vmem %s4, %s263
      $region48: #{no_relu_basic_resnet_unit.5} parent=43 // pred_fallthru
        _
    $region44: #{no_relu_basic_resnet_unit.5} parent=5 // pred_fallthru
      _
  $region6: #{no_relu_basic_resnet_unit.5} parent=0 // loop_footer
    %s14 = sadd.s32 1, %s10
  $region7: #{no_relu_basic_resnet_unit.5} parent=0 // loop_footer_branch
    %9 = sbr.rel target = $region3
  $region8: #{no_relu_basic_resnet_unit.5} parent=0 // loop_exit
    _

// kernel: no_relu_basic_resnet_unit.3
$region0: #{no_relu_basic_resnet_unit.3}
  #allocation0 [shape = 'u32[]', space=smem, size = 0x4, offset = 0x4, fixed_abs, tag = 'smem constant byte address 0x4 - core index']
  #allocation1 [shape = 'u32[144,128]{1,0:T(1,128)}', space=vmem, size = 0x12000, scoped, tag = 'internal scratch']
  #allocation2 [shape = 'f32[1,18,18,8]{3,2,1,0:T(8,128)}', space=vmem, size = 0x36000, scoped, tag = 'scratch operand']
  %s0 = inlined_call_operand.vmem [shape: f32[2,16,16,8], index: 0, kind: input, shape index: {}]
  %s1 = inlined_call_operand.vmem [shape: f32[72,8], index: 1, kind: input, shape index: {}]
  %s2 = inlined_call_operand.vmem [shape: f32[1,8], index: 2, kind: input, shape index: {}]
  %s3 = inlined_call_operand.vmem [shape: f32[2,16,16,8], index: 3, kind: output, shape index: {0}]
  %s4 = inlined_call_operand.vmem [shape: f32[2,2,8], index: 4, kind: output, shape index: {1}]
  %5 = xla_tuple %s3, %s4
  %s6 = sld [smem:[#allocation0]]
  $region53: #{no_relu_basic_resnet_unit.3} parent=0
    _
  %s8 = ssub.s32 1, %s6
  %s9 = scalar_select 0, %s8, %s6
  loop: start=0, step=1, limit=4
  $region2: #{no_relu_basic_resnet_unit.3} parent=0 // loop_pre_header
    _
  $region3: #{no_relu_basic_resnet_unit.3} parent=0 // loop_header
    %s11 = sphi 0, %s15
    %p12 = scmp.ge.s32.totalorder %s11, 4
    %s21 = sphi 0, %s23
    %s24 = sphi 0, %s21
    %s25 = sphi 0, %s24
    %s41 = sphi 0, %s25
    %s45 = sphi 0, %s45
    %s47 = sphi 0, %s45
    %s48 = sphi 0, %s47
    %s62 = sphi 0, %s48
    %s66 = sphi 0, %s66
    %s68 = sphi 0, %s66
    %s69 = sphi 0, %s68
    %s83 = sphi 0, %s69
    %s89 = sphi 0, %s91
    %s92 = sphi 0, %s89
    %s93 = sphi 0, %s92
    %s109 = sphi 0, %s93
    %s115 = sphi 0, %s117
    %s118 = sphi 0, %s115
    %s119 = sphi 0, %s118
    %s135 = sphi 0, %s119
  $region4: #{no_relu_basic_resnet_unit.3} parent=0 // loop_header_branch
    %14 = sbr.rel (%p12) target = $region8
  $region5: #{no_relu_basic_resnet_unit.3} parent=0 // loop_body
    %s16 = ssub.s32 %s11, 1
    %s17 = ssub.s32 %s11, 2
    %s18 = sadd.s32 %s11, 1
    %s19 = ssub.s32 %s11, %s18
    %p20 = scmp.eq.s32.totalorder %s19, 0
    %s22 = sadd.s32 %s21, 1
    %s23 = scalar_select %p20, %s21, %s22
    %p26 = pneg %p20
    %p27 = scmp.eq.s32.totalorder %s11, 1
    %p28 = por %p26, %p27
    %p29 = scmp.ne.s32.totalorder %s21, %s24
    %p30 = scmp.eq.s32.totalorder %s11, 0
    %p31 = por %p29, %p30
    %p32 = scmp.ne.s32.totalorder %s21, %s24
    %p33 = scmp.eq.s32.totalorder %s16, 1
    %p34 = por %p32, %p33
    %p35 = scmp.ne.s32.totalorder %s24, %s25
    %p36 = scmp.eq.s32.totalorder %s16, 0
    %p37 = por %p35, %p36
    %p38 = scmp.ne.s32.totalorder %s24, %s25
    %p39 = scmp.eq.s32.totalorder %s17, 1
    %p40 = por %p38, %p39
    %p42 = scmp.ne.s32.totalorder %s25, %s41
    %p43 = scmp.eq.s32.totalorder %s17, 0
    %p44 = por %p42, %p43
    %s46 = sadd.s32 %s45, 1
    %p49 = scmp.eq.s32.totalorder %s11, 1
    %p50 = scmp.ne.s32.totalorder %s45, %s47
    %p51 = scmp.eq.s32.totalorder %s11, 0
    %p52 = por %p50, %p51
    %p53 = scmp.ne.s32.totalorder %s45, %s47
    %p54 = scmp.eq.s32.totalorder %s16, 1
    %p55 = por %p53, %p54
    %p56 = scmp.ne.s32.totalorder %s47, %s48
    %p57 = scmp.eq.s32.totalorder %s16, 0
    %p58 = por %p56, %p57
    %p59 = scmp.ne.s32.totalorder %s47, %s48
    %p60 = scmp.eq.s32.totalorder %s17, 1
    %p61 = por %p59, %p60
    %p63 = scmp.ne.s32.totalorder %s48, %s62
    %p64 = scmp.eq.s32.totalorder %s17, 0
    %p65 = por %p63, %p64
    %s67 = sadd.s32 %s66, 1
    %p70 = scmp.eq.s32.totalorder %s11, 1
    %p71 = scmp.ne.s32.totalorder %s66, %s68
    %p72 = scmp.eq.s32.totalorder %s11, 0
    %p73 = por %p71, %p72
    %p74 = scmp.ne.s32.totalorder %s66, %s68
    %p75 = scmp.eq.s32.totalorder %s16, 1
    %p76 = por %p74, %p75
    %p77 = scmp.ne.s32.totalorder %s68, %s69
    %p78 = scmp.eq.s32.totalorder %s16, 0
    %p79 = por %p77, %p78
    %p80 = scmp.ne.s32.totalorder %s68, %s69
    %p81 = scmp.eq.s32.totalorder %s17, 1
    %p82 = por %p80, %p81
    %p84 = scmp.ne.s32.totalorder %s69, %s83
    %p85 = scmp.eq.s32.totalorder %s17, 0
    %p86 = por %p84, %p85
    %s87 = ssub.s32 %s11, %s18
    %p88 = scmp.eq.s32.totalorder %s87, 0
    %s90 = sadd.s32 %s89, 1
    %s91 = scalar_select %p88, %s89, %s90
    %p94 = pneg %p88
    %p95 = scmp.eq.s32.totalorder %s11, 1
    %p96 = por %p94, %p95
    %p97 = scmp.ne.s32.totalorder %s89, %s92
    %p98 = scmp.eq.s32.totalorder %s11, 0
    %p99 = por %p97, %p98
    %p100 = scmp.ne.s32.totalorder %s89, %s92
    %p101 = scmp.eq.s32.totalorder %s16, 1
    %p102 = por %p100, %p101
    %p103 = scmp.ne.s32.totalorder %s92, %s93
    %p104 = scmp.eq.s32.totalorder %s16, 0
    %p105 = por %p103, %p104
    %p106 = scmp.ne.s32.totalorder %s92, %s93
    %p107 = scmp.eq.s32.totalorder %s17, 1
    %p108 = por %p106, %p107
    %p110 = scmp.ne.s32.totalorder %s93, %s109
    %p111 = scmp.eq.s32.totalorder %s17, 0
    %p112 = por %p110, %p111
    %s113 = ssub.s32 %s11, %s18
    %p114 = scmp.eq.s32.totalorder %s113, 0
    %s116 = sadd.s32 %s115, 1
    %s117 = scalar_select %p114, %s115, %s116
    %p120 = pneg %p114
    %p121 = scmp.eq.s32.totalorder %s11, 1
    %p122 = por %p120, %p121
    %p123 = scmp.ne.s32.totalorder %s115, %s118
    %p124 = scmp.eq.s32.totalorder %s11, 0
    %p125 = por %p123, %p124
    %p126 = scmp.ne.s32.totalorder %s115, %s118
    %p127 = scmp.eq.s32.totalorder %s16, 1
    %p128 = por %p126, %p127
    %p129 = scmp.ne.s32.totalorder %s118, %s119
    %p130 = scmp.eq.s32.totalorder %s16, 0
    %p131 = por %p129, %p130
    %p132 = scmp.ne.s32.totalorder %s118, %s119
    %p133 = scmp.eq.s32.totalorder %s17, 1
    %p134 = por %p132, %p133
    %p136 = scmp.ne.s32.totalorder %s119, %s135
    %p137 = scmp.eq.s32.totalorder %s17, 0
    %p138 = por %p136, %p137
    %p139 = scmp.le.s32.totalorder 1, %s11
    %p140 = scmp.lt.s32.totalorder %s11, 3
    %p141 = pnand %p139, %p140
    %p142 = pneg %p141
    // Predicated region
    $region9: #{no_relu_basic_resnet_unit.3} parent=5 // pred_check
      _
    $region10: #{no_relu_basic_resnet_unit.3} parent=5 // pred_check_branch
      %144 = sbr.rel (%p141) target = $region12
    $region11: #{no_relu_basic_resnet_unit.3} parent=5 // pred_region
      %s145 = ssub.s32 %s11, 1
      // Predicated region
      $region13: #{no_relu_basic_resnet_unit.3} parent=11 // pred_check
        %p146 = pneg %p58
      $region14: #{no_relu_basic_resnet_unit.3} parent=11 // pred_check_branch
        %148 = sbr.rel (%p146) target = $region16
      $region15: #{no_relu_basic_resnet_unit.3} parent=11 // pred_region
        _
      $region16: #{no_relu_basic_resnet_unit.3} parent=11 // pred_fallthru
        _
      // Predicated region
      $region17: #{no_relu_basic_resnet_unit.3} parent=11 // pred_check
        %p149 = pneg %p79
      $region18: #{no_relu_basic_resnet_unit.3} parent=11 // pred_check_branch
        %151 = sbr.rel (%p149) target = $region20
      $region19: #{no_relu_basic_resnet_unit.3} parent=11 // pred_region
        _
      $region20: #{no_relu_basic_resnet_unit.3} parent=11 // pred_fallthru
        _
    $region12: #{no_relu_basic_resnet_unit.3} parent=5 // pred_fallthru
      _
    %p152 = scmp.lt.s32.totalorder %s11, 2
    // Predicated region
    $region21: #{no_relu_basic_resnet_unit.3} parent=5 // pred_check
      %p153 = pneg %p152
    $region22: #{no_relu_basic_resnet_unit.3} parent=5 // pred_check_branch
      %155 = sbr.rel (%p153) target = $region24
    $region23: #{no_relu_basic_resnet_unit.3} parent=5 // pred_region
      // Predicated region
      $region25: #{no_relu_basic_resnet_unit.3} parent=23 // pred_check
        %p156 = pneg %p31
      $region26: #{no_relu_basic_resnet_unit.3} parent=23 // pred_check_branch
        %158 = sbr.rel (%p156) target = $region28
      $region27: #{no_relu_basic_resnet_unit.3} parent=23 // pred_region
        %p159 = scmp.lt.s32.totalorder %s11, 1
        %s160 = scalar_select %p159, %s11, 1
        %s161 = smul.addr %s160, 32
        %s162 = smul.addr %s161, 8
        %s163 = scalar_lea.vmem %s0, %s162
      $region28: #{no_relu_basic_resnet_unit.3} parent=23 // pred_fallthru
        _
    $region24: #{no_relu_basic_resnet_unit.3} parent=5 // pred_fallthru
      _
    %p164 = scmp.le.s32.totalorder 1, %s11
    %p165 = scmp.lt.s32.totalorder %s11, 3
    %p166 = pnand %p164, %p165
    %p167 = pneg %p166
    // Predicated region
    $region29: #{no_relu_basic_resnet_unit.3} parent=5 // pred_check
      _
    $region30: #{no_relu_basic_resnet_unit.3} parent=5 // pred_check_branch
      %169 = sbr.rel (%p166) target = $region32
    $region31: #{no_relu_basic_resnet_unit.3} parent=5 // pred_region
      %s170 = ssub.s32 %s11, 1
      %p171 = scmp.lt.s32.totalorder %s16, 1
      %s172 = scalar_select %p171, %s16, 1
      %s173 = smul.addr %s172, 32
      %s174 = smul.addr %s173, 8
      %s175 = scalar_lea.vmem %s0, %s174
      %p176 = pneg %p37
      %p177 = pneg %p34
      %p178 = pneg %p58
      %p179 = pneg %p55
      %p180 = pneg %p79
      %p181 = pneg %p76
      %p182 = pneg %p105
      %p183 = pneg %p102
      %p184 = scmp.lt.s32.totalorder %s16, 1
      %s185 = scalar_select %p184, %s16, 1
      %s186 = smul.addr %s185, 32
      %s187 = smul.addr %s186, 8
      %s188 = scalar_lea.vmem %s3, %s187
      %p189 = pneg %p131
      %p190 = pneg %p128
      %p191 = scmp.lt.s32.totalorder %s16, 1
      %s192 = scalar_select %p191, %s16, 1
      %s193 = smul.addr %s192, 2
      %s194 = scalar_lea.vmem %s4, %s193
      %p195 = scmp.lt.s32.totalorder %s16, 1
      %s196 = scalar_select %p195, %s16, 1
      %s197 = smul.addr %s196, 32
      %s198 = smul.addr %s197, 8
      %s199 = scalar_lea.vmem %s0, %s198
      %p200 = scmp.lt.s32.totalorder %s16, 1
      %s201 = scalar_select %p200, %s16, 1
      %s202 = smul.addr %s201, 32
      %s203 = smul.addr %s202, 8
      %s204 = scalar_lea.vmem %s3, %s203
      %p205 = scmp.lt.s32.totalorder %s16, 1
      %s206 = scalar_select %p205, %s16, 1
      %s207 = smul.addr %s206, 2
      %s208 = scalar_lea.vmem %s4, %s207
      %v209 = vld [vmem:[%s199] sm:$0xff]
      %v210 = vld [vmem:[%s199 + $0x8] sm:$0xff]
      %v211 = vld [vmem:[%s199 + $0x10] sm:$0xff]
      %v212 = vld [vmem:[%s199 + $0x18] sm:$0xff]
      %v213 = vld [vmem:[%s199 + $0x20] sm:$0xff]
      %v214 = vld [vmem:[%s199 + $0x28] sm:$0xff]
      %v215 = vld [vmem:[%s199 + $0x30] sm:$0xff]
      %v216 = vld [vmem:[%s199 + $0x38] sm:$0xff]
      %v217 = vld [vmem:[%s199 + $0x40] sm:$0xff]
      %v218 = vld [vmem:[%s199 + $0x48] sm:$0xff]
      %v219 = vld [vmem:[%s199 + $0x50] sm:$0xff]
      %v220 = vld [vmem:[%s199 + $0x58] sm:$0xff]
      %v221 = vld [vmem:[%s199 + $0x60] sm:$0xff]
      %v222 = vld [vmem:[%s199 + $0x68] sm:$0xff]
      %v223 = vld [vmem:[%s199 + $0x70] sm:$0xff]
      %v224 = vld [vmem:[%s199 + $0x78] sm:$0xff]
      %v225 = vld [vmem:[%s199 + $0x80] sm:$0xff]
      %v226 = vld [vmem:[%s199 + $0x88] sm:$0xff]
      %v227 = vld [vmem:[%s199 + $0x90] sm:$0xff]
      %v228 = vld [vmem:[%s199 + $0x98] sm:$0xff]
      %v229 = vld [vmem:[%s199 + $0xa0] sm:$0xff]
      %v230 = vld [vmem:[%s199 + $0xa8] sm:$0xff]
      %v231 = vld [vmem:[%s199 + $0xb0] sm:$0xff]
      %v232 = vld [vmem:[%s199 + $0xb8] sm:$0xff]
      %v233 = vld [vmem:[%s199 + $0xc0] sm:$0xff]
      %v234 = vld [vmem:[%s199 + $0xc8] sm:$0xff]
      %v235 = vld [vmem:[%s199 + $0xd0] sm:$0xff]
      %v236 = vld [vmem:[%s199 + $0xd8] sm:$0xff]
      %v237 = vld [vmem:[%s199 + $0xe0] sm:$0xff]
      %v238 = vld [vmem:[%s199 + $0xe8] sm:$0xff]
      %v239 = vld [vmem:[%s199 + $0xf0] sm:$0xff]
      %v240 = vld [vmem:[%s199 + $0xf8] sm:$0xff]
      %vm241 = vcmask 64512
      %242 = vst.msk [vmem:[#allocation2] sm:$0xff] %vm241, 0.0
      %243 = vst.msk [vmem:[#allocation2 + $0x8] sm:$0xff] %vm241, 0.0
      %vm244 = vcmask 58368
      %245 = vst.msk [vmem:[#allocation2 + $0x10] sm:$0x3] %vm244, 0.0
      %s246 = scalar_lea.vmem [#allocation2], 408
      %247 = vst.msk [vmem:[%s246] sm:$0xff] %vm241, 0.0
      %248 = vst.msk [vmem:[%s246 + $0x8] sm:$0xff] %vm241, 0.0
      %249 = vst.msk [vmem:[%s246 + $0x10] sm:$0x3] %vm244, 0.0
      %s250 = scalar_lea.vmem [#allocation2], 24
      %vm251 = vcmask 57344
      %252 = vst.msk [vmem:[%s250] sm:$0x1] %vm251, 0.0
      %253 = vst.msk [vmem:[%s250 + $0x18] sm:$0x1] %vm251, 0.0
      %254 = vst.msk [vmem:[%s250 + $0x30] sm:$0x1] %vm251, 0.0
      %255 = vst.msk [vmem:[%s250 + $0x48] sm:$0x1] %vm251, 0.0
      %256 = vst.msk [vmem:[%s250 + $0x60] sm:$0x1] %vm251, 0.0
      %257 = vst.msk [vmem:[%s250 + $0x78] sm:$0x1] %vm251, 0.0
      %258 = vst.msk [vmem:[%s250 + $0x90] sm:$0x1] %vm251, 0.0
      %259 = vst.msk [vmem:[%s250 + $0xa8] sm:$0x1] %vm251, 0.0
      %260 = vst.msk [vmem:[%s250 + $0xc0] sm:$0x1] %vm251, 0.0
      %261 = vst.msk [vmem:[%s250 + $0xd8] sm:$0x1] %vm251, 0.0
      %262 = vst.msk [vmem:[%s250 + $0xf0] sm:$0x1] %vm251, 0.0
      %263 = vst.msk [vmem:[%s250 + $0x108] sm:$0x1] %vm251, 0.0
      %264 = vst.msk [vmem:[%s250 + $0x120] sm:$0x1] %vm251, 0.0
      %265 = vst.msk [vmem:[%s250 + $0x138] sm:$0x1] %vm251, 0.0
      %266 = vst.msk [vmem:[%s250 + $0x150] sm:$0x1] %vm251, 0.0
      %267 = vst.msk [vmem:[%s250 + $0x168] sm:$0x1] %vm251, 0.0
      %268 = vst.msk [vmem:[%s250 + $0x11] sm:$0x1] %vm251, 0.0
      %269 = vst.msk [vmem:[%s250 + $0x29] sm:$0x1] %vm251, 0.0
      %270 = vst.msk [vmem:[%s250 + $0x41] sm:$0x1] %vm251, 0.0
      %271 = vst.msk [vmem:[%s250 + $0x59] sm:$0x1] %vm251, 0.0
      %272 = vst.msk [vmem:[%s250 + $0x71] sm:$0x1] %vm251, 0.0
      %273 = vst.msk [vmem:[%s250 + $0x89] sm:$0x1] %vm251, 0.0
      %274 = vst.msk [vmem:[%s250 + $0xa1] sm:$0x1] %vm251, 0.0
      %275 = vst.msk [vmem:[%s250 + $0xb9] sm:$0x1] %vm251, 0.0
      %276 = vst.msk [vmem:[%s250 + $0xd1] sm:$0x1] %vm251, 0.0
      %277 = vst.msk [vmem:[%s250 + $0xe9] sm:$0x1] %vm251, 0.0
      %278 = vst.msk [vmem:[%s250 + $0x101] sm:$0x1] %vm251, 0.0
      %279 = vst.msk [vmem:[%s250 + $0x119] sm:$0x1] %vm251, 0.0
      %280 = vst.msk [vmem:[%s250 + $0x131] sm:$0x1] %vm251, 0.0
      %281 = vst.msk [vmem:[%s250 + $0x149] sm:$0x1] %vm251, 0.0
      %282 = vst.msk [vmem:[%s250 + $0x161] sm:$0x1] %vm251, 0.0
      %283 = vst.msk [vmem:[%s250 + $0x179] sm:$0x1] %vm251, 0.0
      %284 = vst.msk [vmem:[%s250 + $0x1] sm:$0xff] %vm241, %v209
      %285 = vst.msk [vmem:[%s250 + $0x9] sm:$0xff] %vm241, %v210
      %286 = vst.msk [vmem:[%s250 + $0x19] sm:$0xff] %vm241, %v211
      %287 = vst.msk [vmem:[%s250 + $0x21] sm:$0xff] %vm241, %v212
      %288 = vst.msk [vmem:[%s250 + $0x31] sm:$0xff] %vm241, %v213
      %289 = vst.msk [vmem:[%s250 + $0x39] sm:$0xff] %vm241, %v214
      %290 = vst.msk [vmem:[%s250 + $0x49] sm:$0xff] %vm241, %v215
      %291 = vst.msk [vmem:[%s250 + $0x51] sm:$0xff] %vm241, %v216
      %292 = vst.msk [vmem:[%s250 + $0x61] sm:$0xff] %vm241, %v217
      %293 = vst.msk [vmem:[%s250 + $0x69] sm:$0xff] %vm241, %v218
      %294 = vst.msk [vmem:[%s250 + $0x79] sm:$0xff] %vm241, %v219
      %295 = vst.msk [vmem:[%s250 + $0x81] sm:$0xff] %vm241, %v220
      %296 = vst.msk [vmem:[%s250 + $0x91] sm:$0xff] %vm241, %v221
      %297 = vst.msk [vmem:[%s250 + $0x99] sm:$0xff] %vm241, %v222
      %298 = vst.msk [vmem:[%s250 + $0xa9] sm:$0xff] %vm241, %v223
      %299 = vst.msk [vmem:[%s250 + $0xb1] sm:$0xff] %vm241, %v224
      %300 = vst.msk [vmem:[%s250 + $0xc1] sm:$0xff] %vm241, %v225
      %301 = vst.msk [vmem:[%s250 + $0xc9] sm:$0xff] %vm241, %v226
      %302 = vst.msk [vmem:[%s250 + $0xd9] sm:$0xff] %vm241, %v227
      %303 = vst.msk [vmem:[%s250 + $0xe1] sm:$0xff] %vm241, %v228
      %304 = vst.msk [vmem:[%s250 + $0xf1] sm:$0xff] %vm241, %v229
      %305 = vst.msk [vmem:[%s250 + $0xf9] sm:$0xff] %vm241, %v230
      %306 = vst.msk [vmem:[%s250 + $0x109] sm:$0xff] %vm241, %v231
      %307 = vst.msk [vmem:[%s250 + $0x111] sm:$0xff] %vm241, %v232
      %308 = vst.msk [vmem:[%s250 + $0x121] sm:$0xff] %vm241, %v233
      %309 = vst.msk [vmem:[%s250 + $0x129] sm:$0xff] %vm241, %v234
      %310 = vst.msk [vmem:[%s250 + $0x139] sm:$0xff] %vm241, %v235
      %311 = vst.msk [vmem:[%s250 + $0x141] sm:$0xff] %vm241, %v236
      %312 = vst.msk [vmem:[%s250 + $0x151] sm:$0xff] %vm241, %v237
      %313 = vst.msk [vmem:[%s250 + $0x159] sm:$0xff] %vm241, %v238
      %314 = vst.msk [vmem:[%s250 + $0x169] sm:$0xff] %vm241, %v239
      %315 = vst.msk [vmem:[%s250 + $0x171] sm:$0xff] %vm241, %v240
      %v316 = vld [vmem:[#allocation2] sm:$0xff]
      %v317 = vld [vmem:[#allocation2 + $0x8] sm:$0xff]
      %v318 = vld [vmem:[#allocation2 + $0x10] sm:$0x3]
      %v319 = vld [vmem:[#allocation2 + $0x18] sm:$0xff]
      %v320 = vld [vmem:[#allocation2 + $0x20] sm:$0xff]
      %v321 = vld [vmem:[#allocation2 + $0x28] sm:$0x3]
      %v322 = vld [vmem:[#allocation2 + $0x30] sm:$0xff]
      %v323 = vld [vmem:[#allocation2 + $0x38] sm:$0xff]
      %v324 = vld [vmem:[#allocation2 + $0x40] sm:$0x3]
      %v325 = vld [vmem:[#allocation2 + $0x48] sm:$0xff]
      %v326 = vld [vmem:[#allocation2 + $0x50] sm:$0xff]
      %v327 = vld [vmem:[#allocation2 + $0x58] sm:$0x3]
      %v328 = vld [vmem:[#allocation2 + $0x60] sm:$0xff]
      %v329 = vld [vmem:[#allocation2 + $0x68] sm:$0xff]
      %v330 = vld [vmem:[#allocation2 + $0x70] sm:$0x3]
      %v331 = vld [vmem:[#allocation2 + $0x78] sm:$0xff]
      %v332 = vld [vmem:[#allocation2 + $0x80] sm:$0xff]
      %v333 = vld [vmem:[#allocation2 + $0x88] sm:$0x3]
      %v334 = vld [vmem:[#allocation2 + $0x90] sm:$0xff]
      %v335 = vld [vmem:[#allocation2 + $0x98] sm:$0xff]
      %v336 = vld [vmem:[#allocation2 + $0xa0] sm:$0x3]
      %v337 = vld [vmem:[#allocation2 + $0xa8] sm:$0xff]
      %v338 = vld [vmem:[#allocation2 + $0xb0] sm:$0xff]
      %v339 = vld [vmem:[#allocation2 + $0xb8] sm:$0x3]
      %v340 = vld [vmem:[#allocation2 + $0xc0] sm:$0xff]
      %v341 = vld [vmem:[#allocation2 + $0xc8] sm:$0xff]
      %v342 = vld [vmem:[#allocation2 + $0xd0] sm:$0x3]
      %v343 = vld [vmem:[#allocation2 + $0xd8] sm:$0xff]
      %v344 = vld [vmem:[#allocation2 + $0xe0] sm:$0xff]
      %v345 = vld [vmem:[#allocation2 + $0xe8] sm:$0x3]
      %v346 = vld [vmem:[#allocation2 + $0xf0] sm:$0xff]
      %v347 = vld [vmem:[#allocation2 + $0xf8] sm:$0xff]
      %v348 = vld [vmem:[#allocation2 + $0x100] sm:$0x3]
      %v349 = vld [vmem:[#allocation2 + $0x108] sm:$0xff]
      %v350 = vld [vmem:[#allocation2 + $0x110] sm:$0xff]
      %v351 = vld [vmem:[#allocation2 + $0x118] sm:$0x3]
      %v352 = vld [vmem:[#allocation2 + $0x120] sm:$0xff]
      %v353 = vld [vmem:[#allocation2 + $0x128] sm:$0xff]
      %v354 = vld [vmem:[#allocation2 + $0x130] sm:$0x3]
      %v355 = vld [vmem:[#allocation2 + $0x138] sm:$0xff]
      %v356 = vld [vmem:[#allocation2 + $0x140] sm:$0xff]
      %v357 = vld [vmem:[#allocation2 + $0x148] sm:$0x3]
      %v358 = vld [vmem:[#allocation2 + $0x150] sm:$0xff]
      %v359 = vld [vmem:[#allocation2 + $0x158] sm:$0xff]
      %v360 = vld [vmem:[#allocation2 + $0x160] sm:$0x3]
      %v361 = vld [vmem:[#allocation2 + $0x168] sm:$0xff]
      %v362 = vld [vmem:[#allocation2 + $0x170] sm:$0xff]
      %v363 = vld [vmem:[#allocation2 + $0x178] sm:$0x3]
      %v364 = vld [vmem:[#allocation2 + $0x180] sm:$0xff]
      %v365 = vld [vmem:[#allocation2 + $0x188] sm:$0xff]
      %v366 = vld [vmem:[#allocation2 + $0x190] sm:$0x3]
      %v367 = vld [vmem:[#allocation2 + $0x198] sm:$0xff]
      %v368 = vld [vmem:[#allocation2 + $0x1a0] sm:$0xff]
      %v369 = vld [vmem:[#allocation2 + $0x1a8] sm:$0x3]
      %vm418 = vcmask 1046528
      %v419 = vrot.slane %v316, 1
      %v420 = vrot.slane %v317, 1
      %v421 = vsel %vm418, %v419, %v420
      %v422 = vrot.slane %v318, 1
      %v423 = vsel %vm418, %v420, %v422
      %v424 = vrot.slane %v319, 1
      %v425 = vrot.slane %v320, 1
      %v426 = vsel %vm418, %v424, %v425
      %v427 = vrot.slane %v321, 1
      %v428 = vsel %vm418, %v425, %v427
      %v429 = vrot.slane %v322, 1
      %v430 = vrot.slane %v323, 1
      %v431 = vsel %vm418, %v429, %v430
      %v432 = vrot.slane %v324, 1
      %v433 = vsel %vm418, %v430, %v432
      %v434 = vrot.slane %v325, 1
      %v435 = vrot.slane %v326, 1
      %v436 = vsel %vm418, %v434, %v435
      %v437 = vrot.slane %v327, 1
      %v438 = vsel %vm418, %v435, %v437
      %v439 = vrot.slane %v328, 1
      %v440 = vrot.slane %v329, 1
      %v441 = vsel %vm418, %v439, %v440
      %v442 = vrot.slane %v330, 1
      %v443 = vsel %vm418, %v440, %v442
      %v444 = vrot.slane %v331, 1
      %v445 = vrot.slane %v332, 1
      %v446 = vsel %vm418, %v444, %v445
      %v447 = vrot.slane %v333, 1
      %v448 = vsel %vm418, %v445, %v447
      %v449 = vrot.slane %v334, 1
      %v450 = vrot.slane %v335, 1
      %v451 = vsel %vm418, %v449, %v450
      %v452 = vrot.slane %v336, 1
      %v453 = vsel %vm418, %v450, %v452
      %v454 = vrot.slane %v337, 1
      %v455 = vrot.slane %v338, 1
      %v456 = vsel %vm418, %v454, %v455
      %v457 = vrot.slane %v339, 1
      %v458 = vsel %vm418, %v455, %v457
      %v459 = vrot.slane %v340, 1
      %v460 = vrot.slane %v341, 1
      %v461 = vsel %vm418, %v459, %v460
      %v462 = vrot.slane %v342, 1
      %v463 = vsel %vm418, %v460, %v462
      %v464 = vrot.slane %v343, 1
      %v465 = vrot.slane %v344, 1
      %v466 = vsel %vm418, %v464, %v465
      %v467 = vrot.slane %v345, 1
      %v468 = vsel %vm418, %v465, %v467
      %v469 = vrot.slane %v346, 1
      %v470 = vrot.slane %v347, 1
      %v471 = vsel %vm418, %v469, %v470
      %v472 = vrot.slane %v348, 1
      %v473 = vsel %vm418, %v470, %v472
      %v474 = vrot.slane %v349, 1
      %v475 = vrot.slane %v350, 1
      %v476 = vsel %vm418, %v474, %v475
      %v477 = vrot.slane %v351, 1
      %v478 = vsel %vm418, %v475, %v477
      %v479 = vrot.slane %v352, 1
      %v480 = vrot.slane %v353, 1
      %v481 = vsel %vm418, %v479, %v480
      %v482 = vrot.slane %v354, 1
      %v483 = vsel %vm418, %v480, %v482
      %v484 = vrot.slane %v355, 1
      %v485 = vrot.slane %v356, 1
      %v486 = vsel %vm418, %v484, %v485
      %v487 = vrot.slane %v357, 1
      %v488 = vsel %vm418, %v485, %v487
      %v489 = vrot.slane %v358, 1
      %v490 = vrot.slane %v359, 1
      %v491 = vsel %vm418, %v489, %v490
      %v492 = vrot.slane %v360, 1
      %v493 = vsel %vm418, %v490, %v492
      %v494 = vrot.slane %v361, 1
      %v495 = vrot.slane %v362, 1
      %v496 = vsel %vm418, %v494, %v495
      %v497 = vrot.slane %v363, 1
      %v498 = vsel %vm418, %v495, %v497
      %499 = vrot.lane.b32.xlu0 %v421, 8
      %v500 = vpop.permute.xlu0 %499
      %501 = vrot.lane.b32.xlu0 %v423, 8
      %v502 = vpop.permute.xlu0 %501
      %503 = vrot.lane.b32.xlu0 %v426, 8
      %v504 = vpop.permute.xlu0 %503
      %505 = vrot.lane.b32.xlu0 %v428, 8
      %v506 = vpop.permute.xlu0 %505
      %507 = vrot.lane.b32.xlu0 %v431, 8
      %v508 = vpop.permute.xlu0 %507
      %509 = vrot.lane.b32.xlu0 %v433, 8
      %v510 = vpop.permute.xlu0 %509
      %511 = vrot.lane.b32.xlu0 %v436, 8
      %v512 = vpop.permute.xlu0 %511
      %513 = vrot.lane.b32.xlu0 %v438, 8
      %v514 = vpop.permute.xlu0 %513
      %515 = vrot.lane.b32.xlu0 %v441, 8
      %v516 = vpop.permute.xlu0 %515
      %517 = vrot.lane.b32.xlu0 %v443, 8
      %v518 = vpop.permute.xlu0 %517
      %519 = vrot.lane.b32.xlu0 %v446, 8
      %v520 = vpop.permute.xlu0 %519
      %521 = vrot.lane.b32.xlu0 %v448, 8
      %v522 = vpop.permute.xlu0 %521
      %523 = vrot.lane.b32.xlu0 %v451, 8
      %v524 = vpop.permute.xlu0 %523
      %525 = vrot.lane.b32.xlu0 %v453, 8
      %v526 = vpop.permute.xlu0 %525
      %527 = vrot.lane.b32.xlu0 %v456, 8
      %v528 = vpop.permute.xlu0 %527
      %529 = vrot.lane.b32.xlu0 %v458, 8
      %v530 = vpop.permute.xlu0 %529
      %531 = vrot.lane.b32.xlu0 %v461, 8
      %v532 = vpop.permute.xlu0 %531
      %533 = vrot.lane.b32.xlu0 %v463, 8
      %v534 = vpop.permute.xlu0 %533
      %535 = vrot.lane.b32.xlu0 %v466, 8
      %v536 = vpop.permute.xlu0 %535
      %537 = vrot.lane.b32.xlu0 %v468, 8
      %v538 = vpop.permute.xlu0 %537
      %539 = vrot.lane.b32.xlu0 %v471, 8
      %v540 = vpop.permute.xlu0 %539
      %541 = vrot.lane.b32.xlu0 %v473, 8
      %v542 = vpop.permute.xlu0 %541
      %543 = vrot.lane.b32.xlu0 %v476, 8
      %v544 = vpop.permute.xlu0 %543
      %545 = vrot.lane.b32.xlu0 %v478, 8
      %v546 = vpop.permute.xlu0 %545
      %547 = vrot.lane.b32.xlu0 %v481, 8
      %v548 = vpop.permute.xlu0 %547
      %549 = vrot.lane.b32.xlu0 %v483, 8
      %v550 = vpop.permute.xlu0 %549
      %551 = vrot.lane.b32.xlu0 %v486, 8
      %v552 = vpop.permute.xlu0 %551
      %553 = vrot.lane.b32.xlu0 %v488, 8
      %v554 = vpop.permute.xlu0 %553
      %555 = vrot.lane.b32.xlu0 %v491, 8
      %v556 = vpop.permute.xlu0 %555
      %557 = vrot.lane.b32.xlu0 %v493, 8
      %v558 = vpop.permute.xlu0 %557
      %559 = vrot.lane.b32.xlu0 %v496, 8
      %v560 = vpop.permute.xlu0 %559
      %561 = vrot.lane.b32.xlu0 %v498, 8
      %v562 = vpop.permute.xlu0 %561
      %vm595 = vcmask 1045504
      %v596 = vrot.slane %v316, 2
      %v597 = vrot.slane %v317, 2
      %v598 = vsel %vm595, %v596, %v597
      %v599 = vrot.slane %v318, 2
      %v600 = vsel %vm595, %v597, %v599
      %v601 = vrot.slane %v319, 2
      %v602 = vrot.slane %v320, 2
      %v603 = vsel %vm595, %v601, %v602
      %v604 = vrot.slane %v321, 2
      %v605 = vsel %vm595, %v602, %v604
      %v606 = vrot.slane %v322, 2
      %v607 = vrot.slane %v323, 2
      %v608 = vsel %vm595, %v606, %v607
      %v609 = vrot.slane %v324, 2
      %v610 = vsel %vm595, %v607, %v609
      %v611 = vrot.slane %v325, 2
      %v612 = vrot.slane %v326, 2
      %v613 = vsel %vm595, %v611, %v612
      %v614 = vrot.slane %v327, 2
      %v615 = vsel %vm595, %v612, %v614
      %v616 = vrot.slane %v328, 2
      %v617 = vrot.slane %v329, 2
      %v618 = vsel %vm595, %v616, %v617
      %v619 = vrot.slane %v330, 2
      %v620 = vsel %vm595, %v617, %v619
      %v621 = vrot.slane %v331, 2
      %v622 = vrot.slane %v332, 2
      %v623 = vsel %vm595, %v621, %v622
      %v624 = vrot.slane %v333, 2
      %v625 = vsel %vm595, %v622, %v624
      %v626 = vrot.slane %v334, 2
      %v627 = vrot.slane %v335, 2
      %v628 = vsel %vm595, %v626, %v627
      %v629 = vrot.slane %v336, 2
      %v630 = vsel %vm595, %v627, %v629
      %v631 = vrot.slane %v337, 2
      %v632 = vrot.slane %v338, 2
      %v633 = vsel %vm595, %v631, %v632
      %v634 = vrot.slane %v339, 2
      %v635 = vsel %vm595, %v632, %v634
      %v636 = vrot.slane %v340, 2
      %v637 = vrot.slane %v341, 2
      %v638 = vsel %vm595, %v636, %v637
      %v639 = vrot.slane %v342, 2
      %v640 = vsel %vm595, %v637, %v639
      %v641 = vrot.slane %v343, 2
      %v642 = vrot.slane %v344, 2
      %v643 = vsel %vm595, %v641, %v642
      %v644 = vrot.slane %v345, 2
      %v645 = vsel %vm595, %v642, %v644
      %v646 = vrot.slane %v346, 2
      %v647 = vrot.slane %v347, 2
      %v648 = vsel %vm595, %v646, %v647
      %v649 = vrot.slane %v348, 2
      %v650 = vsel %vm595, %v647, %v649
      %v651 = vrot.slane %v349, 2
      %v652 = vrot.slane %v350, 2
      %v653 = vsel %vm595, %v651, %v652
      %v654 = vrot.slane %v351, 2
      %v655 = vsel %vm595, %v652, %v654
      %v656 = vrot.slane %v352, 2
      %v657 = vrot.slane %v353, 2
      %v658 = vsel %vm595, %v656, %v657
      %v659 = vrot.slane %v354, 2
      %v660 = vsel %vm595, %v657, %v659
      %v661 = vrot.slane %v355, 2
      %v662 = vrot.slane %v356, 2
      %v663 = vsel %vm595, %v661, %v662
      %v664 = vrot.slane %v357, 2
      %v665 = vsel %vm595, %v662, %v664
      %v666 = vrot.slane %v358, 2
      %v667 = vrot.slane %v359, 2
      %v668 = vsel %vm595, %v666, %v667
      %v669 = vrot.slane %v360, 2
      %v670 = vsel %vm595, %v667, %v669
      %v671 = vrot.slane %v361, 2
      %v672 = vrot.slane %v362, 2
      %v673 = vsel %vm595, %v671, %v672
      %v674 = vrot.slane %v363, 2
      %v675 = vsel %vm595, %v672, %v674
      %676 = vrot.lane.b32.xlu0 %v598, 16
      %v677 = vpop.permute.xlu0 %676
      %678 = vrot.lane.b32.xlu0 %v600, 16
      %v679 = vpop.permute.xlu0 %678
      %680 = vrot.lane.b32.xlu0 %v603, 16
      %v681 = vpop.permute.xlu0 %680
      %682 = vrot.lane.b32.xlu0 %v605, 16
      %v683 = vpop.permute.xlu0 %682
      %684 = vrot.lane.b32.xlu0 %v608, 16
      %v685 = vpop.permute.xlu0 %684
      %686 = vrot.lane.b32.xlu0 %v610, 16
      %v687 = vpop.permute.xlu0 %686
      %688 = vrot.lane.b32.xlu0 %v613, 16
      %v689 = vpop.permute.xlu0 %688
      %690 = vrot.lane.b32.xlu0 %v615, 16
      %v691 = vpop.permute.xlu0 %690
      %692 = vrot.lane.b32.xlu0 %v618, 16
      %v693 = vpop.permute.xlu0 %692
      %694 = vrot.lane.b32.xlu0 %v620, 16
      %v695 = vpop.permute.xlu0 %694
      %696 = vrot.lane.b32.xlu0 %v623, 16
      %v697 = vpop.permute.xlu0 %696
      %698 = vrot.lane.b32.xlu0 %v625, 16
      %v699 = vpop.permute.xlu0 %698
      %700 = vrot.lane.b32.xlu0 %v628, 16
      %v701 = vpop.permute.xlu0 %700
      %702 = vrot.lane.b32.xlu0 %v630, 16
      %v703 = vpop.permute.xlu0 %702
      %704 = vrot.lane.b32.xlu0 %v633, 16
      %v705 = vpop.permute.xlu0 %704
      %706 = vrot.lane.b32.xlu0 %v635, 16
      %v707 = vpop.permute.xlu0 %706
      %708 = vrot.lane.b32.xlu0 %v638, 16
      %v709 = vpop.permute.xlu0 %708
      %710 = vrot.lane.b32.xlu0 %v640, 16
      %v711 = vpop.permute.xlu0 %710
      %712 = vrot.lane.b32.xlu0 %v643, 16
      %v713 = vpop.permute.xlu0 %712
      %714 = vrot.lane.b32.xlu0 %v645, 16
      %v715 = vpop.permute.xlu0 %714
      %716 = vrot.lane.b32.xlu0 %v648, 16
      %v717 = vpop.permute.xlu0 %716
      %718 = vrot.lane.b32.xlu0 %v650, 16
      %v719 = vpop.permute.xlu0 %718
      %720 = vrot.lane.b32.xlu0 %v653, 16
      %v721 = vpop.permute.xlu0 %720
      %722 = vrot.lane.b32.xlu0 %v655, 16
      %v723 = vpop.permute.xlu0 %722
      %724 = vrot.lane.b32.xlu0 %v658, 16
      %v725 = vpop.permute.xlu0 %724
      %726 = vrot.lane.b32.xlu0 %v660, 16
      %v727 = vpop.permute.xlu0 %726
      %728 = vrot.lane.b32.xlu0 %v663, 16
      %v729 = vpop.permute.xlu0 %728
      %730 = vrot.lane.b32.xlu0 %v665, 16
      %v731 = vpop.permute.xlu0 %730
      %732 = vrot.lane.b32.xlu0 %v668, 16
      %v733 = vpop.permute.xlu0 %732
      %734 = vrot.lane.b32.xlu0 %v670, 16
      %v735 = vpop.permute.xlu0 %734
      %736 = vrot.lane.b32.xlu0 %v673, 16
      %v737 = vpop.permute.xlu0 %736
      %738 = vrot.lane.b32.xlu0 %v675, 16
      %v739 = vpop.permute.xlu0 %738
      %774 = vrot.lane.b32.xlu0 %v319, 24
      %v775 = vpop.permute.xlu0 %774
      %776 = vrot.lane.b32.xlu0 %v320, 24
      %v777 = vpop.permute.xlu0 %776
      %778 = vrot.lane.b32.xlu0 %v322, 24
      %v779 = vpop.permute.xlu0 %778
      %780 = vrot.lane.b32.xlu0 %v323, 24
      %v781 = vpop.permute.xlu0 %780
      %782 = vrot.lane.b32.xlu0 %v325, 24
      %v783 = vpop.permute.xlu0 %782
      %784 = vrot.lane.b32.xlu0 %v326, 24
      %v785 = vpop.permute.xlu0 %784
      %786 = vrot.lane.b32.xlu0 %v328, 24
      %v787 = vpop.permute.xlu0 %786
      %788 = vrot.lane.b32.xlu0 %v329, 24
      %v789 = vpop.permute.xlu0 %788
      %790 = vrot.lane.b32.xlu0 %v331, 24
      %v791 = vpop.permute.xlu0 %790
      %792 = vrot.lane.b32.xlu0 %v332, 24
      %v793 = vpop.permute.xlu0 %792
      %794 = vrot.lane.b32.xlu0 %v334, 24
      %v795 = vpop.permute.xlu0 %794
      %796 = vrot.lane.b32.xlu0 %v335, 24
      %v797 = vpop.permute.xlu0 %796
      %798 = vrot.lane.b32.xlu0 %v337, 24
      %v799 = vpop.permute.xlu0 %798
      %800 = vrot.lane.b32.xlu0 %v338, 24
      %v801 = vpop.permute.xlu0 %800
      %802 = vrot.lane.b32.xlu0 %v340, 24
      %v803 = vpop.permute.xlu0 %802
      %804 = vrot.lane.b32.xlu0 %v341, 24
      %v805 = vpop.permute.xlu0 %804
      %806 = vrot.lane.b32.xlu0 %v343, 24
      %v807 = vpop.permute.xlu0 %806
      %808 = vrot.lane.b32.xlu0 %v344, 24
      %v809 = vpop.permute.xlu0 %808
      %810 = vrot.lane.b32.xlu0 %v346, 24
      %v811 = vpop.permute.xlu0 %810
      %812 = vrot.lane.b32.xlu0 %v347, 24
      %v813 = vpop.permute.xlu0 %812
      %814 = vrot.lane.b32.xlu0 %v349, 24
      %v815 = vpop.permute.xlu0 %814
      %816 = vrot.lane.b32.xlu0 %v350, 24
      %v817 = vpop.permute.xlu0 %816
      %818 = vrot.lane.b32.xlu0 %v352, 24
      %v819 = vpop.permute.xlu0 %818
      %820 = vrot.lane.b32.xlu0 %v353, 24
      %v821 = vpop.permute.xlu0 %820
      %822 = vrot.lane.b32.xlu0 %v355, 24
      %v823 = vpop.permute.xlu0 %822
      %824 = vrot.lane.b32.xlu0 %v356, 24
      %v825 = vpop.permute.xlu0 %824
      %826 = vrot.lane.b32.xlu0 %v358, 24
      %v827 = vpop.permute.xlu0 %826
      %828 = vrot.lane.b32.xlu0 %v359, 24
      %v829 = vpop.permute.xlu0 %828
      %830 = vrot.lane.b32.xlu0 %v361, 24
      %v831 = vpop.permute.xlu0 %830
      %832 = vrot.lane.b32.xlu0 %v362, 24
      %v833 = vpop.permute.xlu0 %832
      %834 = vrot.lane.b32.xlu0 %v364, 24
      %v835 = vpop.permute.xlu0 %834
      %836 = vrot.lane.b32.xlu0 %v365, 24
      %v837 = vpop.permute.xlu0 %836
      %v871 = vrot.slane %v364, 1
      %v872 = vrot.slane %v365, 1
      %v873 = vsel %vm418, %v871, %v872
      %v874 = vrot.slane %v366, 1
      %v875 = vsel %vm418, %v872, %v874
      %876 = vrot.lane.b32.xlu0 %v426, 32
      %v877 = vpop.permute.xlu0 %876
      %878 = vrot.lane.b32.xlu0 %v428, 32
      %v879 = vpop.permute.xlu0 %878
      %880 = vrot.lane.b32.xlu0 %v431, 32
      %v881 = vpop.permute.xlu0 %880
      %882 = vrot.lane.b32.xlu0 %v433, 32
      %v883 = vpop.permute.xlu0 %882
      %884 = vrot.lane.b32.xlu0 %v436, 32
      %v885 = vpop.permute.xlu0 %884
      %886 = vrot.lane.b32.xlu0 %v438, 32
      %v887 = vpop.permute.xlu0 %886
      %888 = vrot.lane.b32.xlu0 %v441, 32
      %v889 = vpop.permute.xlu0 %888
      %890 = vrot.lane.b32.xlu0 %v443, 32
      %v891 = vpop.permute.xlu0 %890
      %892 = vrot.lane.b32.xlu0 %v446, 32
      %v893 = vpop.permute.xlu0 %892
      %894 = vrot.lane.b32.xlu0 %v448, 32
      %v895 = vpop.permute.xlu0 %894
      %896 = vrot.lane.b32.xlu0 %v451, 32
      %v897 = vpop.permute.xlu0 %896
      %898 = vrot.lane.b32.xlu0 %v453, 32
      %v899 = vpop.permute.xlu0 %898
      %900 = vrot.lane.b32.xlu0 %v456, 32
      %v901 = vpop.permute.xlu0 %900
      %902 = vrot.lane.b32.xlu0 %v458, 32
      %v903 = vpop.permute.xlu0 %902
      %904 = vrot.lane.b32.xlu0 %v461, 32
      %v905 = vpop.permute.xlu0 %904
      %906 = vrot.lane.b32.xlu0 %v463, 32
      %v907 = vpop.permute.xlu0 %906
      %908 = vrot.lane.b32.xlu0 %v466, 32
      %v909 = vpop.permute.xlu0 %908
      %910 = vrot.lane.b32.xlu0 %v468, 32
      %v911 = vpop.permute.xlu0 %910
      %912 = vrot.lane.b32.xlu0 %v471, 32
      %v913 = vpop.permute.xlu0 %912
      %914 = vrot.lane.b32.xlu0 %v473, 32
      %v915 = vpop.permute.xlu0 %914
      %916 = vrot.lane.b32.xlu0 %v476, 32
      %v917 = vpop.permute.xlu0 %916
      %918 = vrot.lane.b32.xlu0 %v478, 32
      %v919 = vpop.permute.xlu0 %918
      %920 = vrot.lane.b32.xlu0 %v481, 32
      %v921 = vpop.permute.xlu0 %920
      %922 = vrot.lane.b32.xlu0 %v483, 32
      %v923 = vpop.permute.xlu0 %922
      %924 = vrot.lane.b32.xlu0 %v486, 32
      %v925 = vpop.permute.xlu0 %924
      %926 = vrot.lane.b32.xlu0 %v488, 32
      %v927 = vpop.permute.xlu0 %926
      %928 = vrot.lane.b32.xlu0 %v491, 32
      %v929 = vpop.permute.xlu0 %928
      %930 = vrot.lane.b32.xlu0 %v493, 32
      %v931 = vpop.permute.xlu0 %930
      %932 = vrot.lane.b32.xlu0 %v496, 32
      %v933 = vpop.permute.xlu0 %932
      %934 = vrot.lane.b32.xlu0 %v498, 32
      %v935 = vpop.permute.xlu0 %934
      %936 = vrot.lane.b32.xlu0 %v873, 32
      %v937 = vpop.permute.xlu0 %936
      %938 = vrot.lane.b32.xlu0 %v875, 32
      %v939 = vpop.permute.xlu0 %938
      %v972 = vrot.slane %v364, 2
      %v973 = vrot.slane %v365, 2
      %v974 = vsel %vm595, %v972, %v973
      %v975 = vrot.slane %v366, 2
      %v976 = vsel %vm595, %v973, %v975
      %977 = vrot.lane.b32.xlu0 %v603, 40
      %v978 = vpop.permute.xlu0 %977
      %979 = vrot.lane.b32.xlu0 %v605, 40
      %v980 = vpop.permute.xlu0 %979
      %981 = vrot.lane.b32.xlu0 %v608, 40
      %v982 = vpop.permute.xlu0 %981
      %983 = vrot.lane.b32.xlu0 %v610, 40
      %v984 = vpop.permute.xlu0 %983
      %985 = vrot.lane.b32.xlu0 %v613, 40
      %v986 = vpop.permute.xlu0 %985
      %987 = vrot.lane.b32.xlu0 %v615, 40
      %v988 = vpop.permute.xlu0 %987
      %989 = vrot.lane.b32.xlu0 %v618, 40
      %v990 = vpop.permute.xlu0 %989
      %991 = vrot.lane.b32.xlu0 %v620, 40
      %v992 = vpop.permute.xlu0 %991
      %993 = vrot.lane.b32.xlu0 %v623, 40
      %v994 = vpop.permute.xlu0 %993
      %995 = vrot.lane.b32.xlu0 %v625, 40
      %v996 = vpop.permute.xlu0 %995
      %997 = vrot.lane.b32.xlu0 %v628, 40
      %v998 = vpop.permute.xlu0 %997
      %999 = vrot.lane.b32.xlu0 %v630, 40
      %v1000 = vpop.permute.xlu0 %999
      %1001 = vrot.lane.b32.xlu0 %v633, 40
      %v1002 = vpop.permute.xlu0 %1001
      %1003 = vrot.lane.b32.xlu0 %v635, 40
      %v1004 = vpop.permute.xlu0 %1003
      %1005 = vrot.lane.b32.xlu0 %v638, 40
      %v1006 = vpop.permute.xlu0 %1005
      %1007 = vrot.lane.b32.xlu0 %v640, 40
      %v1008 = vpop.permute.xlu0 %1007
      %1009 = vrot.lane.b32.xlu0 %v643, 40
      %v1010 = vpop.permute.xlu0 %1009
      %1011 = vrot.lane.b32.xlu0 %v645, 40
      %v1012 = vpop.permute.xlu0 %1011
      %1013 = vrot.lane.b32.xlu0 %v648, 40
      %v1014 = vpop.permute.xlu0 %1013
      %1015 = vrot.lane.b32.xlu0 %v650, 40
      %v1016 = vpop.permute.xlu0 %1015
      %1017 = vrot.lane.b32.xlu0 %v653, 40
      %v1018 = vpop.permute.xlu0 %1017
      %1019 = vrot.lane.b32.xlu0 %v655, 40
      %v1020 = vpop.permute.xlu0 %1019
      %1021 = vrot.lane.b32.xlu0 %v658, 40
      %v1022 = vpop.permute.xlu0 %1021
      %1023 = vrot.lane.b32.xlu0 %v660, 40
      %v1024 = vpop.permute.xlu0 %1023
      %1025 = vrot.lane.b32.xlu0 %v663, 40
      %v1026 = vpop.permute.xlu0 %1025
      %1027 = vrot.lane.b32.xlu0 %v665, 40
      %v1028 = vpop.permute.xlu0 %1027
      %1029 = vrot.lane.b32.xlu0 %v668, 40
      %v1030 = vpop.permute.xlu0 %1029
      %1031 = vrot.lane.b32.xlu0 %v670, 40
      %v1032 = vpop.permute.xlu0 %1031
      %1033 = vrot.lane.b32.xlu0 %v673, 40
      %v1034 = vpop.permute.xlu0 %1033
      %1035 = vrot.lane.b32.xlu0 %v675, 40
      %v1036 = vpop.permute.xlu0 %1035
      %1037 = vrot.lane.b32.xlu0 %v974, 40
      %v1038 = vpop.permute.xlu0 %1037
      %1039 = vrot.lane.b32.xlu0 %v976, 40
      %v1040 = vpop.permute.xlu0 %1039
      %1075 = vrot.lane.b32.xlu0 %v322, 48
      %v1076 = vpop.permute.xlu0 %1075
      %1077 = vrot.lane.b32.xlu0 %v323, 48
      %v1078 = vpop.permute.xlu0 %1077
      %1079 = vrot.lane.b32.xlu0 %v325, 48
      %v1080 = vpop.permute.xlu0 %1079
      %1081 = vrot.lane.b32.xlu0 %v326, 48
      %v1082 = vpop.permute.xlu0 %1081
      %1083 = vrot.lane.b32.xlu0 %v328, 48
      %v1084 = vpop.permute.xlu0 %1083
      %1085 = vrot.lane.b32.xlu0 %v329, 48
      %v1086 = vpop.permute.xlu0 %1085
      %1087 = vrot.lane.b32.xlu0 %v331, 48
      %v1088 = vpop.permute.xlu0 %1087
      %1089 = vrot.lane.b32.xlu0 %v332, 48
      %v1090 = vpop.permute.xlu0 %1089
      %1091 = vrot.lane.b32.xlu0 %v334, 48
      %v1092 = vpop.permute.xlu0 %1091
      %1093 = vrot.lane.b32.xlu0 %v335, 48
      %v1094 = vpop.permute.xlu0 %1093
      %1095 = vrot.lane.b32.xlu0 %v337, 48
      %v1096 = vpop.permute.xlu0 %1095
      %1097 = vrot.lane.b32.xlu0 %v338, 48
      %v1098 = vpop.permute.xlu0 %1097
      %1099 = vrot.lane.b32.xlu0 %v340, 48
      %v1100 = vpop.permute.xlu0 %1099
      %1101 = vrot.lane.b32.xlu0 %v341, 48
      %v1102 = vpop.permute.xlu0 %1101
      %1103 = vrot.lane.b32.xlu0 %v343, 48
      %v1104 = vpop.permute.xlu0 %1103
      %1105 = vrot.lane.b32.xlu0 %v344, 48
      %v1106 = vpop.permute.xlu0 %1105
      %1107 = vrot.lane.b32.xlu0 %v346, 48
      %v1108 = vpop.permute.xlu0 %1107
      %1109 = vrot.lane.b32.xlu0 %v347, 48
      %v1110 = vpop.permute.xlu0 %1109
      %1111 = vrot.lane.b32.xlu0 %v349, 48
      %v1112 = vpop.permute.xlu0 %1111
      %1113 = vrot.lane.b32.xlu0 %v350, 48
      %v1114 = vpop.permute.xlu0 %1113
      %1115 = vrot.lane.b32.xlu0 %v352, 48
      %v1116 = vpop.permute.xlu0 %1115
      %1117 = vrot.lane.b32.xlu0 %v353, 48
      %v1118 = vpop.permute.xlu0 %1117
      %1119 = vrot.lane.b32.xlu0 %v355, 48
      %v1120 = vpop.permute.xlu0 %1119
      %1121 = vrot.lane.b32.xlu0 %v356, 48
      %v1122 = vpop.permute.xlu0 %1121
      %1123 = vrot.lane.b32.xlu0 %v358, 48
      %v1124 = vpop.permute.xlu0 %1123
      %1125 = vrot.lane.b32.xlu0 %v359, 48
      %v1126 = vpop.permute.xlu0 %1125
      %1127 = vrot.lane.b32.xlu0 %v361, 48
      %v1128 = vpop.permute.xlu0 %1127
      %1129 = vrot.lane.b32.xlu0 %v362, 48
      %v1130 = vpop.permute.xlu0 %1129
      %1131 = vrot.lane.b32.xlu0 %v364, 48
      %v1132 = vpop.permute.xlu0 %1131
      %1133 = vrot.lane.b32.xlu0 %v365, 48
      %v1134 = vpop.permute.xlu0 %1133
      %1135 = vrot.lane.b32.xlu0 %v367, 48
      %v1136 = vpop.permute.xlu0 %1135
      %1137 = vrot.lane.b32.xlu0 %v368, 48
      %v1138 = vpop.permute.xlu0 %1137
      %v1172 = vrot.slane %v367, 1
      %v1173 = vrot.slane %v368, 1
      %v1174 = vsel %vm418, %v1172, %v1173
      %v1175 = vrot.slane %v369, 1
      %v1176 = vsel %vm418, %v1173, %v1175
      %1177 = vrot.lane.b32.xlu0 %v431, 56
      %v1178 = vpop.permute.xlu0 %1177
      %1179 = vrot.lane.b32.xlu0 %v433, 56
      %v1180 = vpop.permute.xlu0 %1179
      %1181 = vrot.lane.b32.xlu0 %v436, 56
      %v1182 = vpop.permute.xlu0 %1181
      %1183 = vrot.lane.b32.xlu0 %v438, 56
      %v1184 = vpop.permute.xlu0 %1183
      %1185 = vrot.lane.b32.xlu0 %v441, 56
      %v1186 = vpop.permute.xlu0 %1185
      %1187 = vrot.lane.b32.xlu0 %v443, 56
      %v1188 = vpop.permute.xlu0 %1187
      %1189 = vrot.lane.b32.xlu0 %v446, 56
      %v1190 = vpop.permute.xlu0 %1189
      %1191 = vrot.lane.b32.xlu0 %v448, 56
      %v1192 = vpop.permute.xlu0 %1191
      %1193 = vrot.lane.b32.xlu0 %v451, 56
      %v1194 = vpop.permute.xlu0 %1193
      %1195 = vrot.lane.b32.xlu0 %v453, 56
      %v1196 = vpop.permute.xlu0 %1195
      %1197 = vrot.lane.b32.xlu0 %v456, 56
      %v1198 = vpop.permute.xlu0 %1197
      %1199 = vrot.lane.b32.xlu0 %v458, 56
      %v1200 = vpop.permute.xlu0 %1199
      %1201 = vrot.lane.b32.xlu0 %v461, 56
      %v1202 = vpop.permute.xlu0 %1201
      %1203 = vrot.lane.b32.xlu0 %v463, 56
      %v1204 = vpop.permute.xlu0 %1203
      %1205 = vrot.lane.b32.xlu0 %v466, 56
      %v1206 = vpop.permute.xlu0 %1205
      %1207 = vrot.lane.b32.xlu0 %v468, 56
      %v1208 = vpop.permute.xlu0 %1207
      %1209 = vrot.lane.b32.xlu0 %v471, 56
      %v1210 = vpop.permute.xlu0 %1209
      %1211 = vrot.lane.b32.xlu0 %v473, 56
      %v1212 = vpop.permute.xlu0 %1211
      %1213 = vrot.lane.b32.xlu0 %v476, 56
      %v1214 = vpop.permute.xlu0 %1213
      %1215 = vrot.lane.b32.xlu0 %v478, 56
      %v1216 = vpop.permute.xlu0 %1215
      %1217 = vrot.lane.b32.xlu0 %v481, 56
      %v1218 = vpop.permute.xlu0 %1217
      %1219 = vrot.lane.b32.xlu0 %v483, 56
      %v1220 = vpop.permute.xlu0 %1219
      %1221 = vrot.lane.b32.xlu0 %v486, 56
      %v1222 = vpop.permute.xlu0 %1221
      %1223 = vrot.lane.b32.xlu0 %v488, 56
      %v1224 = vpop.permute.xlu0 %1223
      %1225 = vrot.lane.b32.xlu0 %v491, 56
      %v1226 = vpop.permute.xlu0 %1225
      %1227 = vrot.lane.b32.xlu0 %v493, 56
      %v1228 = vpop.permute.xlu0 %1227
      %1229 = vrot.lane.b32.xlu0 %v496, 56
      %v1230 = vpop.permute.xlu0 %1229
      %1231 = vrot.lane.b32.xlu0 %v498, 56
      %v1232 = vpop.permute.xlu0 %1231
      %1233 = vrot.lane.b32.xlu0 %v873, 56
      %v1234 = vpop.permute.xlu0 %1233
      %1235 = vrot.lane.b32.xlu0 %v875, 56
      %v1236 = vpop.permute.xlu0 %1235
      %1237 = vrot.lane.b32.xlu0 %v1174, 56
      %v1238 = vpop.permute.xlu0 %1237
      %1239 = vrot.lane.b32.xlu0 %v1176, 56
      %v1240 = vpop.permute.xlu0 %1239
      %v1273 = vrot.slane %v367, 2
      %v1274 = vrot.slane %v368, 2
      %v1275 = vsel %vm595, %v1273, %v1274
      %v1276 = vrot.slane %v369, 2
      %v1277 = vsel %vm595, %v1274, %v1276
      %1278 = vrot.lane.b32.xlu0 %v608, 64
      %v1279 = vpop.permute.xlu0 %1278
      %1280 = vrot.lane.b32.xlu0 %v610, 64
      %v1281 = vpop.permute.xlu0 %1280
      %1282 = vrot.lane.b32.xlu0 %v613, 64
      %v1283 = vpop.permute.xlu0 %1282
      %1284 = vrot.lane.b32.xlu0 %v615, 64
      %v1285 = vpop.permute.xlu0 %1284
      %1286 = vrot.lane.b32.xlu0 %v618, 64
      %v1287 = vpop.permute.xlu0 %1286
      %1288 = vrot.lane.b32.xlu0 %v620, 64
      %v1289 = vpop.permute.xlu0 %1288
      %1290 = vrot.lane.b32.xlu0 %v623, 64
      %v1291 = vpop.permute.xlu0 %1290
      %1292 = vrot.lane.b32.xlu0 %v625, 64
      %v1293 = vpop.permute.xlu0 %1292
      %1294 = vrot.lane.b32.xlu0 %v628, 64
      %v1295 = vpop.permute.xlu0 %1294
      %1296 = vrot.lane.b32.xlu0 %v630, 64
      %v1297 = vpop.permute.xlu0 %1296
      %1298 = vrot.lane.b32.xlu0 %v633, 64
      %v1299 = vpop.permute.xlu0 %1298
      %1300 = vrot.lane.b32.xlu0 %v635, 64
      %v1301 = vpop.permute.xlu0 %1300
      %1302 = vrot.lane.b32.xlu0 %v638, 64
      %v1303 = vpop.permute.xlu0 %1302
      %1304 = vrot.lane.b32.xlu0 %v640, 64
      %v1305 = vpop.permute.xlu0 %1304
      %1306 = vrot.lane.b32.xlu0 %v643, 64
      %v1307 = vpop.permute.xlu0 %1306
      %1308 = vrot.lane.b32.xlu0 %v645, 64
      %v1309 = vpop.permute.xlu0 %1308
      %1310 = vrot.lane.b32.xlu0 %v648, 64
      %v1311 = vpop.permute.xlu0 %1310
      %1312 = vrot.lane.b32.xlu0 %v650, 64
      %v1313 = vpop.permute.xlu0 %1312
      %1314 = vrot.lane.b32.xlu0 %v653, 64
      %v1315 = vpop.permute.xlu0 %1314
      %1316 = vrot.lane.b32.xlu0 %v655, 64
      %v1317 = vpop.permute.xlu0 %1316
      %1318 = vrot.lane.b32.xlu0 %v658, 64
      %v1319 = vpop.permute.xlu0 %1318
      %1320 = vrot.lane.b32.xlu0 %v660, 64
      %v1321 = vpop.permute.xlu0 %1320
      %1322 = vrot.lane.b32.xlu0 %v663, 64
      %v1323 = vpop.permute.xlu0 %1322
      %1324 = vrot.lane.b32.xlu0 %v665, 64
      %v1325 = vpop.permute.xlu0 %1324
      %1326 = vrot.lane.b32.xlu0 %v668, 64
      %v1327 = vpop.permute.xlu0 %1326
      %1328 = vrot.lane.b32.xlu0 %v670, 64
      %v1329 = vpop.permute.xlu0 %1328
      %1330 = vrot.lane.b32.xlu0 %v673, 64
      %v1331 = vpop.permute.xlu0 %1330
      %1332 = vrot.lane.b32.xlu0 %v675, 64
      %v1333 = vpop.permute.xlu0 %1332
      %1334 = vrot.lane.b32.xlu0 %v974, 64
      %v1335 = vpop.permute.xlu0 %1334
      %1336 = vrot.lane.b32.xlu0 %v976, 64
      %v1337 = vpop.permute.xlu0 %1336
      %1338 = vrot.lane.b32.xlu0 %v1275, 64
      %v1339 = vpop.permute.xlu0 %1338
      %1340 = vrot.lane.b32.xlu0 %v1277, 64
      %v1341 = vpop.permute.xlu0 %1340
      %v1374 = vsel %vm241, %v316, %v500
      %v1375 = vsel %vm241, %v317, %v502
      %v1376 = vsel %vm241, %v319, %v504
      %v1377 = vsel %vm241, %v320, %v506
      %v1378 = vsel %vm241, %v322, %v508
      %v1379 = vsel %vm241, %v323, %v510
      %v1380 = vsel %vm241, %v325, %v512
      %v1381 = vsel %vm241, %v326, %v514
      %v1382 = vsel %vm241, %v328, %v516
      %v1383 = vsel %vm241, %v329, %v518
      %v1384 = vsel %vm241, %v331, %v520
      %v1385 = vsel %vm241, %v332, %v522
      %v1386 = vsel %vm241, %v334, %v524
      %v1387 = vsel %vm241, %v335, %v526
      %v1388 = vsel %vm241, %v337, %v528
      %v1389 = vsel %vm241, %v338, %v530
      %v1390 = vsel %vm241, %v340, %v532
      %v1391 = vsel %vm241, %v341, %v534
      %v1392 = vsel %vm241, %v343, %v536
      %v1393 = vsel %vm241, %v344, %v538
      %v1394 = vsel %vm241, %v346, %v540
      %v1395 = vsel %vm241, %v347, %v542
      %v1396 = vsel %vm241, %v349, %v544
      %v1397 = vsel %vm241, %v350, %v546
      %v1398 = vsel %vm241, %v352, %v548
      %v1399 = vsel %vm241, %v353, %v550
      %v1400 = vsel %vm241, %v355, %v552
      %v1401 = vsel %vm241, %v356, %v554
      %v1402 = vsel %vm241, %v358, %v556
      %v1403 = vsel %vm241, %v359, %v558
      %v1404 = vsel %vm241, %v361, %v560
      %v1405 = vsel %vm241, %v362, %v562
      %vm1406 = vcmask 130048
      %v1407 = vsel %vm1406, %v1374, %v677
      %v1408 = vsel %vm1406, %v1375, %v679
      %v1409 = vsel %vm1406, %v1376, %v681
      %v1410 = vsel %vm1406, %v1377, %v683
      %v1411 = vsel %vm1406, %v1378, %v685
      %v1412 = vsel %vm1406, %v1379, %v687
      %v1413 = vsel %vm1406, %v1380, %v689
      %v1414 = vsel %vm1406, %v1381, %v691
      %v1415 = vsel %vm1406, %v1382, %v693
      %v1416 = vsel %vm1406, %v1383, %v695
      %v1417 = vsel %vm1406, %v1384, %v697
      %v1418 = vsel %vm1406, %v1385, %v699
      %v1419 = vsel %vm1406, %v1386, %v701
      %v1420 = vsel %vm1406, %v1387, %v703
      %v1421 = vsel %vm1406, %v1388, %v705
      %v1422 = vsel %vm1406, %v1389, %v707
      %v1423 = vsel %vm1406, %v1390, %v709
      %v1424 = vsel %vm1406, %v1391, %v711
      %v1425 = vsel %vm1406, %v1392, %v713
      %v1426 = vsel %vm1406, %v1393, %v715
      %v1427 = vsel %vm1406, %v1394, %v717
      %v1428 = vsel %vm1406, %v1395, %v719
      %v1429 = vsel %vm1406, %v1396, %v721
      %v1430 = vsel %vm1406, %v1397, %v723
      %v1431 = vsel %vm1406, %v1398, %v725
      %v1432 = vsel %vm1406, %v1399, %v727
      %v1433 = vsel %vm1406, %v1400, %v729
      %v1434 = vsel %vm1406, %v1401, %v731
      %v1435 = vsel %vm1406, %v1402, %v733
      %v1436 = vsel %vm1406, %v1403, %v735
      %v1437 = vsel %vm1406, %v1404, %v737
      %v1438 = vsel %vm1406, %v1405, %v739
      %vm1439 = vcmask 195584
      %v1440 = vsel %vm1439, %v1407, %v775
      %v1441 = vsel %vm1439, %v1408, %v777
      %v1442 = vsel %vm1439, %v1409, %v779
      %v1443 = vsel %vm1439, %v1410, %v781
      %v1444 = vsel %vm1439, %v1411, %v783
      %v1445 = vsel %vm1439, %v1412, %v785
      %v1446 = vsel %vm1439, %v1413, %v787
      %v1447 = vsel %vm1439, %v1414, %v789
      %v1448 = vsel %vm1439, %v1415, %v791
      %v1449 = vsel %vm1439, %v1416, %v793
      %v1450 = vsel %vm1439, %v1417, %v795
      %v1451 = vsel %vm1439, %v1418, %v797
      %v1452 = vsel %vm1439, %v1419, %v799
      %v1453 = vsel %vm1439, %v1420, %v801
      %v1454 = vsel %vm1439, %v1421, %v803
      %v1455 = vsel %vm1439, %v1422, %v805
      %v1456 = vsel %vm1439, %v1423, %v807
      %v1457 = vsel %vm1439, %v1424, %v809
      %v1458 = vsel %vm1439, %v1425, %v811
      %v1459 = vsel %vm1439, %v1426, %v813
      %v1460 = vsel %vm1439, %v1427, %v815
      %v1461 = vsel %vm1439, %v1428, %v817
      %v1462 = vsel %vm1439, %v1429, %v819
      %v1463 = vsel %vm1439, %v1430, %v821
      %v1464 = vsel %vm1439, %v1431, %v823
      %v1465 = vsel %vm1439, %v1432, %v825
      %v1466 = vsel %vm1439, %v1433, %v827
      %v1467 = vsel %vm1439, %v1434, %v829
      %v1468 = vsel %vm1439, %v1435, %v831
      %v1469 = vsel %vm1439, %v1436, %v833
      %v1470 = vsel %vm1439, %v1437, %v835
      %v1471 = vsel %vm1439, %v1438, %v837
      %vm1472 = vcmask 261120
      %v1473 = vsel %vm1472, %v1440, %v877
      %v1474 = vsel %vm1472, %v1441, %v879
      %v1475 = vsel %vm1472, %v1442, %v881
      %v1476 = vsel %vm1472, %v1443, %v883
      %v1477 = vsel %vm1472, %v1444, %v885
      %v1478 = vsel %vm1472, %v1445, %v887
      %v1479 = vsel %vm1472, %v1446, %v889
      %v1480 = vsel %vm1472, %v1447, %v891
      %v1481 = vsel %vm1472, %v1448, %v893
      %v1482 = vsel %vm1472, %v1449, %v895
      %v1483 = vsel %vm1472, %v1450, %v897
      %v1484 = vsel %vm1472, %v1451, %v899
      %v1485 = vsel %vm1472, %v1452, %v901
      %v1486 = vsel %vm1472, %v1453, %v903
      %v1487 = vsel %vm1472, %v1454, %v905
      %v1488 = vsel %vm1472, %v1455, %v907
      %v1489 = vsel %vm1472, %v1456, %v909
      %v1490 = vsel %vm1472, %v1457, %v911
      %v1491 = vsel %vm1472, %v1458, %v913
      %v1492 = vsel %vm1472, %v1459, %v915
      %v1493 = vsel %vm1472, %v1460, %v917
      %v1494 = vsel %vm1472, %v1461, %v919
      %v1495 = vsel %vm1472, %v1462, %v921
      %v1496 = vsel %vm1472, %v1463, %v923
      %v1497 = vsel %vm1472, %v1464, %v925
      %v1498 = vsel %vm1472, %v1465, %v927
      %v1499 = vsel %vm1472, %v1466, %v929
      %v1500 = vsel %vm1472, %v1467, %v931
      %v1501 = vsel %vm1472, %v1468, %v933
      %v1502 = vsel %vm1472, %v1469, %v935
      %v1503 = vsel %vm1472, %v1470, %v937
      %v1504 = vsel %vm1472, %v1471, %v939
      %vm1505 = vcmask 326656
      %v1506 = vsel %vm1505, %v1473, %v978
      %v1507 = vsel %vm1505, %v1474, %v980
      %v1508 = vsel %vm1505, %v1475, %v982
      %v1509 = vsel %vm1505, %v1476, %v984
      %v1510 = vsel %vm1505, %v1477, %v986
      %v1511 = vsel %vm1505, %v1478, %v988
      %v1512 = vsel %vm1505, %v1479, %v990
      %v1513 = vsel %vm1505, %v1480, %v992
      %v1514 = vsel %vm1505, %v1481, %v994
      %v1515 = vsel %vm1505, %v1482, %v996
      %v1516 = vsel %vm1505, %v1483, %v998
      %v1517 = vsel %vm1505, %v1484, %v1000
      %v1518 = vsel %vm1505, %v1485, %v1002
      %v1519 = vsel %vm1505, %v1486, %v1004
      %v1520 = vsel %vm1505, %v1487, %v1006
      %v1521 = vsel %vm1505, %v1488, %v1008
      %v1522 = vsel %vm1505, %v1489, %v1010
      %v1523 = vsel %vm1505, %v1490, %v1012
      %v1524 = vsel %vm1505, %v1491, %v1014
      %v1525 = vsel %vm1505, %v1492, %v1016
      %v1526 = vsel %vm1505, %v1493, %v1018
      %v1527 = vsel %vm1505, %v1494, %v1020
      %v1528 = vsel %vm1505, %v1495, %v1022
      %v1529 = vsel %vm1505, %v1496, %v1024
      %v1530 = vsel %vm1505, %v1497, %v1026
      %v1531 = vsel %vm1505, %v1498, %v1028
      %v1532 = vsel %vm1505, %v1499, %v1030
      %v1533 = vsel %vm1505, %v1500, %v1032
      %v1534 = vsel %vm1505, %v1501, %v1034
      %v1535 = vsel %vm1505, %v1502, %v1036
      %v1536 = vsel %vm1505, %v1503, %v1038
      %v1537 = vsel %vm1505, %v1504, %v1040
      %vm1538 = vcmask 392192
      %v1539 = vsel %vm1538, %v1506, %v1076
      %v1540 = vsel %vm1538, %v1507, %v1078
      %v1541 = vsel %vm1538, %v1508, %v1080
      %v1542 = vsel %vm1538, %v1509, %v1082
      %v1543 = vsel %vm1538, %v1510, %v1084
      %v1544 = vsel %vm1538, %v1511, %v1086
      %v1545 = vsel %vm1538, %v1512, %v1088
      %v1546 = vsel %vm1538, %v1513, %v1090
      %v1547 = vsel %vm1538, %v1514, %v1092
      %v1548 = vsel %vm1538, %v1515, %v1094
      %v1549 = vsel %vm1538, %v1516, %v1096
      %v1550 = vsel %vm1538, %v1517, %v1098
      %v1551 = vsel %vm1538, %v1518, %v1100
      %v1552 = vsel %vm1538, %v1519, %v1102
      %v1553 = vsel %vm1538, %v1520, %v1104
      %v1554 = vsel %vm1538, %v1521, %v1106
      %v1555 = vsel %vm1538, %v1522, %v1108
      %v1556 = vsel %vm1538, %v1523, %v1110
      %v1557 = vsel %vm1538, %v1524, %v1112
      %v1558 = vsel %vm1538, %v1525, %v1114
      %v1559 = vsel %vm1538, %v1526, %v1116
      %v1560 = vsel %vm1538, %v1527, %v1118
      %v1561 = vsel %vm1538, %v1528, %v1120
      %v1562 = vsel %vm1538, %v1529, %v1122
      %v1563 = vsel %vm1538, %v1530, %v1124
      %v1564 = vsel %vm1538, %v1531, %v1126
      %v1565 = vsel %vm1538, %v1532, %v1128
      %v1566 = vsel %vm1538, %v1533, %v1130
      %v1567 = vsel %vm1538, %v1534, %v1132
      %v1568 = vsel %vm1538, %v1535, %v1134
      %v1569 = vsel %vm1538, %v1536, %v1136
      %v1570 = vsel %vm1538, %v1537, %v1138
      %vm1571 = vcmask 457728
      %v1572 = vsel %vm1571, %v1539, %v1178
      %v1573 = vsel %vm1571, %v1540, %v1180
      %v1574 = vsel %vm1571, %v1541, %v1182
      %v1575 = vsel %vm1571, %v1542, %v1184
      %v1576 = vsel %vm1571, %v1543, %v1186
      %v1577 = vsel %vm1571, %v1544, %v1188
      %v1578 = vsel %vm1571, %v1545, %v1190
      %v1579 = vsel %vm1571, %v1546, %v1192
      %v1580 = vsel %vm1571, %v1547, %v1194
      %v1581 = vsel %vm1571, %v1548, %v1196
      %v1582 = vsel %vm1571, %v1549, %v1198
      %v1583 = vsel %vm1571, %v1550, %v1200
      %v1584 = vsel %vm1571, %v1551, %v1202
      %v1585 = vsel %vm1571, %v1552, %v1204
      %v1586 = vsel %vm1571, %v1553, %v1206
      %v1587 = vsel %vm1571, %v1554, %v1208
      %v1588 = vsel %vm1571, %v1555, %v1210
      %v1589 = vsel %vm1571, %v1556, %v1212
      %v1590 = vsel %vm1571, %v1557, %v1214
      %v1591 = vsel %vm1571, %v1558, %v1216
      %v1592 = vsel %vm1571, %v1559, %v1218
      %v1593 = vsel %vm1571, %v1560, %v1220
      %v1594 = vsel %vm1571, %v1561, %v1222
      %v1595 = vsel %vm1571, %v1562, %v1224
      %v1596 = vsel %vm1571, %v1563, %v1226
      %v1597 = vsel %vm1571, %v1564, %v1228
      %v1598 = vsel %vm1571, %v1565, %v1230
      %v1599 = vsel %vm1571, %v1566, %v1232
      %v1600 = vsel %vm1571, %v1567, %v1234
      %v1601 = vsel %vm1571, %v1568, %v1236
      %v1602 = vsel %vm1571, %v1569, %v1238
      %v1603 = vsel %vm1571, %v1570, %v1240
      %vm1604 = vcmask 523264
      %v1605 = vsel %vm1604, %v1572, %v1279
      %v1606 = vsel %vm1604, %v1573, %v1281
      %v1607 = vsel %vm1604, %v1574, %v1283
      %v1608 = vsel %vm1604, %v1575, %v1285
      %v1609 = vsel %vm1604, %v1576, %v1287
      %v1610 = vsel %vm1604, %v1577, %v1289
      %v1611 = vsel %vm1604, %v1578, %v1291
      %v1612 = vsel %vm1604, %v1579, %v1293
      %v1613 = vsel %vm1604, %v1580, %v1295
      %v1614 = vsel %vm1604, %v1581, %v1297
      %v1615 = vsel %vm1604, %v1582, %v1299
      %v1616 = vsel %vm1604, %v1583, %v1301
      %v1617 = vsel %vm1604, %v1584, %v1303
      %v1618 = vsel %vm1604, %v1585, %v1305
      %v1619 = vsel %vm1604, %v1586, %v1307
      %v1620 = vsel %vm1604, %v1587, %v1309
      %v1621 = vsel %vm1604, %v1588, %v1311
      %v1622 = vsel %vm1604, %v1589, %v1313
      %v1623 = vsel %vm1604, %v1590, %v1315
      %v1624 = vsel %vm1604, %v1591, %v1317
      %v1625 = vsel %vm1604, %v1592, %v1319
      %v1626 = vsel %vm1604, %v1593, %v1321
      %v1627 = vsel %vm1604, %v1594, %v1323
      %v1628 = vsel %vm1604, %v1595, %v1325
      %v1629 = vsel %vm1604, %v1596, %v1327
      %v1630 = vsel %vm1604, %v1597, %v1329
      %v1631 = vsel %vm1604, %v1598, %v1331
      %v1632 = vsel %vm1604, %v1599, %v1333
      %v1633 = vsel %vm1604, %v1600, %v1335
      %v1634 = vsel %vm1604, %v1601, %v1337
      %v1635 = vsel %vm1604, %v1602, %v1339
      %v1636 = vsel %vm1604, %v1603, %v1341
      %v1637 = vld [vmem:[%s1] sm:$0xff]
      %v1638 = vld [vmem:[%s1 + $0x8] sm:$0xff]
      %v1639 = vld [vmem:[%s1 + $0x10] sm:$0xff]
      %v1640 = vld [vmem:[%s1 + $0x18] sm:$0xff]
      %v1641 = vld [vmem:[%s1 + $0x20] sm:$0xff]
      %v1642 = vld [vmem:[%s1 + $0x28] sm:$0xff]
      %v1643 = vld [vmem:[%s1 + $0x30] sm:$0xff]
      %v1644 = vld [vmem:[%s1 + $0x38] sm:$0xff]
      %v1645 = vld [vmem:[%s1 + $0x40] sm:$0xff]
      %v1646 = vld [vmem:[%s2] sm:$0x1]
      %v1648 = vlaneseq
      %v1649 = vshrl.u32 %v1648, 7
      %v1650 = vsub.s32 0, %v1649
      %v1651 = vrot.slane %v1646, %v1650
      %vm1653 = vcmask 588800
      %v1655 = vsel %vm1653, %v1605, 0
      %v1658 = vsel %vm1653, %v1606, 0
      %v1661 = vsel %vm1653, %v1607, 0
      %v1664 = vsel %vm1653, %v1608, 0
      %v1667 = vsel %vm1653, %v1609, 0
      %v1670 = vsel %vm1653, %v1610, 0
      %v1673 = vsel %vm1653, %v1611, 0
      %v1676 = vsel %vm1653, %v1612, 0
      %v1679 = vsel %vm1653, %v1613, 0
      %v1682 = vsel %vm1653, %v1614, 0
      %v1685 = vsel %vm1653, %v1615, 0
      %v1688 = vsel %vm1653, %v1616, 0
      %v1691 = vsel %vm1653, %v1617, 0
      %v1694 = vsel %vm1653, %v1618, 0
      %v1697 = vsel %vm1653, %v1619, 0
      %v1700 = vsel %vm1653, %v1620, 0
      %v1703 = vsel %vm1653, %v1621, 0
      %v1706 = vsel %vm1653, %v1622, 0
      %v1709 = vsel %vm1653, %v1623, 0
      %v1712 = vsel %vm1653, %v1624, 0
      %v1715 = vsel %vm1653, %v1625, 0
      %v1718 = vsel %vm1653, %v1626, 0
      %v1721 = vsel %vm1653, %v1627, 0
      %v1724 = vsel %vm1653, %v1628, 0
      %v1727 = vsel %vm1653, %v1629, 0
      %v1730 = vsel %vm1653, %v1630, 0
      %v1733 = vsel %vm1653, %v1631, 0
      %v1736 = vsel %vm1653, %v1632, 0
      %v1739 = vsel %vm1653, %v1633, 0
      %v1742 = vsel %vm1653, %v1634, 0
      %v1745 = vsel %vm1653, %v1635, 0
      %v1748 = vsel %vm1653, %v1636, 0
      %1750 = vmatprep.subr.mxu0 0.0
      %1751 = vmatpush1.msra.mxu0 %v1637
      %1752 = vmatprep.subr.mxu0 0.0
      %1753 = vmatpush1.msra.mxu0 %v1638
      %1754 = vmatprep.subr.mxu0 0.0
      %1755 = vmatpush1.msra.mxu0 %v1639
      %1756 = vmatprep.subr.mxu0 0.0
      %1757 = vmatpush1.msra.mxu0 %v1640
      %1758 = vmatprep.subr.mxu0 0.0
      %1759 = vmatpush1.msra.mxu0 %v1641
      %1760 = vmatprep.subr.mxu0 0.0
      %1761 = vmatpush1.msra.mxu0 %v1642
      %1762 = vmatprep.subr.mxu0 0.0
      %1763 = vmatpush1.msra.mxu0 %v1643
      %1764 = vmatprep.subr.mxu0 0.0
      %1765 = vmatpush1.msra.mxu0 %v1644
      %1766 = vmatprep.subr.mxu0 0.0
      %1767 = vmatpush1.msra.mxu0 %v1645
      %1768 = vmatprep.subr.mxu0 0.0
      %1769 = vmatpush1.msra.mxu0 0.0
      %1770 = vmatprep.subr.mxu0 0.0
      %1771 = vmatpush1.msra.mxu0 0.0
      %1772 = vmatprep.subr.mxu0 0.0
      %1773 = vmatpush1.msra.mxu0 0.0
      %1774 = vmatprep.subr.mxu0 0.0
      %1775 = vmatpush1.msra.mxu0 0.0
      %1776 = vmatprep.subr.mxu0 0.0
      %1777 = vmatpush1.msra.mxu0 0.0
      %1778 = vmatprep.subr.mxu0 0.0
      %1779 = vmatpush1.msra.mxu0 0.0
      %1780 = vmatprep.subr.mxu0 0.0
      %1781 = vmatpush1.msra.mxu0 0.0
      %1782 = vmatprep.subr.mxu0 0.0
      %1783 = vmatpush1.msra.mxu0 0.0
      %1784 = vmatprep.subr.mxu0 0.0
      %1785 = vmatpush1.msra.mxu0 0.0
      %1786 = vmatprep.subr.mxu0 0.0
      %1787 = vmatpush1.msra.mxu0 0.0
      %1788 = vmatprep.subr.mxu0 0.0
      %1789 = vmatpush1.msra.mxu0 0.0
      %1790 = vmatprep.subr.mxu0 0.0
      %1791 = vmatpush1.msra.mxu0 0.0
      %1792 = vmatprep.subr.mxu0 0.0
      %1793 = vmatpush1.msra.mxu0 0.0
      %1794 = vmatprep.subr.mxu0 0.0
      %1795 = vmatpush1.msra.mxu0 0.0
      %1796 = vmatprep.subr.mxu0 0.0
      %1797 = vmatpush1.msra.mxu0 0.0
      %1798 = vmatprep.subr.mxu0 0.0
      %1799 = vmatpush1.msra.mxu0 0.0
      %1800 = vmatprep.subr.mxu0 0.0
      %1801 = vmatpush1.msra.mxu0 0.0
      %1802 = vmatprep.subr.mxu0 0.0
      %1803 = vmatpush1.msra.mxu0 0.0
      %1804 = vmatprep.subr.mxu0 0.0
      %1805 = vmatpush1.msra.mxu0 0.0
      %1806 = vmatprep.subr.mxu0 0.0
      %1807 = vmatpush1.msra.mxu0 0.0
      %1808 = vmatprep.subr.mxu0 0.0
      %1809 = vmatpush1.msra.mxu0 0.0
      %1810 = vmatprep.subr.mxu0 0.0
      %1811 = vmatpush1.msra.mxu0 0.0
      %1812 = vmatprep.subr.mxu0 0.0
      %1813 = vmatpush1.msra.mxu0 0.0
      %1814 = vmatprep.mubr.f32.mxu0 0.0
      %1815 = vmatmul.mubr.f32.gmra.mrb[0].mxu0 %v1655
      %v1816 = vpop.f32.mrb[0].mxu0
      %v1817 = vadd.f32 %v1651, %v1816
      %v1818 = vpop.f32.mrb[0].mxu0
      %1819 = vmatprep.mubr.f32.mxu0 0.0
      %1820 = vmatmul.mubr.f32.gmra.mrb[0].mxu0 %v1658
      %v1821 = vpop.f32.mrb[0].mxu0
      %v1822 = vadd.f32 %v1651, %v1821
      %v1823 = vpop.f32.mrb[0].mxu0
      %1824 = vmatprep.mubr.f32.mxu0 0.0
      %1825 = vmatmul.mubr.f32.gmra.mrb[0].mxu0 %v1661
      %v1826 = vpop.f32.mrb[0].mxu0
      %v1827 = vadd.f32 %v1651, %v1826
      %v1828 = vpop.f32.mrb[0].mxu0
      %1829 = vmatprep.mubr.f32.mxu0 0.0
      %1830 = vmatmul.mubr.f32.gmra.mrb[0].mxu0 %v1664
      %v1831 = vpop.f32.mrb[0].mxu0
      %v1832 = vadd.f32 %v1651, %v1831
      %v1833 = vpop.f32.mrb[0].mxu0
      %1834 = vmatprep.mubr.f32.mxu0 0.0
      %1835 = vmatmul.mubr.f32.gmra.mrb[0].mxu0 %v1667
      %v1836 = vpop.f32.mrb[0].mxu0
      %v1837 = vadd.f32 %v1651, %v1836
      %v1838 = vpop.f32.mrb[0].mxu0
      %1839 = vmatprep.mubr.f32.mxu0 0.0
      %1840 = vmatmul.mubr.f32.gmra.mrb[0].mxu0 %v1670
      %v1841 = vpop.f32.mrb[0].mxu0
      %v1842 = vadd.f32 %v1651, %v1841
      %v1843 = vpop.f32.mrb[0].mxu0
      %1844 = vmatprep.mubr.f32.mxu0 0.0
      %1845 = vmatmul.mubr.f32.gmra.mrb[0].mxu0 %v1673
      %v1846 = vpop.f32.mrb[0].mxu0
      %v1847 = vadd.f32 %v1651, %v1846
      %v1848 = vpop.f32.mrb[0].mxu0
      %1849 = vmatprep.mubr.f32.mxu0 0.0
      %1850 = vmatmul.mubr.f32.gmra.mrb[0].mxu0 %v1676
      %v1851 = vpop.f32.mrb[0].mxu0
      %v1852 = vadd.f32 %v1651, %v1851
      %v1853 = vpop.f32.mrb[0].mxu0
      %1854 = vmatprep.mubr.f32.mxu0 0.0
      %1855 = vmatmul.mubr.f32.gmra.mrb[0].mxu0 %v1679
      %v1856 = vpop.f32.mrb[0].mxu0
      %v1857 = vadd.f32 %v1651, %v1856
      %v1858 = vpop.f32.mrb[0].mxu0
      %1859 = vmatprep.mubr.f32.mxu0 0.0
      %1860 = vmatmul.mubr.f32.gmra.mrb[0].mxu0 %v1682
      %v1861 = vpop.f32.mrb[0].mxu0
      %v1862 = vadd.f32 %v1651, %v1861
      %v1863 = vpop.f32.mrb[0].mxu0
      %1864 = vmatprep.mubr.f32.mxu0 0.0
      %1865 = vmatmul.mubr.f32.gmra.mrb[0].mxu0 %v1685
      %v1866 = vpop.f32.mrb[0].mxu0
      %v1867 = vadd.f32 %v1651, %v1866
      %v1868 = vpop.f32.mrb[0].mxu0
      %1869 = vmatprep.mubr.f32.mxu0 0.0
      %1870 = vmatmul.mubr.f32.gmra.mrb[0].mxu0 %v1688
      %v1871 = vpop.f32.mrb[0].mxu0
      %v1872 = vadd.f32 %v1651, %v1871
      %v1873 = vpop.f32.mrb[0].mxu0
      %1874 = vmatprep.mubr.f32.mxu0 0.0
      %1875 = vmatmul.mubr.f32.gmra.mrb[0].mxu0 %v1691
      %v1876 = vpop.f32.mrb[0].mxu0
      %v1877 = vadd.f32 %v1651, %v1876
      %v1878 = vpop.f32.mrb[0].mxu0
      %1879 = vmatprep.mubr.f32.mxu0 0.0
      %1880 = vmatmul.mubr.f32.gmra.mrb[0].mxu0 %v1694
      %v1881 = vpop.f32.mrb[0].mxu0
      %v1882 = vadd.f32 %v1651, %v1881
      %v1883 = vpop.f32.mrb[0].mxu0
      %1884 = vmatprep.mubr.f32.mxu0 0.0
      %1885 = vmatmul.mubr.f32.gmra.mrb[0].mxu0 %v1697
      %v1886 = vpop.f32.mrb[0].mxu0
      %v1887 = vadd.f32 %v1651, %v1886
      %v1888 = vpop.f32.mrb[0].mxu0
      %1889 = vmatprep.mubr.f32.mxu0 0.0
      %1890 = vmatmul.mubr.f32.gmra.mrb[0].mxu0 %v1700
      %v1891 = vpop.f32.mrb[0].mxu0
      %v1892 = vadd.f32 %v1651, %v1891
      %v1893 = vpop.f32.mrb[0].mxu0
      %1894 = vmatprep.mubr.f32.mxu0 0.0
      %1895 = vmatmul.mubr.f32.gmra.mrb[0].mxu0 %v1703
      %v1896 = vpop.f32.mrb[0].mxu0
      %v1897 = vadd.f32 %v1651, %v1896
      %v1898 = vpop.f32.mrb[0].mxu0
      %1899 = vmatprep.mubr.f32.mxu0 0.0
      %1900 = vmatmul.mubr.f32.gmra.mrb[0].mxu0 %v1706
      %v1901 = vpop.f32.mrb[0].mxu0
      %v1902 = vadd.f32 %v1651, %v1901
      %v1903 = vpop.f32.mrb[0].mxu0
      %1904 = vmatprep.mubr.f32.mxu0 0.0
      %1905 = vmatmul.mubr.f32.gmra.mrb[0].mxu0 %v1709
      %v1906 = vpop.f32.mrb[0].mxu0
      %v1907 = vadd.f32 %v1651, %v1906
      %v1908 = vpop.f32.mrb[0].mxu0
      %1909 = vmatprep.mubr.f32.mxu0 0.0
      %1910 = vmatmul.mubr.f32.gmra.mrb[0].mxu0 %v1712
      %v1911 = vpop.f32.mrb[0].mxu0
      %v1912 = vadd.f32 %v1651, %v1911
      %v1913 = vpop.f32.mrb[0].mxu0
      %1914 = vmatprep.mubr.f32.mxu0 0.0
      %1915 = vmatmul.mubr.f32.gmra.mrb[0].mxu0 %v1715
      %v1916 = vpop.f32.mrb[0].mxu0
      %v1917 = vadd.f32 %v1651, %v1916
      %v1918 = vpop.f32.mrb[0].mxu0
      %1919 = vmatprep.mubr.f32.mxu0 0.0
      %1920 = vmatmul.mubr.f32.gmra.mrb[0].mxu0 %v1718
      %v1921 = vpop.f32.mrb[0].mxu0
      %v1922 = vadd.f32 %v1651, %v1921
      %v1923 = vpop.f32.mrb[0].mxu0
      %1924 = vmatprep.mubr.f32.mxu0 0.0
      %1925 = vmatmul.mubr.f32.gmra.mrb[0].mxu0 %v1721
      %v1926 = vpop.f32.mrb[0].mxu0
      %v1927 = vadd.f32 %v1651, %v1926
      %v1928 = vpop.f32.mrb[0].mxu0
      %1929 = vmatprep.mubr.f32.mxu0 0.0
      %1930 = vmatmul.mubr.f32.gmra.mrb[0].mxu0 %v1724
      %v1931 = vpop.f32.mrb[0].mxu0
      %v1932 = vadd.f32 %v1651, %v1931
      %v1933 = vpop.f32.mrb[0].mxu0
      %1934 = vmatprep.mubr.f32.mxu0 0.0
      %1935 = vmatmul.mubr.f32.gmra.mrb[0].mxu0 %v1727
      %v1936 = vpop.f32.mrb[0].mxu0
      %v1937 = vadd.f32 %v1651, %v1936
      %v1938 = vpop.f32.mrb[0].mxu0
      %1939 = vmatprep.mubr.f32.mxu0 0.0
      %1940 = vmatmul.mubr.f32.gmra.mrb[0].mxu0 %v1730
      %v1941 = vpop.f32.mrb[0].mxu0
      %v1942 = vadd.f32 %v1651, %v1941
      %v1943 = vpop.f32.mrb[0].mxu0
      %1944 = vmatprep.mubr.f32.mxu0 0.0
      %1945 = vmatmul.mubr.f32.gmra.mrb[0].mxu0 %v1733
      %v1946 = vpop.f32.mrb[0].mxu0
      %v1947 = vadd.f32 %v1651, %v1946
      %v1948 = vpop.f32.mrb[0].mxu0
      %1949 = vmatprep.mubr.f32.mxu0 0.0
      %1950 = vmatmul.mubr.f32.gmra.mrb[0].mxu0 %v1736
      %v1951 = vpop.f32.mrb[0].mxu0
      %v1952 = vadd.f32 %v1651, %v1951
      %v1953 = vpop.f32.mrb[0].mxu0
      %1954 = vmatprep.mubr.f32.mxu0 0.0
      %1955 = vmatmul.mubr.f32.gmra.mrb[0].mxu0 %v1739
      %v1956 = vpop.f32.mrb[0].mxu0
      %v1957 = vadd.f32 %v1651, %v1956
      %v1958 = vpop.f32.mrb[0].mxu0
      %1959 = vmatprep.mubr.f32.mxu0 0.0
      %1960 = vmatmul.mubr.f32.gmra.mrb[0].mxu0 %v1742
      %v1961 = vpop.f32.mrb[0].mxu0
      %v1962 = vadd.f32 %v1651, %v1961
      %v1963 = vpop.f32.mrb[0].mxu0
      %1964 = vmatprep.mubr.f32.mxu0 0.0
      %1965 = vmatmul.mubr.f32.gmra.mrb[0].mxu0 %v1745
      %v1966 = vpop.f32.mrb[0].mxu0
      %v1967 = vadd.f32 %v1651, %v1966
      %v1968 = vpop.f32.mrb[0].mxu0
      %1969 = vmatprep.mubr.f32.mxu0 0.0
      %1970 = vmatmul.mubr.f32.gmra.mrb[0].mxu0 %v1748
      %v1971 = vpop.f32.mrb[0].mxu0
      %v1972 = vadd.f32 %v1651, %v1971
      %v1973 = vpop.f32.mrb[0].mxu0
      %1974 = vdwg.mxu0
      %1975 = vst.msk [vmem:[%s204] sm:$0xff] %vm241, %v1817
      %1976 = vst.msk [vmem:[%s204 + $0x8] sm:$0xff] %vm241, %v1822
      %1977 = vst.msk [vmem:[%s204 + $0x10] sm:$0xff] %vm241, %v1827
      %1978 = vst.msk [vmem:[%s204 + $0x18] sm:$0xff] %vm241, %v1832
      %1979 = vst.msk [vmem:[%s204 + $0x20] sm:$0xff] %vm241, %v1837
      %1980 = vst.msk [vmem:[%s204 + $0x28] sm:$0xff] %vm241, %v1842
      %1981 = vst.msk [vmem:[%s204 + $0x30] sm:$0xff] %vm241, %v1847
      %1982 = vst.msk [vmem:[%s204 + $0x38] sm:$0xff] %vm241, %v1852
      %1983 = vst.msk [vmem:[%s204 + $0x40] sm:$0xff] %vm241, %v1857
      %1984 = vst.msk [vmem:[%s204 + $0x48] sm:$0xff] %vm241, %v1862
      %1985 = vst.msk [vmem:[%s204 + $0x50] sm:$0xff] %vm241, %v1867
      %1986 = vst.msk [vmem:[%s204 + $0x58] sm:$0xff] %vm241, %v1872
      %1987 = vst.msk [vmem:[%s204 + $0x60] sm:$0xff] %vm241, %v1877
      %1988 = vst.msk [vmem:[%s204 + $0x68] sm:$0xff] %vm241, %v1882
      %1989 = vst.msk [vmem:[%s204 + $0x70] sm:$0xff] %vm241, %v1887
      %1990 = vst.msk [vmem:[%s204 + $0x78] sm:$0xff] %vm241, %v1892
      %1991 = vst.msk [vmem:[%s204 + $0x80] sm:$0xff] %vm241, %v1897
      %1992 = vst.msk [vmem:[%s204 + $0x88] sm:$0xff] %vm241, %v1902
      %1993 = vst.msk [vmem:[%s204 + $0x90] sm:$0xff] %vm241, %v1907
      %1994 = vst.msk [vmem:[%s204 + $0x98] sm:$0xff] %vm241, %v1912
      %1995 = vst.msk [vmem:[%s204 + $0xa0] sm:$0xff] %vm241, %v1917
      %1996 = vst.msk [vmem:[%s204 + $0xa8] sm:$0xff] %vm241, %v1922
      %1997 = vst.msk [vmem:[%s204 + $0xb0] sm:$0xff] %vm241, %v1927
      %1998 = vst.msk [vmem:[%s204 + $0xb8] sm:$0xff] %vm241, %v1932
      %1999 = vst.msk [vmem:[%s204 + $0xc0] sm:$0xff] %vm241, %v1937
      %2000 = vst.msk [vmem:[%s204 + $0xc8] sm:$0xff] %vm241, %v1942
      %2001 = vst.msk [vmem:[%s204 + $0xd0] sm:$0xff] %vm241, %v1947
      %2002 = vst.msk [vmem:[%s204 + $0xd8] sm:$0xff] %vm241, %v1952
      %2003 = vst.msk [vmem:[%s204 + $0xe0] sm:$0xff] %vm241, %v1957
      %2004 = vst.msk [vmem:[%s204 + $0xe8] sm:$0xff] %vm241, %v1962
      %2005 = vst.msk [vmem:[%s204 + $0xf0] sm:$0xff] %vm241, %v1967
      %2006 = vst.msk [vmem:[%s204 + $0xf8] sm:$0xff] %vm241, %v1972
      %v2007 = vsel %vm241, %v1817, 0.0
      %v2008 = vsel %vm241, %v1822, 0.0
      %v2009 = vadd.f32 %v2007, %v2008
      %v2010 = vsel %vm241, %v1827, 0.0
      %v2011 = vadd.f32 %v2009, %v2010
      %v2012 = vsel %vm241, %v1832, 0.0
      %v2013 = vadd.f32 %v2011, %v2012
      %v2014 = vsel %vm241, %v1837, 0.0
      %v2015 = vadd.f32 %v2013, %v2014
      %v2016 = vsel %vm241, %v1842, 0.0
      %v2017 = vadd.f32 %v2015, %v2016
      %v2018 = vsel %vm241, %v1847, 0.0
      %v2019 = vadd.f32 %v2017, %v2018
      %v2020 = vsel %vm241, %v1852, 0.0
      %v2021 = vadd.f32 %v2019, %v2020
      %v2022 = vsel %vm241, %v1857, 0.0
      %v2023 = vadd.f32 %v2021, %v2022
      %v2024 = vsel %vm241, %v1862, 0.0
      %v2025 = vadd.f32 %v2023, %v2024
      %v2026 = vsel %vm241, %v1867, 0.0
      %v2027 = vadd.f32 %v2025, %v2026
      %v2028 = vsel %vm241, %v1872, 0.0
      %v2029 = vadd.f32 %v2027, %v2028
      %v2030 = vsel %vm241, %v1877, 0.0
      %v2031 = vadd.f32 %v2029, %v2030
      %v2032 = vsel %vm241, %v1882, 0.0
      %v2033 = vadd.f32 %v2031, %v2032
      %v2034 = vsel %vm241, %v1887, 0.0
      %v2035 = vadd.f32 %v2033, %v2034
      %v2036 = vsel %vm241, %v1892, 0.0
      %v2037 = vadd.f32 %v2035, %v2036
      %v2038 = vsel %vm241, %v1897, 0.0
      %v2039 = vadd.f32 %v2037, %v2038
      %v2040 = vsel %vm241, %v1902, 0.0
      %v2041 = vadd.f32 %v2039, %v2040
      %v2042 = vsel %vm241, %v1907, 0.0
      %v2043 = vadd.f32 %v2041, %v2042
      %v2044 = vsel %vm241, %v1912, 0.0
      %v2045 = vadd.f32 %v2043, %v2044
      %v2046 = vsel %vm241, %v1917, 0.0
      %v2047 = vadd.f32 %v2045, %v2046
      %v2048 = vsel %vm241, %v1922, 0.0
      %v2049 = vadd.f32 %v2047, %v2048
      %v2050 = vsel %vm241, %v1927, 0.0
      %v2051 = vadd.f32 %v2049, %v2050
      %v2052 = vsel %vm241, %v1932, 0.0
      %v2053 = vadd.f32 %v2051, %v2052
      %v2054 = vsel %vm241, %v1937, 0.0
      %v2055 = vadd.f32 %v2053, %v2054
      %v2056 = vsel %vm241, %v1942, 0.0
      %v2057 = vadd.f32 %v2055, %v2056
      %v2058 = vsel %vm241, %v1947, 0.0
      %v2059 = vadd.f32 %v2057, %v2058
      %v2060 = vsel %vm241, %v1952, 0.0
      %v2061 = vadd.f32 %v2059, %v2060
      %v2062 = vsel %vm241, %v1957, 0.0
      %v2063 = vadd.f32 %v2061, %v2062
      %v2064 = vsel %vm241, %v1962, 0.0
      %v2065 = vadd.f32 %v2063, %v2064
      %v2066 = vsel %vm241, %v1967, 0.0
      %v2067 = vadd.f32 %v2065, %v2066
      %v2068 = vsel %vm241, %v1972, 0.0
      %v2069 = vadd.f32 %v2067, %v2068
      %v2070 = vrot.slane %v2069, 4
      %v2071 = vadd.f32 %v2069, %v2070
      %v2072 = vrot.slane %v2071, 2
      %v2073 = vadd.f32 %v2071, %v2072
      %v2074 = vrot.slane %v2073, 1
      %v2075 = vadd.f32 %v2073, %v2074
      %2076 = vst.msk [vmem:[%s208] sm:$0x1] %vm251, %v2075
      %v2077 = vmul.f32 %v1817, %v1817
      %v2078 = vmul.f32 %v1822, %v1822
      %v2079 = vmul.f32 %v1827, %v1827
      %v2080 = vmul.f32 %v1832, %v1832
      %v2081 = vmul.f32 %v1837, %v1837
      %v2082 = vmul.f32 %v1842, %v1842
      %v2083 = vmul.f32 %v1847, %v1847
      %v2084 = vmul.f32 %v1852, %v1852
      %v2085 = vmul.f32 %v1857, %v1857
      %v2086 = vmul.f32 %v1862, %v1862
      %v2087 = vmul.f32 %v1867, %v1867
      %v2088 = vmul.f32 %v1872, %v1872
      %v2089 = vmul.f32 %v1877, %v1877
      %v2090 = vmul.f32 %v1882, %v1882
      %v2091 = vmul.f32 %v1887, %v1887
      %v2092 = vmul.f32 %v1892, %v1892
      %v2093 = vmul.f32 %v1897, %v1897
      %v2094 = vmul.f32 %v1902, %v1902
      %v2095 = vmul.f32 %v1907, %v1907
      %v2096 = vmul.f32 %v1912, %v1912
      %v2097 = vmul.f32 %v1917, %v1917
      %v2098 = vmul.f32 %v1922, %v1922
      %v2099 = vmul.f32 %v1927, %v1927
      %v2100 = vmul.f32 %v1932, %v1932
      %v2101 = vmul.f32 %v1937, %v1937
      %v2102 = vmul.f32 %v1942, %v1942
      %v2103 = vmul.f32 %v1947, %v1947
      %v2104 = vmul.f32 %v1952, %v1952
      %v2105 = vmul.f32 %v1957, %v1957
      %v2106 = vmul.f32 %v1962, %v1962
      %v2107 = vmul.f32 %v1967, %v1967
      %v2108 = vmul.f32 %v1972, %v1972
      %v2109 = vsel %vm241, %v2077, 0.0
      %v2110 = vsel %vm241, %v2078, 0.0
      %v2111 = vadd.f32 %v2109, %v2110
      %v2112 = vsel %vm241, %v2079, 0.0
      %v2113 = vadd.f32 %v2111, %v2112
      %v2114 = vsel %vm241, %v2080, 0.0
      %v2115 = vadd.f32 %v2113, %v2114
      %v2116 = vsel %vm241, %v2081, 0.0
      %v2117 = vadd.f32 %v2115, %v2116
      %v2118 = vsel %vm241, %v2082, 0.0
      %v2119 = vadd.f32 %v2117, %v2118
      %v2120 = vsel %vm241, %v2083, 0.0
      %v2121 = vadd.f32 %v2119, %v2120
      %v2122 = vsel %vm241, %v2084, 0.0
      %v2123 = vadd.f32 %v2121, %v2122
      %v2124 = vsel %vm241, %v2085, 0.0
      %v2125 = vadd.f32 %v2123, %v2124
      %v2126 = vsel %vm241, %v2086, 0.0
      %v2127 = vadd.f32 %v2125, %v2126
      %v2128 = vsel %vm241, %v2087, 0.0
      %v2129 = vadd.f32 %v2127, %v2128
      %v2130 = vsel %vm241, %v2088, 0.0
      %v2131 = vadd.f32 %v2129, %v2130
      %v2132 = vsel %vm241, %v2089, 0.0
      %v2133 = vadd.f32 %v2131, %v2132
      %v2134 = vsel %vm241, %v2090, 0.0
      %v2135 = vadd.f32 %v2133, %v2134
      %v2136 = vsel %vm241, %v2091, 0.0
      %v2137 = vadd.f32 %v2135, %v2136
      %v2138 = vsel %vm241, %v2092, 0.0
      %v2139 = vadd.f32 %v2137, %v2138
      %v2140 = vsel %vm241, %v2093, 0.0
      %v2141 = vadd.f32 %v2139, %v2140
      %v2142 = vsel %vm241, %v2094, 0.0
      %v2143 = vadd.f32 %v2141, %v2142
      %v2144 = vsel %vm241, %v2095, 0.0
      %v2145 = vadd.f32 %v2143, %v2144
      %v2146 = vsel %vm241, %v2096, 0.0
      %v2147 = vadd.f32 %v2145, %v2146
      %v2148 = vsel %vm241, %v2097, 0.0
      %v2149 = vadd.f32 %v2147, %v2148
      %v2150 = vsel %vm241, %v2098, 0.0
      %v2151 = vadd.f32 %v2149, %v2150
      %v2152 = vsel %vm241, %v2099, 0.0
      %v2153 = vadd.f32 %v2151, %v2152
      %v2154 = vsel %vm241, %v2100, 0.0
      %v2155 = vadd.f32 %v2153, %v2154
      %v2156 = vsel %vm241, %v2101, 0.0
      %v2157 = vadd.f32 %v2155, %v2156
      %v2158 = vsel %vm241, %v2102, 0.0
      %v2159 = vadd.f32 %v2157, %v2158
      %v2160 = vsel %vm241, %v2103, 0.0
      %v2161 = vadd.f32 %v2159, %v2160
      %v2162 = vsel %vm241, %v2104, 0.0
      %v2163 = vadd.f32 %v2161, %v2162
      %v2164 = vsel %vm241, %v2105, 0.0
      %v2165 = vadd.f32 %v2163, %v2164
      %v2166 = vsel %vm241, %v2106, 0.0
      %v2167 = vadd.f32 %v2165, %v2166
      %v2168 = vsel %vm241, %v2107, 0.0
      %v2169 = vadd.f32 %v2167, %v2168
      %v2170 = vsel %vm241, %v2108, 0.0
      %v2171 = vadd.f32 %v2169, %v2170
      %v2172 = vrot.slane %v2171, 4
      %v2173 = vadd.f32 %v2171, %v2172
      %v2174 = vrot.slane %v2173, 2
      %v2175 = vadd.f32 %v2173, %v2174
      %v2176 = vrot.slane %v2175, 1
      %v2177 = vadd.f32 %v2175, %v2176
      %2178 = vst.msk [vmem:[%s208 + $0x1] sm:$0x1] %vm251, %v2177
      %p2179 = scmp.lt.s32.totalorder %s16, 1
      %s2180 = scalar_select %p2179, %s16, 1
      %s2181 = smul.addr %s2180, 32
      %s2182 = smul.addr %s2181, 8
      %s2183 = scalar_lea.vmem %s3, %s2182
      %p2184 = scmp.lt.s32.totalorder %s16, 1
      %s2185 = scalar_select %p2184, %s16, 1
      %s2186 = smul.addr %s2185, 2
      %s2187 = scalar_lea.vmem %s4, %s2186
      // Predicated region
      $region33: #{no_relu_basic_resnet_unit.3} parent=31 // pred_check
        %p2188 = pneg %p102
      $region34: #{no_relu_basic_resnet_unit.3} parent=31 // pred_check_branch
        %2190 = sbr.rel (%p2188) target = $region36
      $region35: #{no_relu_basic_resnet_unit.3} parent=31 // pred_region
        _
      $region36: #{no_relu_basic_resnet_unit.3} parent=31 // pred_fallthru
        _
      // Predicated region
      $region37: #{no_relu_basic_resnet_unit.3} parent=31 // pred_check
        %p2191 = pneg %p128
      $region38: #{no_relu_basic_resnet_unit.3} parent=31 // pred_check_branch
        %2193 = sbr.rel (%p2191) target = $region40
      $region39: #{no_relu_basic_resnet_unit.3} parent=31 // pred_region
        _
      $region40: #{no_relu_basic_resnet_unit.3} parent=31 // pred_fallthru
        _
    $region32: #{no_relu_basic_resnet_unit.3} parent=5 // pred_fallthru
      _
    %p2194 = scmp.le.s32.totalorder 2, %s11
    // Predicated region
    $region41: #{no_relu_basic_resnet_unit.3} parent=5 // pred_check
      %p2195 = pneg %p2194
    $region42: #{no_relu_basic_resnet_unit.3} parent=5 // pred_check_branch
      %2197 = sbr.rel (%p2195) target = $region44
    $region43: #{no_relu_basic_resnet_unit.3} parent=5 // pred_region
      %s2198 = ssub.s32 %s11, 2
      // Predicated region
      $region45: #{no_relu_basic_resnet_unit.3} parent=43 // pred_check
        %p2199 = pneg %p108
      $region46: #{no_relu_basic_resnet_unit.3} parent=43 // pred_check_branch
        %2201 = sbr.rel (%p2199) target = $region48
      $region47: #{no_relu_basic_resnet_unit.3} parent=43 // pred_region
        %p2202 = scmp.lt.s32.totalorder %s17, 1
        %s2203 = scalar_select %p2202, %s17, 1
        %s2204 = smul.addr %s2203, 32
        %s2205 = smul.addr %s2204, 8
        %s2206 = scalar_lea.vmem %s3, %s2205
      $region48: #{no_relu_basic_resnet_unit.3} parent=43 // pred_fallthru
        _
      // Predicated region
      $region49: #{no_relu_basic_resnet_unit.3} parent=43 // pred_check
        %p2207 = pneg %p134
      $region50: #{no_relu_basic_resnet_unit.3} parent=43 // pred_check_branch
        %2209 = sbr.rel (%p2207) target = $region52
      $region51: #{no_relu_basic_resnet_unit.3} parent=43 // pred_region
        %p2210 = scmp.lt.s32.totalorder %s17, 1
        %s2211 = scalar_select %p2210, %s17, 1
        %s2212 = smul.addr %s2211, 2
        %s2213 = scalar_lea.vmem %s4, %s2212
      $region52: #{no_relu_basic_resnet_unit.3} parent=43 // pred_fallthru
        _
    $region44: #{no_relu_basic_resnet_unit.3} parent=5 // pred_fallthru
      _
  $region6: #{no_relu_basic_resnet_unit.3} parent=0 // loop_footer
    %s15 = sadd.s32 1, %s11
  $region7: #{no_relu_basic_resnet_unit.3} parent=0 // loop_footer_branch
    %10 = sbr.rel target = $region3
  $region8: #{no_relu_basic_resnet_unit.3} parent=0 // loop_exit
    _

// kernel: no_relu_basic_resnet_unit.4
$region0: #{no_relu_basic_resnet_unit.4}
  #allocation0 [shape = 'u32[]', space=smem, size = 0x4, offset = 0x4, fixed_abs, tag = 'smem constant byte address 0x4 - core index']
  #allocation1 [shape = 'u32[144,128]{1,0:T(1,128)}', space=vmem, size = 0x12000, scoped, tag = 'internal scratch']
  #allocation2 [shape = 'f32[1,18,18,8]{3,2,1,0:T(8,128)}', space=vmem, size = 0x36000, scoped, tag = 'scratch operand']
  %s0 = inlined_call_operand.vmem [shape: f32[2,16,16,8], index: 0, kind: input, shape index: {}]
  %s1 = inlined_call_operand.vmem [shape: f32[1,8], index: 1, kind: input, shape index: {}]
  %s2 = inlined_call_operand.vmem [shape: f32[1,8], index: 2, kind: input, shape index: {}]
  %s3 = inlined_call_operand.vmem [shape: f32[72,8], index: 3, kind: input, shape index: {}]
  %s4 = inlined_call_operand.vmem [shape: f32[1,8], index: 4, kind: input, shape index: {}]
  %s5 = inlined_call_operand.vmem [shape: f32[2,16,16,8], index: 5, kind: output, shape index: {0}]
  %s6 = inlined_call_operand.vmem [shape: f32[2,2,8], index: 6, kind: output, shape index: {1}]
  %7 = xla_tuple %s5, %s6
  %s8 = sld [smem:[#allocation0]]
  $region61: #{no_relu_basic_resnet_unit.4} parent=0
    _
  %s10 = ssub.s32 1, %s8
  %s11 = scalar_select 0, %s10, %s8
  loop: start=0, step=1, limit=4
  $region2: #{no_relu_basic_resnet_unit.4} parent=0 // loop_pre_header
    _
  $region3: #{no_relu_basic_resnet_unit.4} parent=0 // loop_header
    %s13 = sphi 0, %s17
    %p14 = scmp.ge.s32.totalorder %s13, 4
    %s23 = sphi 0, %s25
    %s26 = sphi 0, %s23
    %s27 = sphi 0, %s26
    %s43 = sphi 0, %s27
    %s47 = sphi 0, %s47
    %s49 = sphi 0, %s47
    %s50 = sphi 0, %s49
    %s64 = sphi 0, %s50
    %s68 = sphi 0, %s68
    %s70 = sphi 0, %s68
    %s71 = sphi 0, %s70
    %s85 = sphi 0, %s71
    %s89 = sphi 0, %s89
    %s91 = sphi 0, %s89
    %s92 = sphi 0, %s91
    %s106 = sphi 0, %s92
    %s110 = sphi 0, %s110
    %s112 = sphi 0, %s110
    %s113 = sphi 0, %s112
    %s127 = sphi 0, %s113
    %s133 = sphi 0, %s135
    %s136 = sphi 0, %s133
    %s137 = sphi 0, %s136
    %s153 = sphi 0, %s137
    %s159 = sphi 0, %s161
    %s162 = sphi 0, %s159
    %s163 = sphi 0, %s162
    %s179 = sphi 0, %s163
  $region4: #{no_relu_basic_resnet_unit.4} parent=0 // loop_header_branch
    %16 = sbr.rel (%p14) target = $region8
  $region5: #{no_relu_basic_resnet_unit.4} parent=0 // loop_body
    %s18 = ssub.s32 %s13, 1
    %s19 = ssub.s32 %s13, 2
    %s20 = sadd.s32 %s13, 1
    %s21 = ssub.s32 %s13, %s20
    %p22 = scmp.eq.s32.totalorder %s21, 0
    %s24 = sadd.s32 %s23, 1
    %s25 = scalar_select %p22, %s23, %s24
    %p28 = pneg %p22
    %p29 = scmp.eq.s32.totalorder %s13, 1
    %p30 = por %p28, %p29
    %p31 = scmp.ne.s32.totalorder %s23, %s26
    %p32 = scmp.eq.s32.totalorder %s13, 0
    %p33 = por %p31, %p32
    %p34 = scmp.ne.s32.totalorder %s23, %s26
    %p35 = scmp.eq.s32.totalorder %s18, 1
    %p36 = por %p34, %p35
    %p37 = scmp.ne.s32.totalorder %s26, %s27
    %p38 = scmp.eq.s32.totalorder %s18, 0
    %p39 = por %p37, %p38
    %p40 = scmp.ne.s32.totalorder %s26, %s27
    %p41 = scmp.eq.s32.totalorder %s19, 1
    %p42 = por %p40, %p41
    %p44 = scmp.ne.s32.totalorder %s27, %s43
    %p45 = scmp.eq.s32.totalorder %s19, 0
    %p46 = por %p44, %p45
    %s48 = sadd.s32 %s47, 1
    %p51 = scmp.eq.s32.totalorder %s13, 1
    %p52 = scmp.ne.s32.totalorder %s47, %s49
    %p53 = scmp.eq.s32.totalorder %s13, 0
    %p54 = por %p52, %p53
    %p55 = scmp.ne.s32.totalorder %s47, %s49
    %p56 = scmp.eq.s32.totalorder %s18, 1
    %p57 = por %p55, %p56
    %p58 = scmp.ne.s32.totalorder %s49, %s50
    %p59 = scmp.eq.s32.totalorder %s18, 0
    %p60 = por %p58, %p59
    %p61 = scmp.ne.s32.totalorder %s49, %s50
    %p62 = scmp.eq.s32.totalorder %s19, 1
    %p63 = por %p61, %p62
    %p65 = scmp.ne.s32.totalorder %s50, %s64
    %p66 = scmp.eq.s32.totalorder %s19, 0
    %p67 = por %p65, %p66
    %s69 = sadd.s32 %s68, 1
    %p72 = scmp.eq.s32.totalorder %s13, 1
    %p73 = scmp.ne.s32.totalorder %s68, %s70
    %p74 = scmp.eq.s32.totalorder %s13, 0
    %p75 = por %p73, %p74
    %p76 = scmp.ne.s32.totalorder %s68, %s70
    %p77 = scmp.eq.s32.totalorder %s18, 1
    %p78 = por %p76, %p77
    %p79 = scmp.ne.s32.totalorder %s70, %s71
    %p80 = scmp.eq.s32.totalorder %s18, 0
    %p81 = por %p79, %p80
    %p82 = scmp.ne.s32.totalorder %s70, %s71
    %p83 = scmp.eq.s32.totalorder %s19, 1
    %p84 = por %p82, %p83
    %p86 = scmp.ne.s32.totalorder %s71, %s85
    %p87 = scmp.eq.s32.totalorder %s19, 0
    %p88 = por %p86, %p87
    %s90 = sadd.s32 %s89, 1
    %p93 = scmp.eq.s32.totalorder %s13, 1
    %p94 = scmp.ne.s32.totalorder %s89, %s91
    %p95 = scmp.eq.s32.totalorder %s13, 0
    %p96 = por %p94, %p95
    %p97 = scmp.ne.s32.totalorder %s89, %s91
    %p98 = scmp.eq.s32.totalorder %s18, 1
    %p99 = por %p97, %p98
    %p100 = scmp.ne.s32.totalorder %s91, %s92
    %p101 = scmp.eq.s32.totalorder %s18, 0
    %p102 = por %p100, %p101
    %p103 = scmp.ne.s32.totalorder %s91, %s92
    %p104 = scmp.eq.s32.totalorder %s19, 1
    %p105 = por %p103, %p104
    %p107 = scmp.ne.s32.totalorder %s92, %s106
    %p108 = scmp.eq.s32.totalorder %s19, 0
    %p109 = por %p107, %p108
    %s111 = sadd.s32 %s110, 1
    %p114 = scmp.eq.s32.totalorder %s13, 1
    %p115 = scmp.ne.s32.totalorder %s110, %s112
    %p116 = scmp.eq.s32.totalorder %s13, 0
    %p117 = por %p115, %p116
    %p118 = scmp.ne.s32.totalorder %s110, %s112
    %p119 = scmp.eq.s32.totalorder %s18, 1
    %p120 = por %p118, %p119
    %p121 = scmp.ne.s32.totalorder %s112, %s113
    %p122 = scmp.eq.s32.totalorder %s18, 0
    %p123 = por %p121, %p122
    %p124 = scmp.ne.s32.totalorder %s112, %s113
    %p125 = scmp.eq.s32.totalorder %s19, 1
    %p126 = por %p124, %p125
    %p128 = scmp.ne.s32.totalorder %s113, %s127
    %p129 = scmp.eq.s32.totalorder %s19, 0
    %p130 = por %p128, %p129
    %s131 = ssub.s32 %s13, %s20
    %p132 = scmp.eq.s32.totalorder %s131, 0
    %s134 = sadd.s32 %s133, 1
    %s135 = scalar_select %p132, %s133, %s134
    %p138 = pneg %p132
    %p139 = scmp.eq.s32.totalorder %s13, 1
    %p140 = por %p138, %p139
    %p141 = scmp.ne.s32.totalorder %s133, %s136
    %p142 = scmp.eq.s32.totalorder %s13, 0
    %p143 = por %p141, %p142
    %p144 = scmp.ne.s32.totalorder %s133, %s136
    %p145 = scmp.eq.s32.totalorder %s18, 1
    %p146 = por %p144, %p145
    %p147 = scmp.ne.s32.totalorder %s136, %s137
    %p148 = scmp.eq.s32.totalorder %s18, 0
    %p149 = por %p147, %p148
    %p150 = scmp.ne.s32.totalorder %s136, %s137
    %p151 = scmp.eq.s32.totalorder %s19, 1
    %p152 = por %p150, %p151
    %p154 = scmp.ne.s32.totalorder %s137, %s153
    %p155 = scmp.eq.s32.totalorder %s19, 0
    %p156 = por %p154, %p155
    %s157 = ssub.s32 %s13, %s20
    %p158 = scmp.eq.s32.totalorder %s157, 0
    %s160 = sadd.s32 %s159, 1
    %s161 = scalar_select %p158, %s159, %s160
    %p164 = pneg %p158
    %p165 = scmp.eq.s32.totalorder %s13, 1
    %p166 = por %p164, %p165
    %p167 = scmp.ne.s32.totalorder %s159, %s162
    %p168 = scmp.eq.s32.totalorder %s13, 0
    %p169 = por %p167, %p168
    %p170 = scmp.ne.s32.totalorder %s159, %s162
    %p171 = scmp.eq.s32.totalorder %s18, 1
    %p172 = por %p170, %p171
    %p173 = scmp.ne.s32.totalorder %s162, %s163
    %p174 = scmp.eq.s32.totalorder %s18, 0
    %p175 = por %p173, %p174
    %p176 = scmp.ne.s32.totalorder %s162, %s163
    %p177 = scmp.eq.s32.totalorder %s19, 1
    %p178 = por %p176, %p177
    %p180 = scmp.ne.s32.totalorder %s163, %s179
    %p181 = scmp.eq.s32.totalorder %s19, 0
    %p182 = por %p180, %p181
    %p183 = scmp.le.s32.totalorder 1, %s13
    %p184 = scmp.lt.s32.totalorder %s13, 3
    %p185 = pnand %p183, %p184
    %p186 = pneg %p185
    // Predicated region
    $region9: #{no_relu_basic_resnet_unit.4} parent=5 // pred_check
      _
    $region10: #{no_relu_basic_resnet_unit.4} parent=5 // pred_check_branch
      %188 = sbr.rel (%p185) target = $region12
    $region11: #{no_relu_basic_resnet_unit.4} parent=5 // pred_region
      %s189 = ssub.s32 %s13, 1
      // Predicated region
      $region13: #{no_relu_basic_resnet_unit.4} parent=11 // pred_check
        %p190 = pneg %p60
      $region14: #{no_relu_basic_resnet_unit.4} parent=11 // pred_check_branch
        %192 = sbr.rel (%p190) target = $region16
      $region15: #{no_relu_basic_resnet_unit.4} parent=11 // pred_region
        _
      $region16: #{no_relu_basic_resnet_unit.4} parent=11 // pred_fallthru
        _
      // Predicated region
      $region17: #{no_relu_basic_resnet_unit.4} parent=11 // pred_check
        %p193 = pneg %p81
      $region18: #{no_relu_basic_resnet_unit.4} parent=11 // pred_check_branch
        %195 = sbr.rel (%p193) target = $region20
      $region19: #{no_relu_basic_resnet_unit.4} parent=11 // pred_region
        _
      $region20: #{no_relu_basic_resnet_unit.4} parent=11 // pred_fallthru
        _
      // Predicated region
      $region21: #{no_relu_basic_resnet_unit.4} parent=11 // pred_check
        %p196 = pneg %p102
      $region22: #{no_relu_basic_resnet_unit.4} parent=11 // pred_check_branch
        %198 = sbr.rel (%p196) target = $region24
      $region23: #{no_relu_basic_resnet_unit.4} parent=11 // pred_region
        _
      $region24: #{no_relu_basic_resnet_unit.4} parent=11 // pred_fallthru
        _
      // Predicated region
      $region25: #{no_relu_basic_resnet_unit.4} parent=11 // pred_check
        %p199 = pneg %p123
      $region26: #{no_relu_basic_resnet_unit.4} parent=11 // pred_check_branch
        %201 = sbr.rel (%p199) target = $region28
      $region27: #{no_relu_basic_resnet_unit.4} parent=11 // pred_region
        _
      $region28: #{no_relu_basic_resnet_unit.4} parent=11 // pred_fallthru
        _
    $region12: #{no_relu_basic_resnet_unit.4} parent=5 // pred_fallthru
      _
    %p202 = scmp.lt.s32.totalorder %s13, 2
    // Predicated region
    $region29: #{no_relu_basic_resnet_unit.4} parent=5 // pred_check
      %p203 = pneg %p202
    $region30: #{no_relu_basic_resnet_unit.4} parent=5 // pred_check_branch
      %205 = sbr.rel (%p203) target = $region32
    $region31: #{no_relu_basic_resnet_unit.4} parent=5 // pred_region
      // Predicated region
      $region33: #{no_relu_basic_resnet_unit.4} parent=31 // pred_check
        %p206 = pneg %p33
      $region34: #{no_relu_basic_resnet_unit.4} parent=31 // pred_check_branch
        %208 = sbr.rel (%p206) target = $region36
      $region35: #{no_relu_basic_resnet_unit.4} parent=31 // pred_region
        %p209 = scmp.lt.s32.totalorder %s13, 1
        %s210 = scalar_select %p209, %s13, 1
        %s211 = smul.addr %s210, 32
        %s212 = smul.addr %s211, 8
        %s213 = scalar_lea.vmem %s0, %s212
      $region36: #{no_relu_basic_resnet_unit.4} parent=31 // pred_fallthru
        _
    $region32: #{no_relu_basic_resnet_unit.4} parent=5 // pred_fallthru
      _
    %p214 = scmp.le.s32.totalorder 1, %s13
    %p215 = scmp.lt.s32.totalorder %s13, 3
    %p216 = pnand %p214, %p215
    %p217 = pneg %p216
    // Predicated region
    $region37: #{no_relu_basic_resnet_unit.4} parent=5 // pred_check
      _
    $region38: #{no_relu_basic_resnet_unit.4} parent=5 // pred_check_branch
      %219 = sbr.rel (%p216) target = $region40
    $region39: #{no_relu_basic_resnet_unit.4} parent=5 // pred_region
      %s220 = ssub.s32 %s13, 1
      %p221 = scmp.lt.s32.totalorder %s18, 1
      %s222 = scalar_select %p221, %s18, 1
      %s223 = smul.addr %s222, 32
      %s224 = smul.addr %s223, 8
      %s225 = scalar_lea.vmem %s0, %s224
      %p226 = pneg %p39
      %p227 = pneg %p36
      %p228 = pneg %p60
      %p229 = pneg %p57
      %p230 = pneg %p81
      %p231 = pneg %p78
      %p232 = pneg %p102
      %p233 = pneg %p99
      %p234 = pneg %p123
      %p235 = pneg %p120
      %p236 = pneg %p149
      %p237 = pneg %p146
      %p238 = scmp.lt.s32.totalorder %s18, 1
      %s239 = scalar_select %p238, %s18, 1
      %s240 = smul.addr %s239, 32
      %s241 = smul.addr %s240, 8
      %s242 = scalar_lea.vmem %s5, %s241
      %p243 = pneg %p175
      %p244 = pneg %p172
      %p245 = scmp.lt.s32.totalorder %s18, 1
      %s246 = scalar_select %p245, %s18, 1
      %s247 = smul.addr %s246, 2
      %s248 = scalar_lea.vmem %s6, %s247
      %p249 = scmp.lt.s32.totalorder %s18, 1
      %s250 = scalar_select %p249, %s18, 1
      %s251 = smul.addr %s250, 32
      %s252 = smul.addr %s251, 8
      %s253 = scalar_lea.vmem %s0, %s252
      %p254 = scmp.lt.s32.totalorder %s18, 1
      %s255 = scalar_select %p254, %s18, 1
      %s256 = smul.addr %s255, 32
      %s257 = smul.addr %s256, 8
      %s258 = scalar_lea.vmem %s5, %s257
      %p259 = scmp.lt.s32.totalorder %s18, 1
      %s260 = scalar_select %p259, %s18, 1
      %s261 = smul.addr %s260, 2
      %s262 = scalar_lea.vmem %s6, %s261
      %v263 = vld [vmem:[%s253] sm:$0xff]
      %v264 = vld [vmem:[%s253 + $0x8] sm:$0xff]
      %v265 = vld [vmem:[%s253 + $0x10] sm:$0xff]
      %v266 = vld [vmem:[%s253 + $0x18] sm:$0xff]
      %v267 = vld [vmem:[%s253 + $0x20] sm:$0xff]
      %v268 = vld [vmem:[%s253 + $0x28] sm:$0xff]
      %v269 = vld [vmem:[%s253 + $0x30] sm:$0xff]
      %v270 = vld [vmem:[%s253 + $0x38] sm:$0xff]
      %v271 = vld [vmem:[%s253 + $0x40] sm:$0xff]
      %v272 = vld [vmem:[%s253 + $0x48] sm:$0xff]
      %v273 = vld [vmem:[%s253 + $0x50] sm:$0xff]
      %v274 = vld [vmem:[%s253 + $0x58] sm:$0xff]
      %v275 = vld [vmem:[%s253 + $0x60] sm:$0xff]
      %v276 = vld [vmem:[%s253 + $0x68] sm:$0xff]
      %v277 = vld [vmem:[%s253 + $0x70] sm:$0xff]
      %v278 = vld [vmem:[%s253 + $0x78] sm:$0xff]
      %v279 = vld [vmem:[%s253 + $0x80] sm:$0xff]
      %v280 = vld [vmem:[%s253 + $0x88] sm:$0xff]
      %v281 = vld [vmem:[%s253 + $0x90] sm:$0xff]
      %v282 = vld [vmem:[%s253 + $0x98] sm:$0xff]
      %v283 = vld [vmem:[%s253 + $0xa0] sm:$0xff]
      %v284 = vld [vmem:[%s253 + $0xa8] sm:$0xff]
      %v285 = vld [vmem:[%s253 + $0xb0] sm:$0xff]
      %v286 = vld [vmem:[%s253 + $0xb8] sm:$0xff]
      %v287 = vld [vmem:[%s253 + $0xc0] sm:$0xff]
      %v288 = vld [vmem:[%s253 + $0xc8] sm:$0xff]
      %v289 = vld [vmem:[%s253 + $0xd0] sm:$0xff]
      %v290 = vld [vmem:[%s253 + $0xd8] sm:$0xff]
      %v291 = vld [vmem:[%s253 + $0xe0] sm:$0xff]
      %v292 = vld [vmem:[%s253 + $0xe8] sm:$0xff]
      %v293 = vld [vmem:[%s253 + $0xf0] sm:$0xff]
      %v294 = vld [vmem:[%s253 + $0xf8] sm:$0xff]
      %v295 = vld [vmem:[%s1] sm:$0x1]
      %v297 = vlaneseq
      %v298 = vshrl.u32 %v297, 7
      %v299 = vsub.s32 0, %v298
      %v300 = vrot.slane %v295, %v299
      %v302 = vmul.f32 %v263, %v300
      %v303 = vmul.f32 %v264, %v300
      %v304 = vmul.f32 %v265, %v300
      %v305 = vmul.f32 %v266, %v300
      %v306 = vmul.f32 %v267, %v300
      %v307 = vmul.f32 %v268, %v300
      %v308 = vmul.f32 %v269, %v300
      %v309 = vmul.f32 %v270, %v300
      %v310 = vmul.f32 %v271, %v300
      %v311 = vmul.f32 %v272, %v300
      %v312 = vmul.f32 %v273, %v300
      %v313 = vmul.f32 %v274, %v300
      %v314 = vmul.f32 %v275, %v300
      %v315 = vmul.f32 %v276, %v300
      %v316 = vmul.f32 %v277, %v300
      %v317 = vmul.f32 %v278, %v300
      %v318 = vmul.f32 %v279, %v300
      %v319 = vmul.f32 %v280, %v300
      %v320 = vmul.f32 %v281, %v300
      %v321 = vmul.f32 %v282, %v300
      %v322 = vmul.f32 %v283, %v300
      %v323 = vmul.f32 %v284, %v300
      %v324 = vmul.f32 %v285, %v300
      %v325 = vmul.f32 %v286, %v300
      %v326 = vmul.f32 %v287, %v300
      %v327 = vmul.f32 %v288, %v300
      %v328 = vmul.f32 %v289, %v300
      %v329 = vmul.f32 %v290, %v300
      %v330 = vmul.f32 %v291, %v300
      %v331 = vmul.f32 %v292, %v300
      %v332 = vmul.f32 %v293, %v300
      %v333 = vmul.f32 %v294, %v300
      %v334 = vld [vmem:[%s2] sm:$0x1]
      %v336 = vlaneseq
      %v337 = vshrl.u32 %v336, 7
      %v338 = vsub.s32 0, %v337
      %v339 = vrot.slane %v334, %v338
      %v341 = vadd.f32 %v302, %v339
      %v342 = vadd.f32 %v303, %v339
      %v343 = vadd.f32 %v304, %v339
      %v344 = vadd.f32 %v305, %v339
      %v345 = vadd.f32 %v306, %v339
      %v346 = vadd.f32 %v307, %v339
      %v347 = vadd.f32 %v308, %v339
      %v348 = vadd.f32 %v309, %v339
      %v349 = vadd.f32 %v310, %v339
      %v350 = vadd.f32 %v311, %v339
      %v351 = vadd.f32 %v312, %v339
      %v352 = vadd.f32 %v313, %v339
      %v353 = vadd.f32 %v314, %v339
      %v354 = vadd.f32 %v315, %v339
      %v355 = vadd.f32 %v316, %v339
      %v356 = vadd.f32 %v317, %v339
      %v357 = vadd.f32 %v318, %v339
      %v358 = vadd.f32 %v319, %v339
      %v359 = vadd.f32 %v320, %v339
      %v360 = vadd.f32 %v321, %v339
      %v361 = vadd.f32 %v322, %v339
      %v362 = vadd.f32 %v323, %v339
      %v363 = vadd.f32 %v324, %v339
      %v364 = vadd.f32 %v325, %v339
      %v365 = vadd.f32 %v326, %v339
      %v366 = vadd.f32 %v327, %v339
      %v367 = vadd.f32 %v328, %v339
      %v368 = vadd.f32 %v329, %v339
      %v369 = vadd.f32 %v330, %v339
      %v370 = vadd.f32 %v331, %v339
      %v371 = vadd.f32 %v332, %v339
      %v372 = vadd.f32 %v333, %v339
      %v373 = vmax.f32 %v341, 0.0
      %v374 = vmax.f32 %v342, 0.0
      %v375 = vmax.f32 %v343, 0.0
      %v376 = vmax.f32 %v344, 0.0
      %v377 = vmax.f32 %v345, 0.0
      %v378 = vmax.f32 %v346, 0.0
      %v379 = vmax.f32 %v347, 0.0
      %v380 = vmax.f32 %v348, 0.0
      %v381 = vmax.f32 %v349, 0.0
      %v382 = vmax.f32 %v350, 0.0
      %v383 = vmax.f32 %v351, 0.0
      %v384 = vmax.f32 %v352, 0.0
      %v385 = vmax.f32 %v353, 0.0
      %v386 = vmax.f32 %v354, 0.0
      %v387 = vmax.f32 %v355, 0.0
      %v388 = vmax.f32 %v356, 0.0
      %v389 = vmax.f32 %v357, 0.0
      %v390 = vmax.f32 %v358, 0.0
      %v391 = vmax.f32 %v359, 0.0
      %v392 = vmax.f32 %v360, 0.0
      %v393 = vmax.f32 %v361, 0.0
      %v394 = vmax.f32 %v362, 0.0
      %v395 = vmax.f32 %v363, 0.0
      %v396 = vmax.f32 %v364, 0.0
      %v397 = vmax.f32 %v365, 0.0
      %v398 = vmax.f32 %v366, 0.0
      %v399 = vmax.f32 %v367, 0.0
      %v400 = vmax.f32 %v368, 0.0
      %v401 = vmax.f32 %v369, 0.0
      %v402 = vmax.f32 %v370, 0.0
      %v403 = vmax.f32 %v371, 0.0
      %v404 = vmax.f32 %v372, 0.0
      %vm405 = vcmask 64512
      %406 = vst.msk [vmem:[#allocation2] sm:$0xff] %vm405, 0.0
      %407 = vst.msk [vmem:[#allocation2 + $0x8] sm:$0xff] %vm405, 0.0
      %vm408 = vcmask 58368
      %409 = vst.msk [vmem:[#allocation2 + $0x10] sm:$0x3] %vm408, 0.0
      %s410 = scalar_lea.vmem [#allocation2], 408
      %411 = vst.msk [vmem:[%s410] sm:$0xff] %vm405, 0.0
      %412 = vst.msk [vmem:[%s410 + $0x8] sm:$0xff] %vm405, 0.0
      %413 = vst.msk [vmem:[%s410 + $0x10] sm:$0x3] %vm408, 0.0
      %s414 = scalar_lea.vmem [#allocation2], 24
      %vm415 = vcmask 57344
      %416 = vst.msk [vmem:[%s414] sm:$0x1] %vm415, 0.0
      %417 = vst.msk [vmem:[%s414 + $0x18] sm:$0x1] %vm415, 0.0
      %418 = vst.msk [vmem:[%s414 + $0x30] sm:$0x1] %vm415, 0.0
      %419 = vst.msk [vmem:[%s414 + $0x48] sm:$0x1] %vm415, 0.0
      %420 = vst.msk [vmem:[%s414 + $0x60] sm:$0x1] %vm415, 0.0
      %421 = vst.msk [vmem:[%s414 + $0x78] sm:$0x1] %vm415, 0.0
      %422 = vst.msk [vmem:[%s414 + $0x90] sm:$0x1] %vm415, 0.0
      %423 = vst.msk [vmem:[%s414 + $0xa8] sm:$0x1] %vm415, 0.0
      %424 = vst.msk [vmem:[%s414 + $0xc0] sm:$0x1] %vm415, 0.0
      %425 = vst.msk [vmem:[%s414 + $0xd8] sm:$0x1] %vm415, 0.0
      %426 = vst.msk [vmem:[%s414 + $0xf0] sm:$0x1] %vm415, 0.0
      %427 = vst.msk [vmem:[%s414 + $0x108] sm:$0x1] %vm415, 0.0
      %428 = vst.msk [vmem:[%s414 + $0x120] sm:$0x1] %vm415, 0.0
      %429 = vst.msk [vmem:[%s414 + $0x138] sm:$0x1] %vm415, 0.0
      %430 = vst.msk [vmem:[%s414 + $0x150] sm:$0x1] %vm415, 0.0
      %431 = vst.msk [vmem:[%s414 + $0x168] sm:$0x1] %vm415, 0.0
      %432 = vst.msk [vmem:[%s414 + $0x11] sm:$0x1] %vm415, 0.0
      %433 = vst.msk [vmem:[%s414 + $0x29] sm:$0x1] %vm415, 0.0
      %434 = vst.msk [vmem:[%s414 + $0x41] sm:$0x1] %vm415, 0.0
      %435 = vst.msk [vmem:[%s414 + $0x59] sm:$0x1] %vm415, 0.0
      %436 = vst.msk [vmem:[%s414 + $0x71] sm:$0x1] %vm415, 0.0
      %437 = vst.msk [vmem:[%s414 + $0x89] sm:$0x1] %vm415, 0.0
      %438 = vst.msk [vmem:[%s414 + $0xa1] sm:$0x1] %vm415, 0.0
      %439 = vst.msk [vmem:[%s414 + $0xb9] sm:$0x1] %vm415, 0.0
      %440 = vst.msk [vmem:[%s414 + $0xd1] sm:$0x1] %vm415, 0.0
      %441 = vst.msk [vmem:[%s414 + $0xe9] sm:$0x1] %vm415, 0.0
      %442 = vst.msk [vmem:[%s414 + $0x101] sm:$0x1] %vm415, 0.0
      %443 = vst.msk [vmem:[%s414 + $0x119] sm:$0x1] %vm415, 0.0
      %444 = vst.msk [vmem:[%s414 + $0x131] sm:$0x1] %vm415, 0.0
      %445 = vst.msk [vmem:[%s414 + $0x149] sm:$0x1] %vm415, 0.0
      %446 = vst.msk [vmem:[%s414 + $0x161] sm:$0x1] %vm415, 0.0
      %447 = vst.msk [vmem:[%s414 + $0x179] sm:$0x1] %vm415, 0.0
      %448 = vst.msk [vmem:[%s414 + $0x1] sm:$0xff] %vm405, %v373
      %449 = vst.msk [vmem:[%s414 + $0x9] sm:$0xff] %vm405, %v374
      %450 = vst.msk [vmem:[%s414 + $0x19] sm:$0xff] %vm405, %v375
      %451 = vst.msk [vmem:[%s414 + $0x21] sm:$0xff] %vm405, %v376
      %452 = vst.msk [vmem:[%s414 + $0x31] sm:$0xff] %vm405, %v377
      %453 = vst.msk [vmem:[%s414 + $0x39] sm:$0xff] %vm405, %v378
      %454 = vst.msk [vmem:[%s414 + $0x49] sm:$0xff] %vm405, %v379
      %455 = vst.msk [vmem:[%s414 + $0x51] sm:$0xff] %vm405, %v380
      %456 = vst.msk [vmem:[%s414 + $0x61] sm:$0xff] %vm405, %v381
      %457 = vst.msk [vmem:[%s414 + $0x69] sm:$0xff] %vm405, %v382
      %458 = vst.msk [vmem:[%s414 + $0x79] sm:$0xff] %vm405, %v383
      %459 = vst.msk [vmem:[%s414 + $0x81] sm:$0xff] %vm405, %v384
      %460 = vst.msk [vmem:[%s414 + $0x91] sm:$0xff] %vm405, %v385
      %461 = vst.msk [vmem:[%s414 + $0x99] sm:$0xff] %vm405, %v386
      %462 = vst.msk [vmem:[%s414 + $0xa9] sm:$0xff] %vm405, %v387
      %463 = vst.msk [vmem:[%s414 + $0xb1] sm:$0xff] %vm405, %v388
      %464 = vst.msk [vmem:[%s414 + $0xc1] sm:$0xff] %vm405, %v389
      %465 = vst.msk [vmem:[%s414 + $0xc9] sm:$0xff] %vm405, %v390
      %466 = vst.msk [vmem:[%s414 + $0xd9] sm:$0xff] %vm405, %v391
      %467 = vst.msk [vmem:[%s414 + $0xe1] sm:$0xff] %vm405, %v392
      %468 = vst.msk [vmem:[%s414 + $0xf1] sm:$0xff] %vm405, %v393
      %469 = vst.msk [vmem:[%s414 + $0xf9] sm:$0xff] %vm405, %v394
      %470 = vst.msk [vmem:[%s414 + $0x109] sm:$0xff] %vm405, %v395
      %471 = vst.msk [vmem:[%s414 + $0x111] sm:$0xff] %vm405, %v396
      %472 = vst.msk [vmem:[%s414 + $0x121] sm:$0xff] %vm405, %v397
      %473 = vst.msk [vmem:[%s414 + $0x129] sm:$0xff] %vm405, %v398
      %474 = vst.msk [vmem:[%s414 + $0x139] sm:$0xff] %vm405, %v399
      %475 = vst.msk [vmem:[%s414 + $0x141] sm:$0xff] %vm405, %v400
      %476 = vst.msk [vmem:[%s414 + $0x151] sm:$0xff] %vm405, %v401
      %477 = vst.msk [vmem:[%s414 + $0x159] sm:$0xff] %vm405, %v402
      %478 = vst.msk [vmem:[%s414 + $0x169] sm:$0xff] %vm405, %v403
      %479 = vst.msk [vmem:[%s414 + $0x171] sm:$0xff] %vm405, %v404
      %v480 = vld [vmem:[#allocation2] sm:$0xff]
      %v481 = vld [vmem:[#allocation2 + $0x8] sm:$0xff]
      %v482 = vld [vmem:[#allocation2 + $0x10] sm:$0x3]
      %v483 = vld [vmem:[#allocation2 + $0x18] sm:$0xff]
      %v484 = vld [vmem:[#allocation2 + $0x20] sm:$0xff]
      %v485 = vld [vmem:[#allocation2 + $0x28] sm:$0x3]
      %v486 = vld [vmem:[#allocation2 + $0x30] sm:$0xff]
      %v487 = vld [vmem:[#allocation2 + $0x38] sm:$0xff]
      %v488 = vld [vmem:[#allocation2 + $0x40] sm:$0x3]
      %v489 = vld [vmem:[#allocation2 + $0x48] sm:$0xff]
      %v490 = vld [vmem:[#allocation2 + $0x50] sm:$0xff]
      %v491 = vld [vmem:[#allocation2 + $0x58] sm:$0x3]
      %v492 = vld [vmem:[#allocation2 + $0x60] sm:$0xff]
      %v493 = vld [vmem:[#allocation2 + $0x68] sm:$0xff]
      %v494 = vld [vmem:[#allocation2 + $0x70] sm:$0x3]
      %v495 = vld [vmem:[#allocation2 + $0x78] sm:$0xff]
      %v496 = vld [vmem:[#allocation2 + $0x80] sm:$0xff]
      %v497 = vld [vmem:[#allocation2 + $0x88] sm:$0x3]
      %v498 = vld [vmem:[#allocation2 + $0x90] sm:$0xff]
      %v499 = vld [vmem:[#allocation2 + $0x98] sm:$0xff]
      %v500 = vld [vmem:[#allocation2 + $0xa0] sm:$0x3]
      %v501 = vld [vmem:[#allocation2 + $0xa8] sm:$0xff]
      %v502 = vld [vmem:[#allocation2 + $0xb0] sm:$0xff]
      %v503 = vld [vmem:[#allocation2 + $0xb8] sm:$0x3]
      %v504 = vld [vmem:[#allocation2 + $0xc0] sm:$0xff]
      %v505 = vld [vmem:[#allocation2 + $0xc8] sm:$0xff]
      %v506 = vld [vmem:[#allocation2 + $0xd0] sm:$0x3]
      %v507 = vld [vmem:[#allocation2 + $0xd8] sm:$0xff]
      %v508 = vld [vmem:[#allocation2 + $0xe0] sm:$0xff]
      %v509 = vld [vmem:[#allocation2 + $0xe8] sm:$0x3]
      %v510 = vld [vmem:[#allocation2 + $0xf0] sm:$0xff]
      %v511 = vld [vmem:[#allocation2 + $0xf8] sm:$0xff]
      %v512 = vld [vmem:[#allocation2 + $0x100] sm:$0x3]
      %v513 = vld [vmem:[#allocation2 + $0x108] sm:$0xff]
      %v514 = vld [vmem:[#allocation2 + $0x110] sm:$0xff]
      %v515 = vld [vmem:[#allocation2 + $0x118] sm:$0x3]
      %v516 = vld [vmem:[#allocation2 + $0x120] sm:$0xff]
      %v517 = vld [vmem:[#allocation2 + $0x128] sm:$0xff]
      %v518 = vld [vmem:[#allocation2 + $0x130] sm:$0x3]
      %v519 = vld [vmem:[#allocation2 + $0x138] sm:$0xff]
      %v520 = vld [vmem:[#allocation2 + $0x140] sm:$0xff]
      %v521 = vld [vmem:[#allocation2 + $0x148] sm:$0x3]
      %v522 = vld [vmem:[#allocation2 + $0x150] sm:$0xff]
      %v523 = vld [vmem:[#allocation2 + $0x158] sm:$0xff]
      %v524 = vld [vmem:[#allocation2 + $0x160] sm:$0x3]
      %v525 = vld [vmem:[#allocation2 + $0x168] sm:$0xff]
      %v526 = vld [vmem:[#allocation2 + $0x170] sm:$0xff]
      %v527 = vld [vmem:[#allocation2 + $0x178] sm:$0x3]
      %v528 = vld [vmem:[#allocation2 + $0x180] sm:$0xff]
      %v529 = vld [vmem:[#allocation2 + $0x188] sm:$0xff]
      %v530 = vld [vmem:[#allocation2 + $0x190] sm:$0x3]
      %v531 = vld [vmem:[#allocation2 + $0x198] sm:$0xff]
      %v532 = vld [vmem:[#allocation2 + $0x1a0] sm:$0xff]
      %v533 = vld [vmem:[#allocation2 + $0x1a8] sm:$0x3]
      %vm582 = vcmask 1046528
      %v583 = vrot.slane %v480, 1
      %v584 = vrot.slane %v481, 1
      %v585 = vsel %vm582, %v583, %v584
      %v586 = vrot.slane %v482, 1
      %v587 = vsel %vm582, %v584, %v586
      %v588 = vrot.slane %v483, 1
      %v589 = vrot.slane %v484, 1
      %v590 = vsel %vm582, %v588, %v589
      %v591 = vrot.slane %v485, 1
      %v592 = vsel %vm582, %v589, %v591
      %v593 = vrot.slane %v486, 1
      %v594 = vrot.slane %v487, 1
      %v595 = vsel %vm582, %v593, %v594
      %v596 = vrot.slane %v488, 1
      %v597 = vsel %vm582, %v594, %v596
      %v598 = vrot.slane %v489, 1
      %v599 = vrot.slane %v490, 1
      %v600 = vsel %vm582, %v598, %v599
      %v601 = vrot.slane %v491, 1
      %v602 = vsel %vm582, %v599, %v601
      %v603 = vrot.slane %v492, 1
      %v604 = vrot.slane %v493, 1
      %v605 = vsel %vm582, %v603, %v604
      %v606 = vrot.slane %v494, 1
      %v607 = vsel %vm582, %v604, %v606
      %v608 = vrot.slane %v495, 1
      %v609 = vrot.slane %v496, 1
      %v610 = vsel %vm582, %v608, %v609
      %v611 = vrot.slane %v497, 1
      %v612 = vsel %vm582, %v609, %v611
      %v613 = vrot.slane %v498, 1
      %v614 = vrot.slane %v499, 1
      %v615 = vsel %vm582, %v613, %v614
      %v616 = vrot.slane %v500, 1
      %v617 = vsel %vm582, %v614, %v616
      %v618 = vrot.slane %v501, 1
      %v619 = vrot.slane %v502, 1
      %v620 = vsel %vm582, %v618, %v619
      %v621 = vrot.slane %v503, 1
      %v622 = vsel %vm582, %v619, %v621
      %v623 = vrot.slane %v504, 1
      %v624 = vrot.slane %v505, 1
      %v625 = vsel %vm582, %v623, %v624
      %v626 = vrot.slane %v506, 1
      %v627 = vsel %vm582, %v624, %v626
      %v628 = vrot.slane %v507, 1
      %v629 = vrot.slane %v508, 1
      %v630 = vsel %vm582, %v628, %v629
      %v631 = vrot.slane %v509, 1
      %v632 = vsel %vm582, %v629, %v631
      %v633 = vrot.slane %v510, 1
      %v634 = vrot.slane %v511, 1
      %v635 = vsel %vm582, %v633, %v634
      %v636 = vrot.slane %v512, 1
      %v637 = vsel %vm582, %v634, %v636
      %v638 = vrot.slane %v513, 1
      %v639 = vrot.slane %v514, 1
      %v640 = vsel %vm582, %v638, %v639
      %v641 = vrot.slane %v515, 1
      %v642 = vsel %vm582, %v639, %v641
      %v643 = vrot.slane %v516, 1
      %v644 = vrot.slane %v517, 1
      %v645 = vsel %vm582, %v643, %v644
      %v646 = vrot.slane %v518, 1
      %v647 = vsel %vm582, %v644, %v646
      %v648 = vrot.slane %v519, 1
      %v649 = vrot.slane %v520, 1
      %v650 = vsel %vm582, %v648, %v649
      %v651 = vrot.slane %v521, 1
      %v652 = vsel %vm582, %v649, %v651
      %v653 = vrot.slane %v522, 1
      %v654 = vrot.slane %v523, 1
      %v655 = vsel %vm582, %v653, %v654
      %v656 = vrot.slane %v524, 1
      %v657 = vsel %vm582, %v654, %v656
      %v658 = vrot.slane %v525, 1
      %v659 = vrot.slane %v526, 1
      %v660 = vsel %vm582, %v658, %v659
      %v661 = vrot.slane %v527, 1
      %v662 = vsel %vm582, %v659, %v661
      %663 = vrot.lane.b32.xlu0 %v585, 8
      %v664 = vpop.permute.xlu0 %663
      %665 = vrot.lane.b32.xlu0 %v587, 8
      %v666 = vpop.permute.xlu0 %665
      %667 = vrot.lane.b32.xlu0 %v590, 8
      %v668 = vpop.permute.xlu0 %667
      %669 = vrot.lane.b32.xlu0 %v592, 8
      %v670 = vpop.permute.xlu0 %669
      %671 = vrot.lane.b32.xlu0 %v595, 8
      %v672 = vpop.permute.xlu0 %671
      %673 = vrot.lane.b32.xlu0 %v597, 8
      %v674 = vpop.permute.xlu0 %673
      %675 = vrot.lane.b32.xlu0 %v600, 8
      %v676 = vpop.permute.xlu0 %675
      %677 = vrot.lane.b32.xlu0 %v602, 8
      %v678 = vpop.permute.xlu0 %677
      %679 = vrot.lane.b32.xlu0 %v605, 8
      %v680 = vpop.permute.xlu0 %679
      %681 = vrot.lane.b32.xlu0 %v607, 8
      %v682 = vpop.permute.xlu0 %681
      %683 = vrot.lane.b32.xlu0 %v610, 8
      %v684 = vpop.permute.xlu0 %683
      %685 = vrot.lane.b32.xlu0 %v612, 8
      %v686 = vpop.permute.xlu0 %685
      %687 = vrot.lane.b32.xlu0 %v615, 8
      %v688 = vpop.permute.xlu0 %687
      %689 = vrot.lane.b32.xlu0 %v617, 8
      %v690 = vpop.permute.xlu0 %689
      %691 = vrot.lane.b32.xlu0 %v620, 8
      %v692 = vpop.permute.xlu0 %691
      %693 = vrot.lane.b32.xlu0 %v622, 8
      %v694 = vpop.permute.xlu0 %693
      %695 = vrot.lane.b32.xlu0 %v625, 8
      %v696 = vpop.permute.xlu0 %695
      %697 = vrot.lane.b32.xlu0 %v627, 8
      %v698 = vpop.permute.xlu0 %697
      %699 = vrot.lane.b32.xlu0 %v630, 8
      %v700 = vpop.permute.xlu0 %699
      %701 = vrot.lane.b32.xlu0 %v632, 8
      %v702 = vpop.permute.xlu0 %701
      %703 = vrot.lane.b32.xlu0 %v635, 8
      %v704 = vpop.permute.xlu0 %703
      %705 = vrot.lane.b32.xlu0 %v637, 8
      %v706 = vpop.permute.xlu0 %705
      %707 = vrot.lane.b32.xlu0 %v640, 8
      %v708 = vpop.permute.xlu0 %707
      %709 = vrot.lane.b32.xlu0 %v642, 8
      %v710 = vpop.permute.xlu0 %709
      %711 = vrot.lane.b32.xlu0 %v645, 8
      %v712 = vpop.permute.xlu0 %711
      %713 = vrot.lane.b32.xlu0 %v647, 8
      %v714 = vpop.permute.xlu0 %713
      %715 = vrot.lane.b32.xlu0 %v650, 8
      %v716 = vpop.permute.xlu0 %715
      %717 = vrot.lane.b32.xlu0 %v652, 8
      %v718 = vpop.permute.xlu0 %717
      %719 = vrot.lane.b32.xlu0 %v655, 8
      %v720 = vpop.permute.xlu0 %719
      %721 = vrot.lane.b32.xlu0 %v657, 8
      %v722 = vpop.permute.xlu0 %721
      %723 = vrot.lane.b32.xlu0 %v660, 8
      %v724 = vpop.permute.xlu0 %723
      %725 = vrot.lane.b32.xlu0 %v662, 8
      %v726 = vpop.permute.xlu0 %725
      %vm759 = vcmask 1045504
      %v760 = vrot.slane %v480, 2
      %v761 = vrot.slane %v481, 2
      %v762 = vsel %vm759, %v760, %v761
      %v763 = vrot.slane %v482, 2
      %v764 = vsel %vm759, %v761, %v763
      %v765 = vrot.slane %v483, 2
      %v766 = vrot.slane %v484, 2
      %v767 = vsel %vm759, %v765, %v766
      %v768 = vrot.slane %v485, 2
      %v769 = vsel %vm759, %v766, %v768
      %v770 = vrot.slane %v486, 2
      %v771 = vrot.slane %v487, 2
      %v772 = vsel %vm759, %v770, %v771
      %v773 = vrot.slane %v488, 2
      %v774 = vsel %vm759, %v771, %v773
      %v775 = vrot.slane %v489, 2
      %v776 = vrot.slane %v490, 2
      %v777 = vsel %vm759, %v775, %v776
      %v778 = vrot.slane %v491, 2
      %v779 = vsel %vm759, %v776, %v778
      %v780 = vrot.slane %v492, 2
      %v781 = vrot.slane %v493, 2
      %v782 = vsel %vm759, %v780, %v781
      %v783 = vrot.slane %v494, 2
      %v784 = vsel %vm759, %v781, %v783
      %v785 = vrot.slane %v495, 2
      %v786 = vrot.slane %v496, 2
      %v787 = vsel %vm759, %v785, %v786
      %v788 = vrot.slane %v497, 2
      %v789 = vsel %vm759, %v786, %v788
      %v790 = vrot.slane %v498, 2
      %v791 = vrot.slane %v499, 2
      %v792 = vsel %vm759, %v790, %v791
      %v793 = vrot.slane %v500, 2
      %v794 = vsel %vm759, %v791, %v793
      %v795 = vrot.slane %v501, 2
      %v796 = vrot.slane %v502, 2
      %v797 = vsel %vm759, %v795, %v796
      %v798 = vrot.slane %v503, 2
      %v799 = vsel %vm759, %v796, %v798
      %v800 = vrot.slane %v504, 2
      %v801 = vrot.slane %v505, 2
      %v802 = vsel %vm759, %v800, %v801
      %v803 = vrot.slane %v506, 2
      %v804 = vsel %vm759, %v801, %v803
      %v805 = vrot.slane %v507, 2
      %v806 = vrot.slane %v508, 2
      %v807 = vsel %vm759, %v805, %v806
      %v808 = vrot.slane %v509, 2
      %v809 = vsel %vm759, %v806, %v808
      %v810 = vrot.slane %v510, 2
      %v811 = vrot.slane %v511, 2
      %v812 = vsel %vm759, %v810, %v811
      %v813 = vrot.slane %v512, 2
      %v814 = vsel %vm759, %v811, %v813
      %v815 = vrot.slane %v513, 2
      %v816 = vrot.slane %v514, 2
      %v817 = vsel %vm759, %v815, %v816
      %v818 = vrot.slane %v515, 2
      %v819 = vsel %vm759, %v816, %v818
      %v820 = vrot.slane %v516, 2
      %v821 = vrot.slane %v517, 2
      %v822 = vsel %vm759, %v820, %v821
      %v823 = vrot.slane %v518, 2
      %v824 = vsel %vm759, %v821, %v823
      %v825 = vrot.slane %v519, 2
      %v826 = vrot.slane %v520, 2
      %v827 = vsel %vm759, %v825, %v826
      %v828 = vrot.slane %v521, 2
      %v829 = vsel %vm759, %v826, %v828
      %v830 = vrot.slane %v522, 2
      %v831 = vrot.slane %v523, 2
      %v832 = vsel %vm759, %v830, %v831
      %v833 = vrot.slane %v524, 2
      %v834 = vsel %vm759, %v831, %v833
      %v835 = vrot.slane %v525, 2
      %v836 = vrot.slane %v526, 2
      %v837 = vsel %vm759, %v835, %v836
      %v838 = vrot.slane %v527, 2
      %v839 = vsel %vm759, %v836, %v838
      %840 = vrot.lane.b32.xlu0 %v762, 16
      %v841 = vpop.permute.xlu0 %840
      %842 = vrot.lane.b32.xlu0 %v764, 16
      %v843 = vpop.permute.xlu0 %842
      %844 = vrot.lane.b32.xlu0 %v767, 16
      %v845 = vpop.permute.xlu0 %844
      %846 = vrot.lane.b32.xlu0 %v769, 16
      %v847 = vpop.permute.xlu0 %846
      %848 = vrot.lane.b32.xlu0 %v772, 16
      %v849 = vpop.permute.xlu0 %848
      %850 = vrot.lane.b32.xlu0 %v774, 16
      %v851 = vpop.permute.xlu0 %850
      %852 = vrot.lane.b32.xlu0 %v777, 16
      %v853 = vpop.permute.xlu0 %852
      %854 = vrot.lane.b32.xlu0 %v779, 16
      %v855 = vpop.permute.xlu0 %854
      %856 = vrot.lane.b32.xlu0 %v782, 16
      %v857 = vpop.permute.xlu0 %856
      %858 = vrot.lane.b32.xlu0 %v784, 16
      %v859 = vpop.permute.xlu0 %858
      %860 = vrot.lane.b32.xlu0 %v787, 16
      %v861 = vpop.permute.xlu0 %860
      %862 = vrot.lane.b32.xlu0 %v789, 16
      %v863 = vpop.permute.xlu0 %862
      %864 = vrot.lane.b32.xlu0 %v792, 16
      %v865 = vpop.permute.xlu0 %864
      %866 = vrot.lane.b32.xlu0 %v794, 16
      %v867 = vpop.permute.xlu0 %866
      %868 = vrot.lane.b32.xlu0 %v797, 16
      %v869 = vpop.permute.xlu0 %868
      %870 = vrot.lane.b32.xlu0 %v799, 16
      %v871 = vpop.permute.xlu0 %870
      %872 = vrot.lane.b32.xlu0 %v802, 16
      %v873 = vpop.permute.xlu0 %872
      %874 = vrot.lane.b32.xlu0 %v804, 16
      %v875 = vpop.permute.xlu0 %874
      %876 = vrot.lane.b32.xlu0 %v807, 16
      %v877 = vpop.permute.xlu0 %876
      %878 = vrot.lane.b32.xlu0 %v809, 16
      %v879 = vpop.permute.xlu0 %878
      %880 = vrot.lane.b32.xlu0 %v812, 16
      %v881 = vpop.permute.xlu0 %880
      %882 = vrot.lane.b32.xlu0 %v814, 16
      %v883 = vpop.permute.xlu0 %882
      %884 = vrot.lane.b32.xlu0 %v817, 16
      %v885 = vpop.permute.xlu0 %884
      %886 = vrot.lane.b32.xlu0 %v819, 16
      %v887 = vpop.permute.xlu0 %886
      %888 = vrot.lane.b32.xlu0 %v822, 16
      %v889 = vpop.permute.xlu0 %888
      %890 = vrot.lane.b32.xlu0 %v824, 16
      %v891 = vpop.permute.xlu0 %890
      %892 = vrot.lane.b32.xlu0 %v827, 16
      %v893 = vpop.permute.xlu0 %892
      %894 = vrot.lane.b32.xlu0 %v829, 16
      %v895 = vpop.permute.xlu0 %894
      %896 = vrot.lane.b32.xlu0 %v832, 16
      %v897 = vpop.permute.xlu0 %896
      %898 = vrot.lane.b32.xlu0 %v834, 16
      %v899 = vpop.permute.xlu0 %898
      %900 = vrot.lane.b32.xlu0 %v837, 16
      %v901 = vpop.permute.xlu0 %900
      %902 = vrot.lane.b32.xlu0 %v839, 16
      %v903 = vpop.permute.xlu0 %902
      %938 = vrot.lane.b32.xlu0 %v483, 24
      %v939 = vpop.permute.xlu0 %938
      %940 = vrot.lane.b32.xlu0 %v484, 24
      %v941 = vpop.permute.xlu0 %940
      %942 = vrot.lane.b32.xlu0 %v486, 24
      %v943 = vpop.permute.xlu0 %942
      %944 = vrot.lane.b32.xlu0 %v487, 24
      %v945 = vpop.permute.xlu0 %944
      %946 = vrot.lane.b32.xlu0 %v489, 24
      %v947 = vpop.permute.xlu0 %946
      %948 = vrot.lane.b32.xlu0 %v490, 24
      %v949 = vpop.permute.xlu0 %948
      %950 = vrot.lane.b32.xlu0 %v492, 24
      %v951 = vpop.permute.xlu0 %950
      %952 = vrot.lane.b32.xlu0 %v493, 24
      %v953 = vpop.permute.xlu0 %952
      %954 = vrot.lane.b32.xlu0 %v495, 24
      %v955 = vpop.permute.xlu0 %954
      %956 = vrot.lane.b32.xlu0 %v496, 24
      %v957 = vpop.permute.xlu0 %956
      %958 = vrot.lane.b32.xlu0 %v498, 24
      %v959 = vpop.permute.xlu0 %958
      %960 = vrot.lane.b32.xlu0 %v499, 24
      %v961 = vpop.permute.xlu0 %960
      %962 = vrot.lane.b32.xlu0 %v501, 24
      %v963 = vpop.permute.xlu0 %962
      %964 = vrot.lane.b32.xlu0 %v502, 24
      %v965 = vpop.permute.xlu0 %964
      %966 = vrot.lane.b32.xlu0 %v504, 24
      %v967 = vpop.permute.xlu0 %966
      %968 = vrot.lane.b32.xlu0 %v505, 24
      %v969 = vpop.permute.xlu0 %968
      %970 = vrot.lane.b32.xlu0 %v507, 24
      %v971 = vpop.permute.xlu0 %970
      %972 = vrot.lane.b32.xlu0 %v508, 24
      %v973 = vpop.permute.xlu0 %972
      %974 = vrot.lane.b32.xlu0 %v510, 24
      %v975 = vpop.permute.xlu0 %974
      %976 = vrot.lane.b32.xlu0 %v511, 24
      %v977 = vpop.permute.xlu0 %976
      %978 = vrot.lane.b32.xlu0 %v513, 24
      %v979 = vpop.permute.xlu0 %978
      %980 = vrot.lane.b32.xlu0 %v514, 24
      %v981 = vpop.permute.xlu0 %980
      %982 = vrot.lane.b32.xlu0 %v516, 24
      %v983 = vpop.permute.xlu0 %982
      %984 = vrot.lane.b32.xlu0 %v517, 24
      %v985 = vpop.permute.xlu0 %984
      %986 = vrot.lane.b32.xlu0 %v519, 24
      %v987 = vpop.permute.xlu0 %986
      %988 = vrot.lane.b32.xlu0 %v520, 24
      %v989 = vpop.permute.xlu0 %988
      %990 = vrot.lane.b32.xlu0 %v522, 24
      %v991 = vpop.permute.xlu0 %990
      %992 = vrot.lane.b32.xlu0 %v523, 24
      %v993 = vpop.permute.xlu0 %992
      %994 = vrot.lane.b32.xlu0 %v525, 24
      %v995 = vpop.permute.xlu0 %994
      %996 = vrot.lane.b32.xlu0 %v526, 24
      %v997 = vpop.permute.xlu0 %996
      %998 = vrot.lane.b32.xlu0 %v528, 24
      %v999 = vpop.permute.xlu0 %998
      %1000 = vrot.lane.b32.xlu0 %v529, 24
      %v1001 = vpop.permute.xlu0 %1000
      %v1035 = vrot.slane %v528, 1
      %v1036 = vrot.slane %v529, 1
      %v1037 = vsel %vm582, %v1035, %v1036
      %v1038 = vrot.slane %v530, 1
      %v1039 = vsel %vm582, %v1036, %v1038
      %1040 = vrot.lane.b32.xlu0 %v590, 32
      %v1041 = vpop.permute.xlu0 %1040
      %1042 = vrot.lane.b32.xlu0 %v592, 32
      %v1043 = vpop.permute.xlu0 %1042
      %1044 = vrot.lane.b32.xlu0 %v595, 32
      %v1045 = vpop.permute.xlu0 %1044
      %1046 = vrot.lane.b32.xlu0 %v597, 32
      %v1047 = vpop.permute.xlu0 %1046
      %1048 = vrot.lane.b32.xlu0 %v600, 32
      %v1049 = vpop.permute.xlu0 %1048
      %1050 = vrot.lane.b32.xlu0 %v602, 32
      %v1051 = vpop.permute.xlu0 %1050
      %1052 = vrot.lane.b32.xlu0 %v605, 32
      %v1053 = vpop.permute.xlu0 %1052
      %1054 = vrot.lane.b32.xlu0 %v607, 32
      %v1055 = vpop.permute.xlu0 %1054
      %1056 = vrot.lane.b32.xlu0 %v610, 32
      %v1057 = vpop.permute.xlu0 %1056
      %1058 = vrot.lane.b32.xlu0 %v612, 32
      %v1059 = vpop.permute.xlu0 %1058
      %1060 = vrot.lane.b32.xlu0 %v615, 32
      %v1061 = vpop.permute.xlu0 %1060
      %1062 = vrot.lane.b32.xlu0 %v617, 32
      %v1063 = vpop.permute.xlu0 %1062
      %1064 = vrot.lane.b32.xlu0 %v620, 32
      %v1065 = vpop.permute.xlu0 %1064
      %1066 = vrot.lane.b32.xlu0 %v622, 32
      %v1067 = vpop.permute.xlu0 %1066
      %1068 = vrot.lane.b32.xlu0 %v625, 32
      %v1069 = vpop.permute.xlu0 %1068
      %1070 = vrot.lane.b32.xlu0 %v627, 32
      %v1071 = vpop.permute.xlu0 %1070
      %1072 = vrot.lane.b32.xlu0 %v630, 32
      %v1073 = vpop.permute.xlu0 %1072
      %1074 = vrot.lane.b32.xlu0 %v632, 32
      %v1075 = vpop.permute.xlu0 %1074
      %1076 = vrot.lane.b32.xlu0 %v635, 32
      %v1077 = vpop.permute.xlu0 %1076
      %1078 = vrot.lane.b32.xlu0 %v637, 32
      %v1079 = vpop.permute.xlu0 %1078
      %1080 = vrot.lane.b32.xlu0 %v640, 32
      %v1081 = vpop.permute.xlu0 %1080
      %1082 = vrot.lane.b32.xlu0 %v642, 32
      %v1083 = vpop.permute.xlu0 %1082
      %1084 = vrot.lane.b32.xlu0 %v645, 32
      %v1085 = vpop.permute.xlu0 %1084
      %1086 = vrot.lane.b32.xlu0 %v647, 32
      %v1087 = vpop.permute.xlu0 %1086
      %1088 = vrot.lane.b32.xlu0 %v650, 32
      %v1089 = vpop.permute.xlu0 %1088
      %1090 = vrot.lane.b32.xlu0 %v652, 32
      %v1091 = vpop.permute.xlu0 %1090
      %1092 = vrot.lane.b32.xlu0 %v655, 32
      %v1093 = vpop.permute.xlu0 %1092
      %1094 = vrot.lane.b32.xlu0 %v657, 32
      %v1095 = vpop.permute.xlu0 %1094
      %1096 = vrot.lane.b32.xlu0 %v660, 32
      %v1097 = vpop.permute.xlu0 %1096
      %1098 = vrot.lane.b32.xlu0 %v662, 32
      %v1099 = vpop.permute.xlu0 %1098
      %1100 = vrot.lane.b32.xlu0 %v1037, 32
      %v1101 = vpop.permute.xlu0 %1100
      %1102 = vrot.lane.b32.xlu0 %v1039, 32
      %v1103 = vpop.permute.xlu0 %1102
      %v1136 = vrot.slane %v528, 2
      %v1137 = vrot.slane %v529, 2
      %v1138 = vsel %vm759, %v1136, %v1137
      %v1139 = vrot.slane %v530, 2
      %v1140 = vsel %vm759, %v1137, %v1139
      %1141 = vrot.lane.b32.xlu0 %v767, 40
      %v1142 = vpop.permute.xlu0 %1141
      %1143 = vrot.lane.b32.xlu0 %v769, 40
      %v1144 = vpop.permute.xlu0 %1143
      %1145 = vrot.lane.b32.xlu0 %v772, 40
      %v1146 = vpop.permute.xlu0 %1145
      %1147 = vrot.lane.b32.xlu0 %v774, 40
      %v1148 = vpop.permute.xlu0 %1147
      %1149 = vrot.lane.b32.xlu0 %v777, 40
      %v1150 = vpop.permute.xlu0 %1149
      %1151 = vrot.lane.b32.xlu0 %v779, 40
      %v1152 = vpop.permute.xlu0 %1151
      %1153 = vrot.lane.b32.xlu0 %v782, 40
      %v1154 = vpop.permute.xlu0 %1153
      %1155 = vrot.lane.b32.xlu0 %v784, 40
      %v1156 = vpop.permute.xlu0 %1155
      %1157 = vrot.lane.b32.xlu0 %v787, 40
      %v1158 = vpop.permute.xlu0 %1157
      %1159 = vrot.lane.b32.xlu0 %v789, 40
      %v1160 = vpop.permute.xlu0 %1159
      %1161 = vrot.lane.b32.xlu0 %v792, 40
      %v1162 = vpop.permute.xlu0 %1161
      %1163 = vrot.lane.b32.xlu0 %v794, 40
      %v1164 = vpop.permute.xlu0 %1163
      %1165 = vrot.lane.b32.xlu0 %v797, 40
      %v1166 = vpop.permute.xlu0 %1165
      %1167 = vrot.lane.b32.xlu0 %v799, 40
      %v1168 = vpop.permute.xlu0 %1167
      %1169 = vrot.lane.b32.xlu0 %v802, 40
      %v1170 = vpop.permute.xlu0 %1169
      %1171 = vrot.lane.b32.xlu0 %v804, 40
      %v1172 = vpop.permute.xlu0 %1171
      %1173 = vrot.lane.b32.xlu0 %v807, 40
      %v1174 = vpop.permute.xlu0 %1173
      %1175 = vrot.lane.b32.xlu0 %v809, 40
      %v1176 = vpop.permute.xlu0 %1175
      %1177 = vrot.lane.b32.xlu0 %v812, 40
      %v1178 = vpop.permute.xlu0 %1177
      %1179 = vrot.lane.b32.xlu0 %v814, 40
      %v1180 = vpop.permute.xlu0 %1179
      %1181 = vrot.lane.b32.xlu0 %v817, 40
      %v1182 = vpop.permute.xlu0 %1181
      %1183 = vrot.lane.b32.xlu0 %v819, 40
      %v1184 = vpop.permute.xlu0 %1183
      %1185 = vrot.lane.b32.xlu0 %v822, 40
      %v1186 = vpop.permute.xlu0 %1185
      %1187 = vrot.lane.b32.xlu0 %v824, 40
      %v1188 = vpop.permute.xlu0 %1187
      %1189 = vrot.lane.b32.xlu0 %v827, 40
      %v1190 = vpop.permute.xlu0 %1189
      %1191 = vrot.lane.b32.xlu0 %v829, 40
      %v1192 = vpop.permute.xlu0 %1191
      %1193 = vrot.lane.b32.xlu0 %v832, 40
      %v1194 = vpop.permute.xlu0 %1193
      %1195 = vrot.lane.b32.xlu0 %v834, 40
      %v1196 = vpop.permute.xlu0 %1195
      %1197 = vrot.lane.b32.xlu0 %v837, 40
      %v1198 = vpop.permute.xlu0 %1197
      %1199 = vrot.lane.b32.xlu0 %v839, 40
      %v1200 = vpop.permute.xlu0 %1199
      %1201 = vrot.lane.b32.xlu0 %v1138, 40
      %v1202 = vpop.permute.xlu0 %1201
      %1203 = vrot.lane.b32.xlu0 %v1140, 40
      %v1204 = vpop.permute.xlu0 %1203
      %1239 = vrot.lane.b32.xlu0 %v486, 48
      %v1240 = vpop.permute.xlu0 %1239
      %1241 = vrot.lane.b32.xlu0 %v487, 48
      %v1242 = vpop.permute.xlu0 %1241
      %1243 = vrot.lane.b32.xlu0 %v489, 48
      %v1244 = vpop.permute.xlu0 %1243
      %1245 = vrot.lane.b32.xlu0 %v490, 48
      %v1246 = vpop.permute.xlu0 %1245
      %1247 = vrot.lane.b32.xlu0 %v492, 48
      %v1248 = vpop.permute.xlu0 %1247
      %1249 = vrot.lane.b32.xlu0 %v493, 48
      %v1250 = vpop.permute.xlu0 %1249
      %1251 = vrot.lane.b32.xlu0 %v495, 48
      %v1252 = vpop.permute.xlu0 %1251
      %1253 = vrot.lane.b32.xlu0 %v496, 48
      %v1254 = vpop.permute.xlu0 %1253
      %1255 = vrot.lane.b32.xlu0 %v498, 48
      %v1256 = vpop.permute.xlu0 %1255
      %1257 = vrot.lane.b32.xlu0 %v499, 48
      %v1258 = vpop.permute.xlu0 %1257
      %1259 = vrot.lane.b32.xlu0 %v501, 48
      %v1260 = vpop.permute.xlu0 %1259
      %1261 = vrot.lane.b32.xlu0 %v502, 48
      %v1262 = vpop.permute.xlu0 %1261
      %1263 = vrot.lane.b32.xlu0 %v504, 48
      %v1264 = vpop.permute.xlu0 %1263
      %1265 = vrot.lane.b32.xlu0 %v505, 48
      %v1266 = vpop.permute.xlu0 %1265
      %1267 = vrot.lane.b32.xlu0 %v507, 48
      %v1268 = vpop.permute.xlu0 %1267
      %1269 = vrot.lane.b32.xlu0 %v508, 48
      %v1270 = vpop.permute.xlu0 %1269
      %1271 = vrot.lane.b32.xlu0 %v510, 48
      %v1272 = vpop.permute.xlu0 %1271
      %1273 = vrot.lane.b32.xlu0 %v511, 48
      %v1274 = vpop.permute.xlu0 %1273
      %1275 = vrot.lane.b32.xlu0 %v513, 48
      %v1276 = vpop.permute.xlu0 %1275
      %1277 = vrot.lane.b32.xlu0 %v514, 48
      %v1278 = vpop.permute.xlu0 %1277
      %1279 = vrot.lane.b32.xlu0 %v516, 48
      %v1280 = vpop.permute.xlu0 %1279
      %1281 = vrot.lane.b32.xlu0 %v517, 48
      %v1282 = vpop.permute.xlu0 %1281
      %1283 = vrot.lane.b32.xlu0 %v519, 48
      %v1284 = vpop.permute.xlu0 %1283
      %1285 = vrot.lane.b32.xlu0 %v520, 48
      %v1286 = vpop.permute.xlu0 %1285
      %1287 = vrot.lane.b32.xlu0 %v522, 48
      %v1288 = vpop.permute.xlu0 %1287
      %1289 = vrot.lane.b32.xlu0 %v523, 48
      %v1290 = vpop.permute.xlu0 %1289
      %1291 = vrot.lane.b32.xlu0 %v525, 48
      %v1292 = vpop.permute.xlu0 %1291
      %1293 = vrot.lane.b32.xlu0 %v526, 48
      %v1294 = vpop.permute.xlu0 %1293
      %1295 = vrot.lane.b32.xlu0 %v528, 48
      %v1296 = vpop.permute.xlu0 %1295
      %1297 = vrot.lane.b32.xlu0 %v529, 48
      %v1298 = vpop.permute.xlu0 %1297
      %1299 = vrot.lane.b32.xlu0 %v531, 48
      %v1300 = vpop.permute.xlu0 %1299
      %1301 = vrot.lane.b32.xlu0 %v532, 48
      %v1302 = vpop.permute.xlu0 %1301
      %v1336 = vrot.slane %v531, 1
      %v1337 = vrot.slane %v532, 1
      %v1338 = vsel %vm582, %v1336, %v1337
      %v1339 = vrot.slane %v533, 1
      %v1340 = vsel %vm582, %v1337, %v1339
      %1341 = vrot.lane.b32.xlu0 %v595, 56
      %v1342 = vpop.permute.xlu0 %1341
      %1343 = vrot.lane.b32.xlu0 %v597, 56
      %v1344 = vpop.permute.xlu0 %1343
      %1345 = vrot.lane.b32.xlu0 %v600, 56
      %v1346 = vpop.permute.xlu0 %1345
      %1347 = vrot.lane.b32.xlu0 %v602, 56
      %v1348 = vpop.permute.xlu0 %1347
      %1349 = vrot.lane.b32.xlu0 %v605, 56
      %v1350 = vpop.permute.xlu0 %1349
      %1351 = vrot.lane.b32.xlu0 %v607, 56
      %v1352 = vpop.permute.xlu0 %1351
      %1353 = vrot.lane.b32.xlu0 %v610, 56
      %v1354 = vpop.permute.xlu0 %1353
      %1355 = vrot.lane.b32.xlu0 %v612, 56
      %v1356 = vpop.permute.xlu0 %1355
      %1357 = vrot.lane.b32.xlu0 %v615, 56
      %v1358 = vpop.permute.xlu0 %1357
      %1359 = vrot.lane.b32.xlu0 %v617, 56
      %v1360 = vpop.permute.xlu0 %1359
      %1361 = vrot.lane.b32.xlu0 %v620, 56
      %v1362 = vpop.permute.xlu0 %1361
      %1363 = vrot.lane.b32.xlu0 %v622, 56
      %v1364 = vpop.permute.xlu0 %1363
      %1365 = vrot.lane.b32.xlu0 %v625, 56
      %v1366 = vpop.permute.xlu0 %1365
      %1367 = vrot.lane.b32.xlu0 %v627, 56
      %v1368 = vpop.permute.xlu0 %1367
      %1369 = vrot.lane.b32.xlu0 %v630, 56
      %v1370 = vpop.permute.xlu0 %1369
      %1371 = vrot.lane.b32.xlu0 %v632, 56
      %v1372 = vpop.permute.xlu0 %1371
      %1373 = vrot.lane.b32.xlu0 %v635, 56
      %v1374 = vpop.permute.xlu0 %1373
      %1375 = vrot.lane.b32.xlu0 %v637, 56
      %v1376 = vpop.permute.xlu0 %1375
      %1377 = vrot.lane.b32.xlu0 %v640, 56
      %v1378 = vpop.permute.xlu0 %1377
      %1379 = vrot.lane.b32.xlu0 %v642, 56
      %v1380 = vpop.permute.xlu0 %1379
      %1381 = vrot.lane.b32.xlu0 %v645, 56
      %v1382 = vpop.permute.xlu0 %1381
      %1383 = vrot.lane.b32.xlu0 %v647, 56
      %v1384 = vpop.permute.xlu0 %1383
      %1385 = vrot.lane.b32.xlu0 %v650, 56
      %v1386 = vpop.permute.xlu0 %1385
      %1387 = vrot.lane.b32.xlu0 %v652, 56
      %v1388 = vpop.permute.xlu0 %1387
      %1389 = vrot.lane.b32.xlu0 %v655, 56
      %v1390 = vpop.permute.xlu0 %1389
      %1391 = vrot.lane.b32.xlu0 %v657, 56
      %v1392 = vpop.permute.xlu0 %1391
      %1393 = vrot.lane.b32.xlu0 %v660, 56
      %v1394 = vpop.permute.xlu0 %1393
      %1395 = vrot.lane.b32.xlu0 %v662, 56
      %v1396 = vpop.permute.xlu0 %1395
      %1397 = vrot.lane.b32.xlu0 %v1037, 56
      %v1398 = vpop.permute.xlu0 %1397
      %1399 = vrot.lane.b32.xlu0 %v1039, 56
      %v1400 = vpop.permute.xlu0 %1399
      %1401 = vrot.lane.b32.xlu0 %v1338, 56
      %v1402 = vpop.permute.xlu0 %1401
      %1403 = vrot.lane.b32.xlu0 %v1340, 56
      %v1404 = vpop.permute.xlu0 %1403
      %v1437 = vrot.slane %v531, 2
      %v1438 = vrot.slane %v532, 2
      %v1439 = vsel %vm759, %v1437, %v1438
      %v1440 = vrot.slane %v533, 2
      %v1441 = vsel %vm759, %v1438, %v1440
      %1442 = vrot.lane.b32.xlu0 %v772, 64
      %v1443 = vpop.permute.xlu0 %1442
      %1444 = vrot.lane.b32.xlu0 %v774, 64
      %v1445 = vpop.permute.xlu0 %1444
      %1446 = vrot.lane.b32.xlu0 %v777, 64
      %v1447 = vpop.permute.xlu0 %1446
      %1448 = vrot.lane.b32.xlu0 %v779, 64
      %v1449 = vpop.permute.xlu0 %1448
      %1450 = vrot.lane.b32.xlu0 %v782, 64
      %v1451 = vpop.permute.xlu0 %1450
      %1452 = vrot.lane.b32.xlu0 %v784, 64
      %v1453 = vpop.permute.xlu0 %1452
      %1454 = vrot.lane.b32.xlu0 %v787, 64
      %v1455 = vpop.permute.xlu0 %1454
      %1456 = vrot.lane.b32.xlu0 %v789, 64
      %v1457 = vpop.permute.xlu0 %1456
      %1458 = vrot.lane.b32.xlu0 %v792, 64
      %v1459 = vpop.permute.xlu0 %1458
      %1460 = vrot.lane.b32.xlu0 %v794, 64
      %v1461 = vpop.permute.xlu0 %1460
      %1462 = vrot.lane.b32.xlu0 %v797, 64
      %v1463 = vpop.permute.xlu0 %1462
      %1464 = vrot.lane.b32.xlu0 %v799, 64
      %v1465 = vpop.permute.xlu0 %1464
      %1466 = vrot.lane.b32.xlu0 %v802, 64
      %v1467 = vpop.permute.xlu0 %1466
      %1468 = vrot.lane.b32.xlu0 %v804, 64
      %v1469 = vpop.permute.xlu0 %1468
      %1470 = vrot.lane.b32.xlu0 %v807, 64
      %v1471 = vpop.permute.xlu0 %1470
      %1472 = vrot.lane.b32.xlu0 %v809, 64
      %v1473 = vpop.permute.xlu0 %1472
      %1474 = vrot.lane.b32.xlu0 %v812, 64
      %v1475 = vpop.permute.xlu0 %1474
      %1476 = vrot.lane.b32.xlu0 %v814, 64
      %v1477 = vpop.permute.xlu0 %1476
      %1478 = vrot.lane.b32.xlu0 %v817, 64
      %v1479 = vpop.permute.xlu0 %1478
      %1480 = vrot.lane.b32.xlu0 %v819, 64
      %v1481 = vpop.permute.xlu0 %1480
      %1482 = vrot.lane.b32.xlu0 %v822, 64
      %v1483 = vpop.permute.xlu0 %1482
      %1484 = vrot.lane.b32.xlu0 %v824, 64
      %v1485 = vpop.permute.xlu0 %1484
      %1486 = vrot.lane.b32.xlu0 %v827, 64
      %v1487 = vpop.permute.xlu0 %1486
      %1488 = vrot.lane.b32.xlu0 %v829, 64
      %v1489 = vpop.permute.xlu0 %1488
      %1490 = vrot.lane.b32.xlu0 %v832, 64
      %v1491 = vpop.permute.xlu0 %1490
      %1492 = vrot.lane.b32.xlu0 %v834, 64
      %v1493 = vpop.permute.xlu0 %1492
      %1494 = vrot.lane.b32.xlu0 %v837, 64
      %v1495 = vpop.permute.xlu0 %1494
      %1496 = vrot.lane.b32.xlu0 %v839, 64
      %v1497 = vpop.permute.xlu0 %1496
      %1498 = vrot.lane.b32.xlu0 %v1138, 64
      %v1499 = vpop.permute.xlu0 %1498
      %1500 = vrot.lane.b32.xlu0 %v1140, 64
      %v1501 = vpop.permute.xlu0 %1500
      %1502 = vrot.lane.b32.xlu0 %v1439, 64
      %v1503 = vpop.permute.xlu0 %1502
      %1504 = vrot.lane.b32.xlu0 %v1441, 64
      %v1505 = vpop.permute.xlu0 %1504
      %v1538 = vsel %vm405, %v480, %v664
      %v1539 = vsel %vm405, %v481, %v666
      %v1540 = vsel %vm405, %v483, %v668
      %v1541 = vsel %vm405, %v484, %v670
      %v1542 = vsel %vm405, %v486, %v672
      %v1543 = vsel %vm405, %v487, %v674
      %v1544 = vsel %vm405, %v489, %v676
      %v1545 = vsel %vm405, %v490, %v678
      %v1546 = vsel %vm405, %v492, %v680
      %v1547 = vsel %vm405, %v493, %v682
      %v1548 = vsel %vm405, %v495, %v684
      %v1549 = vsel %vm405, %v496, %v686
      %v1550 = vsel %vm405, %v498, %v688
      %v1551 = vsel %vm405, %v499, %v690
      %v1552 = vsel %vm405, %v501, %v692
      %v1553 = vsel %vm405, %v502, %v694
      %v1554 = vsel %vm405, %v504, %v696
      %v1555 = vsel %vm405, %v505, %v698
      %v1556 = vsel %vm405, %v507, %v700
      %v1557 = vsel %vm405, %v508, %v702
      %v1558 = vsel %vm405, %v510, %v704
      %v1559 = vsel %vm405, %v511, %v706
      %v1560 = vsel %vm405, %v513, %v708
      %v1561 = vsel %vm405, %v514, %v710
      %v1562 = vsel %vm405, %v516, %v712
      %v1563 = vsel %vm405, %v517, %v714
      %v1564 = vsel %vm405, %v519, %v716
      %v1565 = vsel %vm405, %v520, %v718
      %v1566 = vsel %vm405, %v522, %v720
      %v1567 = vsel %vm405, %v523, %v722
      %v1568 = vsel %vm405, %v525, %v724
      %v1569 = vsel %vm405, %v526, %v726
      %vm1570 = vcmask 130048
      %v1571 = vsel %vm1570, %v1538, %v841
      %v1572 = vsel %vm1570, %v1539, %v843
      %v1573 = vsel %vm1570, %v1540, %v845
      %v1574 = vsel %vm1570, %v1541, %v847
      %v1575 = vsel %vm1570, %v1542, %v849
      %v1576 = vsel %vm1570, %v1543, %v851
      %v1577 = vsel %vm1570, %v1544, %v853
      %v1578 = vsel %vm1570, %v1545, %v855
      %v1579 = vsel %vm1570, %v1546, %v857
      %v1580 = vsel %vm1570, %v1547, %v859
      %v1581 = vsel %vm1570, %v1548, %v861
      %v1582 = vsel %vm1570, %v1549, %v863
      %v1583 = vsel %vm1570, %v1550, %v865
      %v1584 = vsel %vm1570, %v1551, %v867
      %v1585 = vsel %vm1570, %v1552, %v869
      %v1586 = vsel %vm1570, %v1553, %v871
      %v1587 = vsel %vm1570, %v1554, %v873
      %v1588 = vsel %vm1570, %v1555, %v875
      %v1589 = vsel %vm1570, %v1556, %v877
      %v1590 = vsel %vm1570, %v1557, %v879
      %v1591 = vsel %vm1570, %v1558, %v881
      %v1592 = vsel %vm1570, %v1559, %v883
      %v1593 = vsel %vm1570, %v1560, %v885
      %v1594 = vsel %vm1570, %v1561, %v887
      %v1595 = vsel %vm1570, %v1562, %v889
      %v1596 = vsel %vm1570, %v1563, %v891
      %v1597 = vsel %vm1570, %v1564, %v893
      %v1598 = vsel %vm1570, %v1565, %v895
      %v1599 = vsel %vm1570, %v1566, %v897
      %v1600 = vsel %vm1570, %v1567, %v899
      %v1601 = vsel %vm1570, %v1568, %v901
      %v1602 = vsel %vm1570, %v1569, %v903
      %vm1603 = vcmask 195584
      %v1604 = vsel %vm1603, %v1571, %v939
      %v1605 = vsel %vm1603, %v1572, %v941
      %v1606 = vsel %vm1603, %v1573, %v943
      %v1607 = vsel %vm1603, %v1574, %v945
      %v1608 = vsel %vm1603, %v1575, %v947
      %v1609 = vsel %vm1603, %v1576, %v949
      %v1610 = vsel %vm1603, %v1577, %v951
      %v1611 = vsel %vm1603, %v1578, %v953
      %v1612 = vsel %vm1603, %v1579, %v955
      %v1613 = vsel %vm1603, %v1580, %v957
      %v1614 = vsel %vm1603, %v1581, %v959
      %v1615 = vsel %vm1603, %v1582, %v961
      %v1616 = vsel %vm1603, %v1583, %v963
      %v1617 = vsel %vm1603, %v1584, %v965
      %v1618 = vsel %vm1603, %v1585, %v967
      %v1619 = vsel %vm1603, %v1586, %v969
      %v1620 = vsel %vm1603, %v1587, %v971
      %v1621 = vsel %vm1603, %v1588, %v973
      %v1622 = vsel %vm1603, %v1589, %v975
      %v1623 = vsel %vm1603, %v1590, %v977
      %v1624 = vsel %vm1603, %v1591, %v979
      %v1625 = vsel %vm1603, %v1592, %v981
      %v1626 = vsel %vm1603, %v1593, %v983
      %v1627 = vsel %vm1603, %v1594, %v985
      %v1628 = vsel %vm1603, %v1595, %v987
      %v1629 = vsel %vm1603, %v1596, %v989
      %v1630 = vsel %vm1603, %v1597, %v991
      %v1631 = vsel %vm1603, %v1598, %v993
      %v1632 = vsel %vm1603, %v1599, %v995
      %v1633 = vsel %vm1603, %v1600, %v997
      %v1634 = vsel %vm1603, %v1601, %v999
      %v1635 = vsel %vm1603, %v1602, %v1001
      %vm1636 = vcmask 261120
      %v1637 = vsel %vm1636, %v1604, %v1041
      %v1638 = vsel %vm1636, %v1605, %v1043
      %v1639 = vsel %vm1636, %v1606, %v1045
      %v1640 = vsel %vm1636, %v1607, %v1047
      %v1641 = vsel %vm1636, %v1608, %v1049
      %v1642 = vsel %vm1636, %v1609, %v1051
      %v1643 = vsel %vm1636, %v1610, %v1053
      %v1644 = vsel %vm1636, %v1611, %v1055
      %v1645 = vsel %vm1636, %v1612, %v1057
      %v1646 = vsel %vm1636, %v1613, %v1059
      %v1647 = vsel %vm1636, %v1614, %v1061
      %v1648 = vsel %vm1636, %v1615, %v1063
      %v1649 = vsel %vm1636, %v1616, %v1065
      %v1650 = vsel %vm1636, %v1617, %v1067
      %v1651 = vsel %vm1636, %v1618, %v1069
      %v1652 = vsel %vm1636, %v1619, %v1071
      %v1653 = vsel %vm1636, %v1620, %v1073
      %v1654 = vsel %vm1636, %v1621, %v1075
      %v1655 = vsel %vm1636, %v1622, %v1077
      %v1656 = vsel %vm1636, %v1623, %v1079
      %v1657 = vsel %vm1636, %v1624, %v1081
      %v1658 = vsel %vm1636, %v1625, %v1083
      %v1659 = vsel %vm1636, %v1626, %v1085
      %v1660 = vsel %vm1636, %v1627, %v1087
      %v1661 = vsel %vm1636, %v1628, %v1089
      %v1662 = vsel %vm1636, %v1629, %v1091
      %v1663 = vsel %vm1636, %v1630, %v1093
      %v1664 = vsel %vm1636, %v1631, %v1095
      %v1665 = vsel %vm1636, %v1632, %v1097
      %v1666 = vsel %vm1636, %v1633, %v1099
      %v1667 = vsel %vm1636, %v1634, %v1101
      %v1668 = vsel %vm1636, %v1635, %v1103
      %vm1669 = vcmask 326656
      %v1670 = vsel %vm1669, %v1637, %v1142
      %v1671 = vsel %vm1669, %v1638, %v1144
      %v1672 = vsel %vm1669, %v1639, %v1146
      %v1673 = vsel %vm1669, %v1640, %v1148
      %v1674 = vsel %vm1669, %v1641, %v1150
      %v1675 = vsel %vm1669, %v1642, %v1152
      %v1676 = vsel %vm1669, %v1643, %v1154
      %v1677 = vsel %vm1669, %v1644, %v1156
      %v1678 = vsel %vm1669, %v1645, %v1158
      %v1679 = vsel %vm1669, %v1646, %v1160
      %v1680 = vsel %vm1669, %v1647, %v1162
      %v1681 = vsel %vm1669, %v1648, %v1164
      %v1682 = vsel %vm1669, %v1649, %v1166
      %v1683 = vsel %vm1669, %v1650, %v1168
      %v1684 = vsel %vm1669, %v1651, %v1170
      %v1685 = vsel %vm1669, %v1652, %v1172
      %v1686 = vsel %vm1669, %v1653, %v1174
      %v1687 = vsel %vm1669, %v1654, %v1176
      %v1688 = vsel %vm1669, %v1655, %v1178
      %v1689 = vsel %vm1669, %v1656, %v1180
      %v1690 = vsel %vm1669, %v1657, %v1182
      %v1691 = vsel %vm1669, %v1658, %v1184
      %v1692 = vsel %vm1669, %v1659, %v1186
      %v1693 = vsel %vm1669, %v1660, %v1188
      %v1694 = vsel %vm1669, %v1661, %v1190
      %v1695 = vsel %vm1669, %v1662, %v1192
      %v1696 = vsel %vm1669, %v1663, %v1194
      %v1697 = vsel %vm1669, %v1664, %v1196
      %v1698 = vsel %vm1669, %v1665, %v1198
      %v1699 = vsel %vm1669, %v1666, %v1200
      %v1700 = vsel %vm1669, %v1667, %v1202
      %v1701 = vsel %vm1669, %v1668, %v1204
      %vm1702 = vcmask 392192
      %v1703 = vsel %vm1702, %v1670, %v1240
      %v1704 = vsel %vm1702, %v1671, %v1242
      %v1705 = vsel %vm1702, %v1672, %v1244
      %v1706 = vsel %vm1702, %v1673, %v1246
      %v1707 = vsel %vm1702, %v1674, %v1248
      %v1708 = vsel %vm1702, %v1675, %v1250
      %v1709 = vsel %vm1702, %v1676, %v1252
      %v1710 = vsel %vm1702, %v1677, %v1254
      %v1711 = vsel %vm1702, %v1678, %v1256
      %v1712 = vsel %vm1702, %v1679, %v1258
      %v1713 = vsel %vm1702, %v1680, %v1260
      %v1714 = vsel %vm1702, %v1681, %v1262
      %v1715 = vsel %vm1702, %v1682, %v1264
      %v1716 = vsel %vm1702, %v1683, %v1266
      %v1717 = vsel %vm1702, %v1684, %v1268
      %v1718 = vsel %vm1702, %v1685, %v1270
      %v1719 = vsel %vm1702, %v1686, %v1272
      %v1720 = vsel %vm1702, %v1687, %v1274
      %v1721 = vsel %vm1702, %v1688, %v1276
      %v1722 = vsel %vm1702, %v1689, %v1278
      %v1723 = vsel %vm1702, %v1690, %v1280
      %v1724 = vsel %vm1702, %v1691, %v1282
      %v1725 = vsel %vm1702, %v1692, %v1284
      %v1726 = vsel %vm1702, %v1693, %v1286
      %v1727 = vsel %vm1702, %v1694, %v1288
      %v1728 = vsel %vm1702, %v1695, %v1290
      %v1729 = vsel %vm1702, %v1696, %v1292
      %v1730 = vsel %vm1702, %v1697, %v1294
      %v1731 = vsel %vm1702, %v1698, %v1296
      %v1732 = vsel %vm1702, %v1699, %v1298
      %v1733 = vsel %vm1702, %v1700, %v1300
      %v1734 = vsel %vm1702, %v1701, %v1302
      %vm1735 = vcmask 457728
      %v1736 = vsel %vm1735, %v1703, %v1342
      %v1737 = vsel %vm1735, %v1704, %v1344
      %v1738 = vsel %vm1735, %v1705, %v1346
      %v1739 = vsel %vm1735, %v1706, %v1348
      %v1740 = vsel %vm1735, %v1707, %v1350
      %v1741 = vsel %vm1735, %v1708, %v1352
      %v1742 = vsel %vm1735, %v1709, %v1354
      %v1743 = vsel %vm1735, %v1710, %v1356
      %v1744 = vsel %vm1735, %v1711, %v1358
      %v1745 = vsel %vm1735, %v1712, %v1360
      %v1746 = vsel %vm1735, %v1713, %v1362
      %v1747 = vsel %vm1735, %v1714, %v1364
      %v1748 = vsel %vm1735, %v1715, %v1366
      %v1749 = vsel %vm1735, %v1716, %v1368
      %v1750 = vsel %vm1735, %v1717, %v1370
      %v1751 = vsel %vm1735, %v1718, %v1372
      %v1752 = vsel %vm1735, %v1719, %v1374
      %v1753 = vsel %vm1735, %v1720, %v1376
      %v1754 = vsel %vm1735, %v1721, %v1378
      %v1755 = vsel %vm1735, %v1722, %v1380
      %v1756 = vsel %vm1735, %v1723, %v1382
      %v1757 = vsel %vm1735, %v1724, %v1384
      %v1758 = vsel %vm1735, %v1725, %v1386
      %v1759 = vsel %vm1735, %v1726, %v1388
      %v1760 = vsel %vm1735, %v1727, %v1390
      %v1761 = vsel %vm1735, %v1728, %v1392
      %v1762 = vsel %vm1735, %v1729, %v1394
      %v1763 = vsel %vm1735, %v1730, %v1396
      %v1764 = vsel %vm1735, %v1731, %v1398
      %v1765 = vsel %vm1735, %v1732, %v1400
      %v1766 = vsel %vm1735, %v1733, %v1402
      %v1767 = vsel %vm1735, %v1734, %v1404
      %vm1768 = vcmask 523264
      %v1769 = vsel %vm1768, %v1736, %v1443
      %v1770 = vsel %vm1768, %v1737, %v1445
      %v1771 = vsel %vm1768, %v1738, %v1447
      %v1772 = vsel %vm1768, %v1739, %v1449
      %v1773 = vsel %vm1768, %v1740, %v1451
      %v1774 = vsel %vm1768, %v1741, %v1453
      %v1775 = vsel %vm1768, %v1742, %v1455
      %v1776 = vsel %vm1768, %v1743, %v1457
      %v1777 = vsel %vm1768, %v1744, %v1459
      %v1778 = vsel %vm1768, %v1745, %v1461
      %v1779 = vsel %vm1768, %v1746, %v1463
      %v1780 = vsel %vm1768, %v1747, %v1465
      %v1781 = vsel %vm1768, %v1748, %v1467
      %v1782 = vsel %vm1768, %v1749, %v1469
      %v1783 = vsel %vm1768, %v1750, %v1471
      %v1784 = vsel %vm1768, %v1751, %v1473
      %v1785 = vsel %vm1768, %v1752, %v1475
      %v1786 = vsel %vm1768, %v1753, %v1477
      %v1787 = vsel %vm1768, %v1754, %v1479
      %v1788 = vsel %vm1768, %v1755, %v1481
      %v1789 = vsel %vm1768, %v1756, %v1483
      %v1790 = vsel %vm1768, %v1757, %v1485
      %v1791 = vsel %vm1768, %v1758, %v1487
      %v1792 = vsel %vm1768, %v1759, %v1489
      %v1793 = vsel %vm1768, %v1760, %v1491
      %v1794 = vsel %vm1768, %v1761, %v1493
      %v1795 = vsel %vm1768, %v1762, %v1495
      %v1796 = vsel %vm1768, %v1763, %v1497
      %v1797 = vsel %vm1768, %v1764, %v1499
      %v1798 = vsel %vm1768, %v1765, %v1501
      %v1799 = vsel %vm1768, %v1766, %v1503
      %v1800 = vsel %vm1768, %v1767, %v1505
      %v1801 = vld [vmem:[%s3] sm:$0xff]
      %v1802 = vld [vmem:[%s3 + $0x8] sm:$0xff]
      %v1803 = vld [vmem:[%s3 + $0x10] sm:$0xff]
      %v1804 = vld [vmem:[%s3 + $0x18] sm:$0xff]
      %v1805 = vld [vmem:[%s3 + $0x20] sm:$0xff]
      %v1806 = vld [vmem:[%s3 + $0x28] sm:$0xff]
      %v1807 = vld [vmem:[%s3 + $0x30] sm:$0xff]
      %v1808 = vld [vmem:[%s3 + $0x38] sm:$0xff]
      %v1809 = vld [vmem:[%s3 + $0x40] sm:$0xff]
      %v1810 = vld [vmem:[%s4] sm:$0x1]
      %v1812 = vlaneseq
      %v1813 = vshrl.u32 %v1812, 7
      %v1814 = vsub.s32 0, %v1813
      %v1815 = vrot.slane %v1810, %v1814
      %vm1817 = vcmask 588800
      %v1819 = vsel %vm1817, %v1769, 0
      %v1822 = vsel %vm1817, %v1770, 0
      %v1825 = vsel %vm1817, %v1771, 0
      %v1828 = vsel %vm1817, %v1772, 0
      %v1831 = vsel %vm1817, %v1773, 0
      %v1834 = vsel %vm1817, %v1774, 0
      %v1837 = vsel %vm1817, %v1775, 0
      %v1840 = vsel %vm1817, %v1776, 0
      %v1843 = vsel %vm1817, %v1777, 0
      %v1846 = vsel %vm1817, %v1778, 0
      %v1849 = vsel %vm1817, %v1779, 0
      %v1852 = vsel %vm1817, %v1780, 0
      %v1855 = vsel %vm1817, %v1781, 0
      %v1858 = vsel %vm1817, %v1782, 0
      %v1861 = vsel %vm1817, %v1783, 0
      %v1864 = vsel %vm1817, %v1784, 0
      %v1867 = vsel %vm1817, %v1785, 0
      %v1870 = vsel %vm1817, %v1786, 0
      %v1873 = vsel %vm1817, %v1787, 0
      %v1876 = vsel %vm1817, %v1788, 0
      %v1879 = vsel %vm1817, %v1789, 0
      %v1882 = vsel %vm1817, %v1790, 0
      %v1885 = vsel %vm1817, %v1791, 0
      %v1888 = vsel %vm1817, %v1792, 0
      %v1891 = vsel %vm1817, %v1793, 0
      %v1894 = vsel %vm1817, %v1794, 0
      %v1897 = vsel %vm1817, %v1795, 0
      %v1900 = vsel %vm1817, %v1796, 0
      %v1903 = vsel %vm1817, %v1797, 0
      %v1906 = vsel %vm1817, %v1798, 0
      %v1909 = vsel %vm1817, %v1799, 0
      %v1912 = vsel %vm1817, %v1800, 0
      %1914 = vmatprep.subr.mxu0 0.0
      %1915 = vmatpush1.msra.mxu0 %v1801
      %1916 = vmatprep.subr.mxu0 0.0
      %1917 = vmatpush1.msra.mxu0 %v1802
      %1918 = vmatprep.subr.mxu0 0.0
      %1919 = vmatpush1.msra.mxu0 %v1803
      %1920 = vmatprep.subr.mxu0 0.0
      %1921 = vmatpush1.msra.mxu0 %v1804
      %1922 = vmatprep.subr.mxu0 0.0
      %1923 = vmatpush1.msra.mxu0 %v1805
      %1924 = vmatprep.subr.mxu0 0.0
      %1925 = vmatpush1.msra.mxu0 %v1806
      %1926 = vmatprep.subr.mxu0 0.0
      %1927 = vmatpush1.msra.mxu0 %v1807
      %1928 = vmatprep.subr.mxu0 0.0
      %1929 = vmatpush1.msra.mxu0 %v1808
      %1930 = vmatprep.subr.mxu0 0.0
      %1931 = vmatpush1.msra.mxu0 %v1809
      %1932 = vmatprep.subr.mxu0 0.0
      %1933 = vmatpush1.msra.mxu0 0.0
      %1934 = vmatprep.subr.mxu0 0.0
      %1935 = vmatpush1.msra.mxu0 0.0
      %1936 = vmatprep.subr.mxu0 0.0
      %1937 = vmatpush1.msra.mxu0 0.0
      %1938 = vmatprep.subr.mxu0 0.0
      %1939 = vmatpush1.msra.mxu0 0.0
      %1940 = vmatprep.subr.mxu0 0.0
      %1941 = vmatpush1.msra.mxu0 0.0
      %1942 = vmatprep.subr.mxu0 0.0
      %1943 = vmatpush1.msra.mxu0 0.0
      %1944 = vmatprep.subr.mxu0 0.0
      %1945 = vmatpush1.msra.mxu0 0.0
      %1946 = vmatprep.subr.mxu0 0.0
      %1947 = vmatpush1.msra.mxu0 0.0
      %1948 = vmatprep.subr.mxu0 0.0
      %1949 = vmatpush1.msra.mxu0 0.0
      %1950 = vmatprep.subr.mxu0 0.0
      %1951 = vmatpush1.msra.mxu0 0.0
      %1952 = vmatprep.subr.mxu0 0.0
      %1953 = vmatpush1.msra.mxu0 0.0
      %1954 = vmatprep.subr.mxu0 0.0
      %1955 = vmatpush1.msra.mxu0 0.0
      %1956 = vmatprep.subr.mxu0 0.0
      %1957 = vmatpush1.msra.mxu0 0.0
      %1958 = vmatprep.subr.mxu0 0.0
      %1959 = vmatpush1.msra.mxu0 0.0
      %1960 = vmatprep.subr.mxu0 0.0
      %1961 = vmatpush1.msra.mxu0 0.0
      %1962 = vmatprep.subr.mxu0 0.0
      %1963 = vmatpush1.msra.mxu0 0.0
      %1964 = vmatprep.subr.mxu0 0.0
      %1965 = vmatpush1.msra.mxu0 0.0
      %1966 = vmatprep.subr.mxu0 0.0
      %1967 = vmatpush1.msra.mxu0 0.0
      %1968 = vmatprep.subr.mxu0 0.0
      %1969 = vmatpush1.msra.mxu0 0.0
      %1970 = vmatprep.subr.mxu0 0.0
      %1971 = vmatpush1.msra.mxu0 0.0
      %1972 = vmatprep.subr.mxu0 0.0
      %1973 = vmatpush1.msra.mxu0 0.0
      %1974 = vmatprep.subr.mxu0 0.0
      %1975 = vmatpush1.msra.mxu0 0.0
      %1976 = vmatprep.subr.mxu0 0.0
      %1977 = vmatpush1.msra.mxu0 0.0
      %1978 = vmatprep.mubr.f32.mxu0 0.0
      %1979 = vmatmul.mubr.f32.gmra.mrb[0].mxu0 %v1819
      %v1980 = vpop.f32.mrb[0].mxu0
      %v1981 = vadd.f32 %v1815, %v1980
      %v1982 = vpop.f32.mrb[0].mxu0
      %1983 = vmatprep.mubr.f32.mxu0 0.0
      %1984 = vmatmul.mubr.f32.gmra.mrb[0].mxu0 %v1822
      %v1985 = vpop.f32.mrb[0].mxu0
      %v1986 = vadd.f32 %v1815, %v1985
      %v1987 = vpop.f32.mrb[0].mxu0
      %1988 = vmatprep.mubr.f32.mxu0 0.0
      %1989 = vmatmul.mubr.f32.gmra.mrb[0].mxu0 %v1825
      %v1990 = vpop.f32.mrb[0].mxu0
      %v1991 = vadd.f32 %v1815, %v1990
      %v1992 = vpop.f32.mrb[0].mxu0
      %1993 = vmatprep.mubr.f32.mxu0 0.0
      %1994 = vmatmul.mubr.f32.gmra.mrb[0].mxu0 %v1828
      %v1995 = vpop.f32.mrb[0].mxu0
      %v1996 = vadd.f32 %v1815, %v1995
      %v1997 = vpop.f32.mrb[0].mxu0
      %1998 = vmatprep.mubr.f32.mxu0 0.0
      %1999 = vmatmul.mubr.f32.gmra.mrb[0].mxu0 %v1831
      %v2000 = vpop.f32.mrb[0].mxu0
      %v2001 = vadd.f32 %v1815, %v2000
      %v2002 = vpop.f32.mrb[0].mxu0
      %2003 = vmatprep.mubr.f32.mxu0 0.0
      %2004 = vmatmul.mubr.f32.gmra.mrb[0].mxu0 %v1834
      %v2005 = vpop.f32.mrb[0].mxu0
      %v2006 = vadd.f32 %v1815, %v2005
      %v2007 = vpop.f32.mrb[0].mxu0
      %2008 = vmatprep.mubr.f32.mxu0 0.0
      %2009 = vmatmul.mubr.f32.gmra.mrb[0].mxu0 %v1837
      %v2010 = vpop.f32.mrb[0].mxu0
      %v2011 = vadd.f32 %v1815, %v2010
      %v2012 = vpop.f32.mrb[0].mxu0
      %2013 = vmatprep.mubr.f32.mxu0 0.0
      %2014 = vmatmul.mubr.f32.gmra.mrb[0].mxu0 %v1840
      %v2015 = vpop.f32.mrb[0].mxu0
      %v2016 = vadd.f32 %v1815, %v2015
      %v2017 = vpop.f32.mrb[0].mxu0
      %2018 = vmatprep.mubr.f32.mxu0 0.0
      %2019 = vmatmul.mubr.f32.gmra.mrb[0].mxu0 %v1843
      %v2020 = vpop.f32.mrb[0].mxu0
      %v2021 = vadd.f32 %v1815, %v2020
      %v2022 = vpop.f32.mrb[0].mxu0
      %2023 = vmatprep.mubr.f32.mxu0 0.0
      %2024 = vmatmul.mubr.f32.gmra.mrb[0].mxu0 %v1846
      %v2025 = vpop.f32.mrb[0].mxu0
      %v2026 = vadd.f32 %v1815, %v2025
      %v2027 = vpop.f32.mrb[0].mxu0
      %2028 = vmatprep.mubr.f32.mxu0 0.0
      %2029 = vmatmul.mubr.f32.gmra.mrb[0].mxu0 %v1849
      %v2030 = vpop.f32.mrb[0].mxu0
      %v2031 = vadd.f32 %v1815, %v2030
      %v2032 = vpop.f32.mrb[0].mxu0
      %2033 = vmatprep.mubr.f32.mxu0 0.0
      %2034 = vmatmul.mubr.f32.gmra.mrb[0].mxu0 %v1852
      %v2035 = vpop.f32.mrb[0].mxu0
      %v2036 = vadd.f32 %v1815, %v2035
      %v2037 = vpop.f32.mrb[0].mxu0
      %2038 = vmatprep.mubr.f32.mxu0 0.0
      %2039 = vmatmul.mubr.f32.gmra.mrb[0].mxu0 %v1855
      %v2040 = vpop.f32.mrb[0].mxu0
      %v2041 = vadd.f32 %v1815, %v2040
      %v2042 = vpop.f32.mrb[0].mxu0
      %2043 = vmatprep.mubr.f32.mxu0 0.0
      %2044 = vmatmul.mubr.f32.gmra.mrb[0].mxu0 %v1858
      %v2045 = vpop.f32.mrb[0].mxu0
      %v2046 = vadd.f32 %v1815, %v2045
      %v2047 = vpop.f32.mrb[0].mxu0
      %2048 = vmatprep.mubr.f32.mxu0 0.0
      %2049 = vmatmul.mubr.f32.gmra.mrb[0].mxu0 %v1861
      %v2050 = vpop.f32.mrb[0].mxu0
      %v2051 = vadd.f32 %v1815, %v2050
      %v2052 = vpop.f32.mrb[0].mxu0
      %2053 = vmatprep.mubr.f32.mxu0 0.0
      %2054 = vmatmul.mubr.f32.gmra.mrb[0].mxu0 %v1864
      %v2055 = vpop.f32.mrb[0].mxu0
      %v2056 = vadd.f32 %v1815, %v2055
      %v2057 = vpop.f32.mrb[0].mxu0
      %2058 = vmatprep.mubr.f32.mxu0 0.0
      %2059 = vmatmul.mubr.f32.gmra.mrb[0].mxu0 %v1867
      %v2060 = vpop.f32.mrb[0].mxu0
      %v2061 = vadd.f32 %v1815, %v2060
      %v2062 = vpop.f32.mrb[0].mxu0
      %2063 = vmatprep.mubr.f32.mxu0 0.0
      %2064 = vmatmul.mubr.f32.gmra.mrb[0].mxu0 %v1870
      %v2065 = vpop.f32.mrb[0].mxu0
      %v2066 = vadd.f32 %v1815, %v2065
      %v2067 = vpop.f32.mrb[0].mxu0
      %2068 = vmatprep.mubr.f32.mxu0 0.0
      %2069 = vmatmul.mubr.f32.gmra.mrb[0].mxu0 %v1873
      %v2070 = vpop.f32.mrb[0].mxu0
      %v2071 = vadd.f32 %v1815, %v2070
      %v2072 = vpop.f32.mrb[0].mxu0
      %2073 = vmatprep.mubr.f32.mxu0 0.0
      %2074 = vmatmul.mubr.f32.gmra.mrb[0].mxu0 %v1876
      %v2075 = vpop.f32.mrb[0].mxu0
      %v2076 = vadd.f32 %v1815, %v2075
      %v2077 = vpop.f32.mrb[0].mxu0
      %2078 = vmatprep.mubr.f32.mxu0 0.0
      %2079 = vmatmul.mubr.f32.gmra.mrb[0].mxu0 %v1879
      %v2080 = vpop.f32.mrb[0].mxu0
      %v2081 = vadd.f32 %v1815, %v2080
      %v2082 = vpop.f32.mrb[0].mxu0
      %2083 = vmatprep.mubr.f32.mxu0 0.0
      %2084 = vmatmul.mubr.f32.gmra.mrb[0].mxu0 %v1882
      %v2085 = vpop.f32.mrb[0].mxu0
      %v2086 = vadd.f32 %v1815, %v2085
      %v2087 = vpop.f32.mrb[0].mxu0
      %2088 = vmatprep.mubr.f32.mxu0 0.0
      %2089 = vmatmul.mubr.f32.gmra.mrb[0].mxu0 %v1885
      %v2090 = vpop.f32.mrb[0].mxu0
      %v2091 = vadd.f32 %v1815, %v2090
      %v2092 = vpop.f32.mrb[0].mxu0
      %2093 = vmatprep.mubr.f32.mxu0 0.0
      %2094 = vmatmul.mubr.f32.gmra.mrb[0].mxu0 %v1888
      %v2095 = vpop.f32.mrb[0].mxu0
      %v2096 = vadd.f32 %v1815, %v2095
      %v2097 = vpop.f32.mrb[0].mxu0
      %2098 = vmatprep.mubr.f32.mxu0 0.0
      %2099 = vmatmul.mubr.f32.gmra.mrb[0].mxu0 %v1891
      %v2100 = vpop.f32.mrb[0].mxu0
      %v2101 = vadd.f32 %v1815, %v2100
      %v2102 = vpop.f32.mrb[0].mxu0
      %2103 = vmatprep.mubr.f32.mxu0 0.0
      %2104 = vmatmul.mubr.f32.gmra.mrb[0].mxu0 %v1894
      %v2105 = vpop.f32.mrb[0].mxu0
      %v2106 = vadd.f32 %v1815, %v2105
      %v2107 = vpop.f32.mrb[0].mxu0
      %2108 = vmatprep.mubr.f32.mxu0 0.0
      %2109 = vmatmul.mubr.f32.gmra.mrb[0].mxu0 %v1897
      %v2110 = vpop.f32.mrb[0].mxu0
      %v2111 = vadd.f32 %v1815, %v2110
      %v2112 = vpop.f32.mrb[0].mxu0
      %2113 = vmatprep.mubr.f32.mxu0 0.0
      %2114 = vmatmul.mubr.f32.gmra.mrb[0].mxu0 %v1900
      %v2115 = vpop.f32.mrb[0].mxu0
      %v2116 = vadd.f32 %v1815, %v2115
      %v2117 = vpop.f32.mrb[0].mxu0
      %2118 = vmatprep.mubr.f32.mxu0 0.0
      %2119 = vmatmul.mubr.f32.gmra.mrb[0].mxu0 %v1903
      %v2120 = vpop.f32.mrb[0].mxu0
      %v2121 = vadd.f32 %v1815, %v2120
      %v2122 = vpop.f32.mrb[0].mxu0
      %2123 = vmatprep.mubr.f32.mxu0 0.0
      %2124 = vmatmul.mubr.f32.gmra.mrb[0].mxu0 %v1906
      %v2125 = vpop.f32.mrb[0].mxu0
      %v2126 = vadd.f32 %v1815, %v2125
      %v2127 = vpop.f32.mrb[0].mxu0
      %2128 = vmatprep.mubr.f32.mxu0 0.0
      %2129 = vmatmul.mubr.f32.gmra.mrb[0].mxu0 %v1909
      %v2130 = vpop.f32.mrb[0].mxu0
      %v2131 = vadd.f32 %v1815, %v2130
      %v2132 = vpop.f32.mrb[0].mxu0
      %2133 = vmatprep.mubr.f32.mxu0 0.0
      %2134 = vmatmul.mubr.f32.gmra.mrb[0].mxu0 %v1912
      %v2135 = vpop.f32.mrb[0].mxu0
      %v2136 = vadd.f32 %v1815, %v2135
      %v2137 = vpop.f32.mrb[0].mxu0
      %2138 = vdwg.mxu0
      %2139 = vst.msk [vmem:[%s258] sm:$0xff] %vm405, %v1981
      %2140 = vst.msk [vmem:[%s258 + $0x8] sm:$0xff] %vm405, %v1986
      %2141 = vst.msk [vmem:[%s258 + $0x10] sm:$0xff] %vm405, %v1991
      %2142 = vst.msk [vmem:[%s258 + $0x18] sm:$0xff] %vm405, %v1996
      %2143 = vst.msk [vmem:[%s258 + $0x20] sm:$0xff] %vm405, %v2001
      %2144 = vst.msk [vmem:[%s258 + $0x28] sm:$0xff] %vm405, %v2006
      %2145 = vst.msk [vmem:[%s258 + $0x30] sm:$0xff] %vm405, %v2011
      %2146 = vst.msk [vmem:[%s258 + $0x38] sm:$0xff] %vm405, %v2016
      %2147 = vst.msk [vmem:[%s258 + $0x40] sm:$0xff] %vm405, %v2021
      %2148 = vst.msk [vmem:[%s258 + $0x48] sm:$0xff] %vm405, %v2026
      %2149 = vst.msk [vmem:[%s258 + $0x50] sm:$0xff] %vm405, %v2031
      %2150 = vst.msk [vmem:[%s258 + $0x58] sm:$0xff] %vm405, %v2036
      %2151 = vst.msk [vmem:[%s258 + $0x60] sm:$0xff] %vm405, %v2041
      %2152 = vst.msk [vmem:[%s258 + $0x68] sm:$0xff] %vm405, %v2046
      %2153 = vst.msk [vmem:[%s258 + $0x70] sm:$0xff] %vm405, %v2051
      %2154 = vst.msk [vmem:[%s258 + $0x78] sm:$0xff] %vm405, %v2056
      %2155 = vst.msk [vmem:[%s258 + $0x80] sm:$0xff] %vm405, %v2061
      %2156 = vst.msk [vmem:[%s258 + $0x88] sm:$0xff] %vm405, %v2066
      %2157 = vst.msk [vmem:[%s258 + $0x90] sm:$0xff] %vm405, %v2071
      %2158 = vst.msk [vmem:[%s258 + $0x98] sm:$0xff] %vm405, %v2076
      %2159 = vst.msk [vmem:[%s258 + $0xa0] sm:$0xff] %vm405, %v2081
      %2160 = vst.msk [vmem:[%s258 + $0xa8] sm:$0xff] %vm405, %v2086
      %2161 = vst.msk [vmem:[%s258 + $0xb0] sm:$0xff] %vm405, %v2091
      %2162 = vst.msk [vmem:[%s258 + $0xb8] sm:$0xff] %vm405, %v2096
      %2163 = vst.msk [vmem:[%s258 + $0xc0] sm:$0xff] %vm405, %v2101
      %2164 = vst.msk [vmem:[%s258 + $0xc8] sm:$0xff] %vm405, %v2106
      %2165 = vst.msk [vmem:[%s258 + $0xd0] sm:$0xff] %vm405, %v2111
      %2166 = vst.msk [vmem:[%s258 + $0xd8] sm:$0xff] %vm405, %v2116
      %2167 = vst.msk [vmem:[%s258 + $0xe0] sm:$0xff] %vm405, %v2121
      %2168 = vst.msk [vmem:[%s258 + $0xe8] sm:$0xff] %vm405, %v2126
      %2169 = vst.msk [vmem:[%s258 + $0xf0] sm:$0xff] %vm405, %v2131
      %2170 = vst.msk [vmem:[%s258 + $0xf8] sm:$0xff] %vm405, %v2136
      %v2171 = vsel %vm405, %v1981, 0.0
      %v2172 = vsel %vm405, %v1986, 0.0
      %v2173 = vadd.f32 %v2171, %v2172
      %v2174 = vsel %vm405, %v1991, 0.0
      %v2175 = vadd.f32 %v2173, %v2174
      %v2176 = vsel %vm405, %v1996, 0.0
      %v2177 = vadd.f32 %v2175, %v2176
      %v2178 = vsel %vm405, %v2001, 0.0
      %v2179 = vadd.f32 %v2177, %v2178
      %v2180 = vsel %vm405, %v2006, 0.0
      %v2181 = vadd.f32 %v2179, %v2180
      %v2182 = vsel %vm405, %v2011, 0.0
      %v2183 = vadd.f32 %v2181, %v2182
      %v2184 = vsel %vm405, %v2016, 0.0
      %v2185 = vadd.f32 %v2183, %v2184
      %v2186 = vsel %vm405, %v2021, 0.0
      %v2187 = vadd.f32 %v2185, %v2186
      %v2188 = vsel %vm405, %v2026, 0.0
      %v2189 = vadd.f32 %v2187, %v2188
      %v2190 = vsel %vm405, %v2031, 0.0
      %v2191 = vadd.f32 %v2189, %v2190
      %v2192 = vsel %vm405, %v2036, 0.0
      %v2193 = vadd.f32 %v2191, %v2192
      %v2194 = vsel %vm405, %v2041, 0.0
      %v2195 = vadd.f32 %v2193, %v2194
      %v2196 = vsel %vm405, %v2046, 0.0
      %v2197 = vadd.f32 %v2195, %v2196
      %v2198 = vsel %vm405, %v2051, 0.0
      %v2199 = vadd.f32 %v2197, %v2198
      %v2200 = vsel %vm405, %v2056, 0.0
      %v2201 = vadd.f32 %v2199, %v2200
      %v2202 = vsel %vm405, %v2061, 0.0
      %v2203 = vadd.f32 %v2201, %v2202
      %v2204 = vsel %vm405, %v2066, 0.0
      %v2205 = vadd.f32 %v2203, %v2204
      %v2206 = vsel %vm405, %v2071, 0.0
      %v2207 = vadd.f32 %v2205, %v2206
      %v2208 = vsel %vm405, %v2076, 0.0
      %v2209 = vadd.f32 %v2207, %v2208
      %v2210 = vsel %vm405, %v2081, 0.0
      %v2211 = vadd.f32 %v2209, %v2210
      %v2212 = vsel %vm405, %v2086, 0.0
      %v2213 = vadd.f32 %v2211, %v2212
      %v2214 = vsel %vm405, %v2091, 0.0
      %v2215 = vadd.f32 %v2213, %v2214
      %v2216 = vsel %vm405, %v2096, 0.0
      %v2217 = vadd.f32 %v2215, %v2216
      %v2218 = vsel %vm405, %v2101, 0.0
      %v2219 = vadd.f32 %v2217, %v2218
      %v2220 = vsel %vm405, %v2106, 0.0
      %v2221 = vadd.f32 %v2219, %v2220
      %v2222 = vsel %vm405, %v2111, 0.0
      %v2223 = vadd.f32 %v2221, %v2222
      %v2224 = vsel %vm405, %v2116, 0.0
      %v2225 = vadd.f32 %v2223, %v2224
      %v2226 = vsel %vm405, %v2121, 0.0
      %v2227 = vadd.f32 %v2225, %v2226
      %v2228 = vsel %vm405, %v2126, 0.0
      %v2229 = vadd.f32 %v2227, %v2228
      %v2230 = vsel %vm405, %v2131, 0.0
      %v2231 = vadd.f32 %v2229, %v2230
      %v2232 = vsel %vm405, %v2136, 0.0
      %v2233 = vadd.f32 %v2231, %v2232
      %v2234 = vrot.slane %v2233, 4
      %v2235 = vadd.f32 %v2233, %v2234
      %v2236 = vrot.slane %v2235, 2
      %v2237 = vadd.f32 %v2235, %v2236
      %v2238 = vrot.slane %v2237, 1
      %v2239 = vadd.f32 %v2237, %v2238
      %2240 = vst.msk [vmem:[%s262] sm:$0x1] %vm415, %v2239
      %v2241 = vmul.f32 %v1981, %v1981
      %v2242 = vmul.f32 %v1986, %v1986
      %v2243 = vmul.f32 %v1991, %v1991
      %v2244 = vmul.f32 %v1996, %v1996
      %v2245 = vmul.f32 %v2001, %v2001
      %v2246 = vmul.f32 %v2006, %v2006
      %v2247 = vmul.f32 %v2011, %v2011
      %v2248 = vmul.f32 %v2016, %v2016
      %v2249 = vmul.f32 %v2021, %v2021
      %v2250 = vmul.f32 %v2026, %v2026
      %v2251 = vmul.f32 %v2031, %v2031
      %v2252 = vmul.f32 %v2036, %v2036
      %v2253 = vmul.f32 %v2041, %v2041
      %v2254 = vmul.f32 %v2046, %v2046
      %v2255 = vmul.f32 %v2051, %v2051
      %v2256 = vmul.f32 %v2056, %v2056
      %v2257 = vmul.f32 %v2061, %v2061
      %v2258 = vmul.f32 %v2066, %v2066
      %v2259 = vmul.f32 %v2071, %v2071
      %v2260 = vmul.f32 %v2076, %v2076
      %v2261 = vmul.f32 %v2081, %v2081
      %v2262 = vmul.f32 %v2086, %v2086
      %v2263 = vmul.f32 %v2091, %v2091
      %v2264 = vmul.f32 %v2096, %v2096
      %v2265 = vmul.f32 %v2101, %v2101
      %v2266 = vmul.f32 %v2106, %v2106
      %v2267 = vmul.f32 %v2111, %v2111
      %v2268 = vmul.f32 %v2116, %v2116
      %v2269 = vmul.f32 %v2121, %v2121
      %v2270 = vmul.f32 %v2126, %v2126
      %v2271 = vmul.f32 %v2131, %v2131
      %v2272 = vmul.f32 %v2136, %v2136
      %v2273 = vsel %vm405, %v2241, 0.0
      %v2274 = vsel %vm405, %v2242, 0.0
      %v2275 = vadd.f32 %v2273, %v2274
      %v2276 = vsel %vm405, %v2243, 0.0
      %v2277 = vadd.f32 %v2275, %v2276
      %v2278 = vsel %vm405, %v2244, 0.0
      %v2279 = vadd.f32 %v2277, %v2278
      %v2280 = vsel %vm405, %v2245, 0.0
      %v2281 = vadd.f32 %v2279, %v2280
      %v2282 = vsel %vm405, %v2246, 0.0
      %v2283 = vadd.f32 %v2281, %v2282
      %v2284 = vsel %vm405, %v2247, 0.0
      %v2285 = vadd.f32 %v2283, %v2284
      %v2286 = vsel %vm405, %v2248, 0.0
      %v2287 = vadd.f32 %v2285, %v2286
      %v2288 = vsel %vm405, %v2249, 0.0
      %v2289 = vadd.f32 %v2287, %v2288
      %v2290 = vsel %vm405, %v2250, 0.0
      %v2291 = vadd.f32 %v2289, %v2290
      %v2292 = vsel %vm405, %v2251, 0.0
      %v2293 = vadd.f32 %v2291, %v2292
      %v2294 = vsel %vm405, %v2252, 0.0
      %v2295 = vadd.f32 %v2293, %v2294
      %v2296 = vsel %vm405, %v2253, 0.0
      %v2297 = vadd.f32 %v2295, %v2296
      %v2298 = vsel %vm405, %v2254, 0.0
      %v2299 = vadd.f32 %v2297, %v2298
      %v2300 = vsel %vm405, %v2255, 0.0
      %v2301 = vadd.f32 %v2299, %v2300
      %v2302 = vsel %vm405, %v2256, 0.0
      %v2303 = vadd.f32 %v2301, %v2302
      %v2304 = vsel %vm405, %v2257, 0.0
      %v2305 = vadd.f32 %v2303, %v2304
      %v2306 = vsel %vm405, %v2258, 0.0
      %v2307 = vadd.f32 %v2305, %v2306
      %v2308 = vsel %vm405, %v2259, 0.0
      %v2309 = vadd.f32 %v2307, %v2308
      %v2310 = vsel %vm405, %v2260, 0.0
      %v2311 = vadd.f32 %v2309, %v2310
      %v2312 = vsel %vm405, %v2261, 0.0
      %v2313 = vadd.f32 %v2311, %v2312
      %v2314 = vsel %vm405, %v2262, 0.0
      %v2315 = vadd.f32 %v2313, %v2314
      %v2316 = vsel %vm405, %v2263, 0.0
      %v2317 = vadd.f32 %v2315, %v2316
      %v2318 = vsel %vm405, %v2264, 0.0
      %v2319 = vadd.f32 %v2317, %v2318
      %v2320 = vsel %vm405, %v2265, 0.0
      %v2321 = vadd.f32 %v2319, %v2320
      %v2322 = vsel %vm405, %v2266, 0.0
      %v2323 = vadd.f32 %v2321, %v2322
      %v2324 = vsel %vm405, %v2267, 0.0
      %v2325 = vadd.f32 %v2323, %v2324
      %v2326 = vsel %vm405, %v2268, 0.0
      %v2327 = vadd.f32 %v2325, %v2326
      %v2328 = vsel %vm405, %v2269, 0.0
      %v2329 = vadd.f32 %v2327, %v2328
      %v2330 = vsel %vm405, %v2270, 0.0
      %v2331 = vadd.f32 %v2329, %v2330
      %v2332 = vsel %vm405, %v2271, 0.0
      %v2333 = vadd.f32 %v2331, %v2332
      %v2334 = vsel %vm405, %v2272, 0.0
      %v2335 = vadd.f32 %v2333, %v2334
      %v2336 = vrot.slane %v2335, 4
      %v2337 = vadd.f32 %v2335, %v2336
      %v2338 = vrot.slane %v2337, 2
      %v2339 = vadd.f32 %v2337, %v2338
      %v2340 = vrot.slane %v2339, 1
      %v2341 = vadd.f32 %v2339, %v2340
      %2342 = vst.msk [vmem:[%s262 + $0x1] sm:$0x1] %vm415, %v2341
      %p2343 = scmp.lt.s32.totalorder %s18, 1
      %s2344 = scalar_select %p2343, %s18, 1
      %s2345 = smul.addr %s2344, 32
      %s2346 = smul.addr %s2345, 8
      %s2347 = scalar_lea.vmem %s5, %s2346
      %p2348 = scmp.lt.s32.totalorder %s18, 1
      %s2349 = scalar_select %p2348, %s18, 1
      %s2350 = smul.addr %s2349, 2
      %s2351 = scalar_lea.vmem %s6, %s2350
      // Predicated region
      $region41: #{no_relu_basic_resnet_unit.4} parent=39 // pred_check
        %p2352 = pneg %p146
      $region42: #{no_relu_basic_resnet_unit.4} parent=39 // pred_check_branch
        %2354 = sbr.rel (%p2352) target = $region44
      $region43: #{no_relu_basic_resnet_unit.4} parent=39 // pred_region
        _
      $region44: #{no_relu_basic_resnet_unit.4} parent=39 // pred_fallthru
        _
      // Predicated region
      $region45: #{no_relu_basic_resnet_unit.4} parent=39 // pred_check
        %p2355 = pneg %p172
      $region46: #{no_relu_basic_resnet_unit.4} parent=39 // pred_check_branch
        %2357 = sbr.rel (%p2355) target = $region48
      $region47: #{no_relu_basic_resnet_unit.4} parent=39 // pred_region
        _
      $region48: #{no_relu_basic_resnet_unit.4} parent=39 // pred_fallthru
        _
    $region40: #{no_relu_basic_resnet_unit.4} parent=5 // pred_fallthru
      _
    %p2358 = scmp.le.s32.totalorder 2, %s13
    // Predicated region
    $region49: #{no_relu_basic_resnet_unit.4} parent=5 // pred_check
      %p2359 = pneg %p2358
    $region50: #{no_relu_basic_resnet_unit.4} parent=5 // pred_check_branch
      %2361 = sbr.rel (%p2359) target = $region52
    $region51: #{no_relu_basic_resnet_unit.4} parent=5 // pred_region
      %s2362 = ssub.s32 %s13, 2
      // Predicated region
      $region53: #{no_relu_basic_resnet_unit.4} parent=51 // pred_check
        %p2363 = pneg %p152
      $region54: #{no_relu_basic_resnet_unit.4} parent=51 // pred_check_branch
        %2365 = sbr.rel (%p2363) target = $region56
      $region55: #{no_relu_basic_resnet_unit.4} parent=51 // pred_region
        %p2366 = scmp.lt.s32.totalorder %s19, 1
        %s2367 = scalar_select %p2366, %s19, 1
        %s2368 = smul.addr %s2367, 32
        %s2369 = smul.addr %s2368, 8
        %s2370 = scalar_lea.vmem %s5, %s2369
      $region56: #{no_relu_basic_resnet_unit.4} parent=51 // pred_fallthru
        _
      // Predicated region
      $region57: #{no_relu_basic_resnet_unit.4} parent=51 // pred_check
        %p2371 = pneg %p178
      $region58: #{no_relu_basic_resnet_unit.4} parent=51 // pred_check_branch
        %2373 = sbr.rel (%p2371) target = $region60
      $region59: #{no_relu_basic_resnet_unit.4} parent=51 // pred_region
        %p2374 = scmp.lt.s32.totalorder %s19, 1
        %s2375 = scalar_select %p2374, %s19, 1
        %s2376 = smul.addr %s2375, 2
        %s2377 = scalar_lea.vmem %s6, %s2376
      $region60: #{no_relu_basic_resnet_unit.4} parent=51 // pred_fallthru
        _
    $region52: #{no_relu_basic_resnet_unit.4} parent=5 // pred_fallthru
      _
  $region6: #{no_relu_basic_resnet_unit.4} parent=0 // loop_footer
    %s17 = sadd.s32 1, %s13
  $region7: #{no_relu_basic_resnet_unit.4} parent=0 // loop_footer_branch
    %12 = sbr.rel target = $region3
  $region8: #{no_relu_basic_resnet_unit.4} parent=0 // loop_exit
    _

</llo_original>
